<compile_context>
chip_gen: v5e
topology: v5e:2x2
jax: 0.10.0
libtpu: 0.0.40
codegen_flags: <defaults>
</compile_context>

<pallas_src>
import jax
import jax.numpy as jnp
from jax.experimental import pallas as pl
from jax.experimental.pallas import tpu as pltpu

BOARD_X, BOARD_Y = 6, 7      # Connect4 board: H = board_x = 6, W = board_y = 7
ACTION_SIZE = 7              # game.getActionSize() == board_y for Connect4
NUM_CHANNELS = 32            # args.num_channels
BN_EPS = 1e-5


# ----------------------------------------------------------------------------- kernel


def _fused_forward_kernel(
    x_ref,              # [R, C]      board flattened (b, h, w)-major, plane in channel 0
    pmask_ref,          # [R, 9*C]    0/1 validity of each (tap, cin) patch column
    wc1_ref, sc1_ref,   # conv1 folded:  [9*C, C], [1, C]
    wc2_ref, sc2_ref,   # conv2 folded
    wc3_ref, sc3_ref,   # conv3 folded
    wc4_ref, sc4_ref,   # conv4 folded
    w5_ref, s5_ref,     # conv5 folded:  [C, 1024], [1, 1024]
    w1_ref, s1_ref,     # fc1 folded:    [1024, 512], [1, 512]
    w23_ref, b23_ref,   # fc2|fc3:       [512, 2], [1, 2]
    mmean_ref,          # [B*W, R]    mean-over-height selection matrix (entries 1/H)
    sel_ref,            # [B, B*W]    batch-group selection (ones)
    onehot_ref,         # [B*W, W]    one-hot of the board-column index w
    logpi_ref,          # [B, W]      out: log_softmax(pi)
    v_ref,              # [B, 1]      out: tanh(mean(v))
):
    H, W = BOARD_X, BOARD_Y
    PAD = W + 1                                    # max |flat row shift| of a 3x3 tap

    x = x_ref[...]                                 # [R, C]
    R, C = x.shape
    pmask = pmask_ref[...]                         # [R, 9*C]
    zpad = jnp.zeros((PAD, C), jnp.float32)

    # conv1..conv4: 3x3 pad=1 conv + BN(eval) + ReLU, folded into relu(P @ W' + shift')
    for w_ref, s_ref in ((wc1_ref, sc1_ref), (wc2_ref, sc2_ref),
                         (wc3_ref, sc3_ref), (wc4_ref, sc4_ref)):
        xp = jnp.concatenate([zpad, x, zpad], axis=0)          # [R + 2*PAD, C]
        slabs = []
        for kh in range(3):
            for kw in range(3):
                d = (kh - 1) * W + (kw - 1)                    # flat row shift of this tap
                slabs.append(xp[PAD + d:PAD + d + R, :])       # [R, C]
        patches = jnp.concatenate(slabs, axis=1) * pmask       # in-kernel im2col, [R, 9*C]
        acc = jnp.dot(patches, w_ref[...], preferred_element_type=jnp.float32)
        x = jnp.maximum(acc + s_ref[...], 0.0)                 # [R, C]

    # conv5 (1x1) + BN5 + ReLU   (dropout in eval mode == identity)
    y5 = jnp.maximum(
        jnp.dot(x, w5_ref[...], preferred_element_type=jnp.float32) + s5_ref[...],
        0.0)                                                   # [R, 1024]

    # s.mean(dim=2).permute(0,2,1).reshape(-1,1024): selection matmul -> rows (b, w)-major
    feat = jnp.dot(mmean_ref[...], y5, preferred_element_type=jnp.float32)      # [B*W, 1024]

    # fc1 + fc_bn1 + ReLU   (dropout eval == identity)
    h1 = jnp.maximum(
        jnp.dot(feat, w1_ref[...], preferred_element_type=jnp.float32) + s1_ref[...],
        0.0)                                                   # [B*W, 512]

    # fc2 (pi) and fc3 (v) in one matmul; stays in registers (never hits HBM)
    pv = jnp.dot(h1, w23_ref[...], preferred_element_type=jnp.float32) + b23_ref[...]   # [B*W, 2]

    # rearrange the per-(b, w) scalars into lane-dense per-batch rows
    sel = sel_ref[...]                                                          # [B, B*W]
    pi_mat = jnp.dot(sel, pv[:, 0:1] * onehot_ref[...],
                     preferred_element_type=jnp.float32)                        # [B, W]
    v_raw = jnp.dot(sel, pv[:, 1:2], preferred_element_type=jnp.float32) * (1.0 / W)  # [B, 1]

    # heads: log_softmax over the W actions, tanh of the per-board mean value
    m = jnp.max(pi_mat, axis=1, keepdims=True)
    z = pi_mat - m
    lse = jnp.log(jnp.sum(jnp.exp(z), axis=1, keepdims=True))
    logpi_ref[...] = z - lse
    v_ref[...] = jnp.tanh(v_raw)


# -------------------------------------------------------------------- parameter prep


def _geometry_constants(B):
    """Boundary masks and selection matrices (pure constants, folded by XLA under jit)."""
    H, W, C = BOARD_X, BOARD_Y, NUM_CHANNELS
    R = B * H * W
    r = jnp.arange(R)
    h = (r // W) % H
    w = r % W
    cols = []
    for kh in range(3):
        for kw in range(3):
            dh, dw = kh - 1, kw - 1
            cols.append((h + dh >= 0) & (h + dh < H) & (w + dw >= 0) & (w + dw < W))
    pmask = jnp.repeat(jnp.stack(cols, axis=1).astype(jnp.float32), C, axis=1)   # [R, 9*C]

    rows = jnp.arange(B * W)
    bb, ww = rows // W, rows % W
    rb, rw = r // (H * W), r % W
    mmean = (((rb[None, :] == bb[:, None]) & (rw[None, :] == ww[:, None]))
             .astype(jnp.float32) / H)                                           # [B*W, R]
    sel = (jnp.arange(B)[:, None] == bb[None, :]).astype(jnp.float32)            # [B, B*W]
    onehot = (ww[:, None] == jnp.arange(W)[None, :]).astype(jnp.float32)         # [B*W, W]
    return pmask, mmean, sel, onehot


def _fold_conv3x3(w, b, scale, shift):
    """[Cout, Cin, 3, 3] conv + BN(eval) -> [9*Cin, Cout] matmul weight, rows (kh, kw, cin)."""
    cout = w.shape[0]
    wf = (w * scale.reshape(cout, 1, 1, 1)).astype(jnp.float32)
    wmat = jnp.transpose(wf, (2, 3, 1, 0)).reshape(-1, cout)
    sh = (shift + b * scale).reshape(1, cout).astype(jnp.float32)
    return wmat, sh


def init_params(key):
    C = NUM_CHANNELS
    ks = iter(jax.random.split(key, 48))

    def nrm(shape, s=0.1):
        return (s * jax.random.normal(next(ks), shape)).astype(jnp.float32)

    def bn(n):  # eval-mode BatchNorm folded to (scale, shift)
        gamma = 1.0 + 0.1 * jax.random.normal(next(ks), (n,))
        beta = 0.1 * jax.random.normal(next(ks), (n,))
        rmean = 0.1 * jax.random.normal(next(ks), (n,))
        rvar = jax.random.uniform(next(ks), (n,), minval=0.5, maxval=1.5)
        scale = gamma / jnp.sqrt(rvar + BN_EPS)
        shift = beta - rmean * scale
        return scale.astype(jnp.float32), shift.astype(jnp.float32)

    p = {}
    p["conv1_w"], p["conv1_b"] = nrm((C, 1, 3, 3)), nrm((C,))
    for i in (2, 3, 4):
        p[f"conv{i}_w"], p[f"conv{i}_b"] = nrm((C, C, 3, 3)), nrm((C,))
    for i in (1, 2, 3, 4):
        p[f"bn{i}_scale"], p[f"bn{i}_shift"] = bn(C)
    p["conv5_w"], p["conv5_b"] = nrm((1024, C, 1, 1)), nrm((1024,))
    p["bn5_scale"], p["bn5_shift"] = bn(1024)
    p["fc1_w"], p["fc1_b"] = nrm((512, 1024)), nrm((512,))
    p["fc_bn1_scale"], p["fc_bn1_shift"] = bn(512)
    p["fc2_w"], p["fc2_b"] = nrm((1, 512)), nrm((1,))
    p["fc3_w"], p["fc3_b"] = nrm((1, 512)), nrm((1,))
    return p


# --------------------------------------------------------------------------- forward


def forward(params, s):
    B = s.shape[0]
    H, W, C = BOARD_X, BOARD_Y, NUM_CHANNELS
    assert s.shape[1:] == (H, W), s.shape
    assert W == ACTION_SIZE  # pi/v head decomposition relies on action_size == board_y
    R = B * H * W

    # board -> flat [R, C] activation, single input plane in channel 0
    x_in = jnp.pad(s.reshape(R, 1).astype(jnp.float32), ((0, 0), (0, C - 1)))

    pmask, mmean, sel, onehot = _geometry_constants(B)

    # fold BatchNorm (eval) into weights / shifts
    conv_w1 = jnp.pad(params["conv1_w"], ((0, 0), (0, C - 1), (0, 0), (0, 0)))
    conv_ops = []
    for i, w in zip((1, 2, 3, 4),
                    (conv_w1, params["conv2_w"], params["conv3_w"], params["conv4_w"])):
        conv_ops += list(_fold_conv3x3(w, params[f"conv{i}_b"],
                                       params[f"bn{i}_scale"], params[f"bn{i}_shift"]))

    w5 = (params["conv5_w"].reshape(1024, C) * params["bn5_scale"].reshape(1024, 1)).T
    w5 = w5.astype(jnp.float32)                                                  # [C, 1024]
    s5 = (params["bn5_shift"] + params["conv5_b"] * params["bn5_scale"]
          ).reshape(1, 1024).astype(jnp.float32)

    w1 = (params["fc1_w"] * params["fc_bn1_scale"].reshape(512, 1)).T.astype(jnp.float32)
    s1 = (params["fc_bn1_shift"] + params["fc1_b"] * params["fc_bn1_scale"]
          ).reshape(1, 512).astype(jnp.float32)

    w23 = jnp.concatenate([params["fc2_w"].T, params["fc3_w"].T], axis=1).astype(jnp.float32)
    b23 = jnp.concatenate([params["fc2_b"], params["fc3_b"]]).reshape(1, 2).astype(jnp.float32)

    # TODO(synk): for large batch, tile the R = B*H*W row dimension with a "parallel" grid
    # axis (v7x dual-TC / 64 MiB VMEM) and cast the conv5/fc1 matmuls to bf16 on v6e/v7x;
    # at tiny batch a single fused full-block kernel is launch/DMA optimal.
    logpi, v = pl.pallas_call(
        _fused_forward_kernel,
        out_shape=(jax.ShapeDtypeStruct((B, ACTION_SIZE), jnp.float32),
                   jax.ShapeDtypeStruct((B, 1), jnp.float32)),
        compiler_params=pltpu.CompilerParams(vmem_limit_bytes=32 * 1024 * 1024),
    )(x_in, pmask, *conv_ops, w5, s5, w1, s1, w23, b23, mmean, sel, onehot)
    return logpi, v


# ------------------------------------------------------------- pure-JAX reference


def reference_forward(params, s):
    """Plain XLA implementation of the PyTorch forward (eval mode), for validation."""
    B = s.shape[0]
    x = s.reshape(B, 1, BOARD_X, BOARD_Y).astype(jnp.float32)

    def conv_bn_relu(x, w, b, scale, shift):
        y = jax.lax.conv_general_dilated(
            x, w, window_strides=(1, 1), padding="SAME",
            dimension_numbers=("NCHW", "OIHW", "NCHW"))
        y = (y + b.reshape(1, -1, 1, 1)) * scale.reshape(1, -1, 1, 1) + shift.reshape(1, -1, 1, 1)
        return jnp.maximum(y, 0.0)

    for i in (1, 2, 3, 4):
        x = conv_bn_relu(x, params[f"conv{i}_w"], params[f"conv{i}_b"],
                         params[f"bn{i}_scale"], params[f"bn{i}_shift"])
    x = conv_bn_relu(x, params["conv5_w"], params["conv5_b"],
                     params["bn5_scale"], params["bn5_shift"])
    x = x.mean(axis=2)                                   # [B, 1024, W]
    x = jnp.transpose(x, (0, 2, 1)).reshape(-1, 1024)    # [B*W, 1024]
    h = x @ params["fc1_w"].T + params["fc1_b"]
    h = jnp.maximum(h * params["fc_bn1_scale"] + params["fc_bn1_shift"], 0.0)
    pi = (h @ params["fc2_w"].T + params["fc2_b"]).reshape(-1, ACTION_SIZE)
    vr = (h @ params["fc3_w"].T + params["fc3_b"]).reshape(-1, ACTION_SIZE).mean(
        axis=1, keepdims=True)
    return jax.nn.log_softmax(pi, axis=1), jnp.tanh(vr)


# ------------------------------------------------------------------------------ main

if __name__ == "__main__":
    key = jax.random.PRNGKey(0)
    pkey, xkey = jax.random.split(key)
    params = init_params(pkey)
    s = jax.random.normal(xkey, (2, BOARD_X, BOARD_Y), dtype=jnp.float32)

    logpi, v = jax.jit(forward)(params, s)
    jax.block_until_ready((logpi, v))

    assert logpi.shape == (2, ACTION_SIZE), logpi.shape
    assert v.shape == (2, 1), v.shape

    # validate against the plain-XLA reference of the PyTorch forward
    ref_logpi, ref_v = jax.jit(reference_forward)(params, s)
    jax.block_until_ready((ref_logpi, ref_v))
    assert float(jnp.max(jnp.abs(logpi - ref_logpi))) < 1e-2, "log-policy mismatch"
    assert float(jnp.max(jnp.abs(v - ref_v))) < 1e-2, "value mismatch"

    print("KERNEL_OK")
</pallas_src>

<mosaic_0001>
module attributes {stable_mosaic.version = 11 : i64} {
  func.func @_fused_forward_kernel(%arg0: memref<84x32xf32, #tpu.memory_space<vmem>>, %arg1: memref<84x288xf32, #tpu.memory_space<vmem>>, %arg2: memref<288x32xf32, #tpu.memory_space<vmem>>, %arg3: memref<1x32xf32, #tpu.memory_space<vmem>>, %arg4: memref<288x32xf32, #tpu.memory_space<vmem>>, %arg5: memref<1x32xf32, #tpu.memory_space<vmem>>, %arg6: memref<288x32xf32, #tpu.memory_space<vmem>>, %arg7: memref<1x32xf32, #tpu.memory_space<vmem>>, %arg8: memref<288x32xf32, #tpu.memory_space<vmem>>, %arg9: memref<1x32xf32, #tpu.memory_space<vmem>>, %arg10: memref<32x1024xf32, #tpu.memory_space<vmem>>, %arg11: memref<1x1024xf32, #tpu.memory_space<vmem>>, %arg12: memref<1024x512xf32, #tpu.memory_space<vmem>>, %arg13: memref<1x512xf32, #tpu.memory_space<vmem>>, %arg14: memref<512x2xf32, #tpu.memory_space<vmem>>, %arg15: memref<1x2xf32, #tpu.memory_space<vmem>>, %arg16: memref<14x84xf32, #tpu.memory_space<vmem>>, %arg17: memref<2x14xf32, #tpu.memory_space<vmem>>, %arg18: memref<14x7xf32, #tpu.memory_space<vmem>>, %arg19: memref<2x7xf32, #tpu.memory_space<vmem>>, %arg20: memref<2x1xf32, #tpu.memory_space<vmem>>) attributes {dimension_semantics = [], scalar_prefetch = 0 : i64, scratch_operands = 0 : i64, tpu.core_type = #tpu.core_type<tc>} {
    %c0 = arith.constant 0 : index
    %c0_0 = arith.constant 0 : index
    %0 = vector.load %arg0[%c0, %c0_0] : memref<84x32xf32, #tpu.memory_space<vmem>>, vector<84x32xf32>
    %c0_1 = arith.constant 0 : index
    %c0_2 = arith.constant 0 : index
    %1 = vector.load %arg1[%c0_1, %c0_2] : memref<84x288xf32, #tpu.memory_space<vmem>>, vector<84x288xf32>
    %cst = arith.constant 0.000000e+00 : f32
    %2 = vector.broadcast %cst : f32 to vector<8x32xf32>
    %3 = tpu.concatenate %2, %0, %2 in 0 : vector<8x32xf32>, vector<84x32xf32>, vector<8x32xf32> -> vector<100x32xf32>
    %4 = vector.extract_strided_slice %3 {offsets = [0, 0], sizes = [84, 32], strides = [1, 1]} : vector<100x32xf32> to vector<84x32xf32>
    %5 = vector.extract_strided_slice %3 {offsets = [1, 0], sizes = [84, 32], strides = [1, 1]} : vector<100x32xf32> to vector<84x32xf32>
    %6 = vector.extract_strided_slice %3 {offsets = [2, 0], sizes = [84, 32], strides = [1, 1]} : vector<100x32xf32> to vector<84x32xf32>
    %7 = vector.extract_strided_slice %3 {offsets = [7, 0], sizes = [84, 32], strides = [1, 1]} : vector<100x32xf32> to vector<84x32xf32>
    %8 = vector.extract_strided_slice %3 {offsets = [8, 0], sizes = [84, 32], strides = [1, 1]} : vector<100x32xf32> to vector<84x32xf32>
    %9 = vector.extract_strided_slice %3 {offsets = [9, 0], sizes = [84, 32], strides = [1, 1]} : vector<100x32xf32> to vector<84x32xf32>
    %10 = vector.extract_strided_slice %3 {offsets = [14, 0], sizes = [84, 32], strides = [1, 1]} : vector<100x32xf32> to vector<84x32xf32>
    %11 = vector.extract_strided_slice %3 {offsets = [15, 0], sizes = [84, 32], strides = [1, 1]} : vector<100x32xf32> to vector<84x32xf32>
    %12 = vector.extract_strided_slice %3 {offsets = [16, 0], sizes = [84, 32], strides = [1, 1]} : vector<100x32xf32> to vector<84x32xf32>
    %13 = tpu.concatenate %4, %5, %6, %7, %8, %9, %10, %11, %12 in 1 : vector<84x32xf32>, vector<84x32xf32>, vector<84x32xf32>, vector<84x32xf32>, vector<84x32xf32>, vector<84x32xf32>, vector<84x32xf32>, vector<84x32xf32>, vector<84x32xf32> -> vector<84x288xf32>
    %14 = arith.mulf %13, %1 : vector<84x288xf32>
    %c0_3 = arith.constant 0 : index
    %c0_4 = arith.constant 0 : index
    %15 = vector.load %arg2[%c0_3, %c0_4] : memref<288x32xf32, #tpu.memory_space<vmem>>, vector<288x32xf32>
    %cst_5 = arith.constant dense<0.000000e+00> : vector<84x32xf32>
    %16 = tpu.matmul %14, %15, %cst_5 {dimension_numbers = #tpu.dot_dimension_numbers<[1], [0], [0], [1], [0, 0, 1, 1], [], []>} : vector<84x288xf32>, vector<288x32xf32>, vector<84x32xf32> -> vector<84x32xf32>
    %c0_6 = arith.constant 0 : index
    %c0_7 = arith.constant 0 : index
    %17 = vector.load %arg3[%c0_6, %c0_7] : memref<1x32xf32, #tpu.memory_space<vmem>>, vector<1x32xf32>
    %18 = vector.broadcast %17 : vector<1x32xf32> to vector<84x32xf32>
    %19 = arith.addf %16, %18 : vector<84x32xf32>
    %cst_8 = arith.constant 0.000000e+00 : f32
    %20 = vector.broadcast %cst_8 : f32 to vector<84x32xf32>
    %21 = arith.maximumf %19, %20 : vector<84x32xf32>
    %22 = tpu.concatenate %2, %21, %2 in 0 : vector<8x32xf32>, vector<84x32xf32>, vector<8x32xf32> -> vector<100x32xf32>
    %23 = vector.extract_strided_slice %22 {offsets = [0, 0], sizes = [84, 32], strides = [1, 1]} : vector<100x32xf32> to vector<84x32xf32>
    %24 = vector.extract_strided_slice %22 {offsets = [1, 0], sizes = [84, 32], strides = [1, 1]} : vector<100x32xf32> to vector<84x32xf32>
    %25 = vector.extract_strided_slice %22 {offsets = [2, 0], sizes = [84, 32], strides = [1, 1]} : vector<100x32xf32> to vector<84x32xf32>
    %26 = vector.extract_strided_slice %22 {offsets = [7, 0], sizes = [84, 32], strides = [1, 1]} : vector<100x32xf32> to vector<84x32xf32>
    %27 = vector.extract_strided_slice %22 {offsets = [8, 0], sizes = [84, 32], strides = [1, 1]} : vector<100x32xf32> to vector<84x32xf32>
    %28 = vector.extract_strided_slice %22 {offsets = [9, 0], sizes = [84, 32], strides = [1, 1]} : vector<100x32xf32> to vector<84x32xf32>
    %29 = vector.extract_strided_slice %22 {offsets = [14, 0], sizes = [84, 32], strides = [1, 1]} : vector<100x32xf32> to vector<84x32xf32>
    %30 = vector.extract_strided_slice %22 {offsets = [15, 0], sizes = [84, 32], strides = [1, 1]} : vector<100x32xf32> to vector<84x32xf32>
    %31 = vector.extract_strided_slice %22 {offsets = [16, 0], sizes = [84, 32], strides = [1, 1]} : vector<100x32xf32> to vector<84x32xf32>
    %32 = tpu.concatenate %23, %24, %25, %26, %27, %28, %29, %30, %31 in 1 : vector<84x32xf32>, vector<84x32xf32>, vector<84x32xf32>, vector<84x32xf32>, vector<84x32xf32>, vector<84x32xf32>, vector<84x32xf32>, vector<84x32xf32>, vector<84x32xf32> -> vector<84x288xf32>
    %33 = arith.mulf %32, %1 : vector<84x288xf32>
    %c0_9 = arith.constant 0 : index
    %c0_10 = arith.constant 0 : index
    %34 = vector.load %arg4[%c0_9, %c0_10] : memref<288x32xf32, #tpu.memory_space<vmem>>, vector<288x32xf32>
    %cst_11 = arith.constant dense<0.000000e+00> : vector<84x32xf32>
    %35 = tpu.matmul %33, %34, %cst_11 {dimension_numbers = #tpu.dot_dimension_numbers<[1], [0], [0], [1], [0, 0, 1, 1], [], []>} : vector<84x288xf32>, vector<288x32xf32>, vector<84x32xf32> -> vector<84x32xf32>
    %c0_12 = arith.constant 0 : index
    %c0_13 = arith.constant 0 : index
    %36 = vector.load %arg5[%c0_12, %c0_13] : memref<1x32xf32, #tpu.memory_space<vmem>>, vector<1x32xf32>
    %37 = vector.broadcast %36 : vector<1x32xf32> to vector<84x32xf32>
    %38 = arith.addf %35, %37 : vector<84x32xf32>
    %cst_14 = arith.constant 0.000000e+00 : f32
    %39 = vector.broadcast %cst_14 : f32 to vector<84x32xf32>
    %40 = arith.maximumf %38, %39 : vector<84x32xf32>
    %41 = tpu.concatenate %2, %40, %2 in 0 : vector<8x32xf32>, vector<84x32xf32>, vector<8x32xf32> -> vector<100x32xf32>
    %42 = vector.extract_strided_slice %41 {offsets = [0, 0], sizes = [84, 32], strides = [1, 1]} : vector<100x32xf32> to vector<84x32xf32>
    %43 = vector.extract_strided_slice %41 {offsets = [1, 0], sizes = [84, 32], strides = [1, 1]} : vector<100x32xf32> to vector<84x32xf32>
    %44 = vector.extract_strided_slice %41 {offsets = [2, 0], sizes = [84, 32], strides = [1, 1]} : vector<100x32xf32> to vector<84x32xf32>
    %45 = vector.extract_strided_slice %41 {offsets = [7, 0], sizes = [84, 32], strides = [1, 1]} : vector<100x32xf32> to vector<84x32xf32>
    %46 = vector.extract_strided_slice %41 {offsets = [8, 0], sizes = [84, 32], strides = [1, 1]} : vector<100x32xf32> to vector<84x32xf32>
    %47 = vector.extract_strided_slice %41 {offsets = [9, 0], sizes = [84, 32], strides = [1, 1]} : vector<100x32xf32> to vector<84x32xf32>
    %48 = vector.extract_strided_slice %41 {offsets = [14, 0], sizes = [84, 32], strides = [1, 1]} : vector<100x32xf32> to vector<84x32xf32>
    %49 = vector.extract_strided_slice %41 {offsets = [15, 0], sizes = [84, 32], strides = [1, 1]} : vector<100x32xf32> to vector<84x32xf32>
    %50 = vector.extract_strided_slice %41 {offsets = [16, 0], sizes = [84, 32], strides = [1, 1]} : vector<100x32xf32> to vector<84x32xf32>
    %51 = tpu.concatenate %42, %43, %44, %45, %46, %47, %48, %49, %50 in 1 : vector<84x32xf32>, vector<84x32xf32>, vector<84x32xf32>, vector<84x32xf32>, vector<84x32xf32>, vector<84x32xf32>, vector<84x32xf32>, vector<84x32xf32>, vector<84x32xf32> -> vector<84x288xf32>
    %52 = arith.mulf %51, %1 : vector<84x288xf32>
    %c0_15 = arith.constant 0 : index
    %c0_16 = arith.constant 0 : index
    %53 = vector.load %arg6[%c0_15, %c0_16] : memref<288x32xf32, #tpu.memory_space<vmem>>, vector<288x32xf32>
    %cst_17 = arith.constant dense<0.000000e+00> : vector<84x32xf32>
    %54 = tpu.matmul %52, %53, %cst_17 {dimension_numbers = #tpu.dot_dimension_numbers<[1], [0], [0], [1], [0, 0, 1, 1], [], []>} : vector<84x288xf32>, vector<288x32xf32>, vector<84x32xf32> -> vector<84x32xf32>
    %c0_18 = arith.constant 0 : index
    %c0_19 = arith.constant 0 : index
    %55 = vector.load %arg7[%c0_18, %c0_19] : memref<1x32xf32, #tpu.memory_space<vmem>>, vector<1x32xf32>
    %56 = vector.broadcast %55 : vector<1x32xf32> to vector<84x32xf32>
    %57 = arith.addf %54, %56 : vector<84x32xf32>
    %cst_20 = arith.constant 0.000000e+00 : f32
    %58 = vector.broadcast %cst_20 : f32 to vector<84x32xf32>
    %59 = arith.maximumf %57, %58 : vector<84x32xf32>
    %60 = tpu.concatenate %2, %59, %2 in 0 : vector<8x32xf32>, vector<84x32xf32>, vector<8x32xf32> -> vector<100x32xf32>
    %61 = vector.extract_strided_slice %60 {offsets = [0, 0], sizes = [84, 32], strides = [1, 1]} : vector<100x32xf32> to vector<84x32xf32>
    %62 = vector.extract_strided_slice %60 {offsets = [1, 0], sizes = [84, 32], strides = [1, 1]} : vector<100x32xf32> to vector<84x32xf32>
    %63 = vector.extract_strided_slice %60 {offsets = [2, 0], sizes = [84, 32], strides = [1, 1]} : vector<100x32xf32> to vector<84x32xf32>
    %64 = vector.extract_strided_slice %60 {offsets = [7, 0], sizes = [84, 32], strides = [1, 1]} : vector<100x32xf32> to vector<84x32xf32>
    %65 = vector.extract_strided_slice %60 {offsets = [8, 0], sizes = [84, 32], strides = [1, 1]} : vector<100x32xf32> to vector<84x32xf32>
    %66 = vector.extract_strided_slice %60 {offsets = [9, 0], sizes = [84, 32], strides = [1, 1]} : vector<100x32xf32> to vector<84x32xf32>
    %67 = vector.extract_strided_slice %60 {offsets = [14, 0], sizes = [84, 32], strides = [1, 1]} : vector<100x32xf32> to vector<84x32xf32>
    %68 = vector.extract_strided_slice %60 {offsets = [15, 0], sizes = [84, 32], strides = [1, 1]} : vector<100x32xf32> to vector<84x32xf32>
    %69 = vector.extract_strided_slice %60 {offsets = [16, 0], sizes = [84, 32], strides = [1, 1]} : vector<100x32xf32> to vector<84x32xf32>
    %70 = tpu.concatenate %61, %62, %63, %64, %65, %66, %67, %68, %69 in 1 : vector<84x32xf32>, vector<84x32xf32>, vector<84x32xf32>, vector<84x32xf32>, vector<84x32xf32>, vector<84x32xf32>, vector<84x32xf32>, vector<84x32xf32>, vector<84x32xf32> -> vector<84x288xf32>
    %71 = arith.mulf %70, %1 : vector<84x288xf32>
    %c0_21 = arith.constant 0 : index
    %c0_22 = arith.constant 0 : index
    %72 = vector.load %arg8[%c0_21, %c0_22] : memref<288x32xf32, #tpu.memory_space<vmem>>, vector<288x32xf32>
    %cst_23 = arith.constant dense<0.000000e+00> : vector<84x32xf32>
    %73 = tpu.matmul %71, %72, %cst_23 {dimension_numbers = #tpu.dot_dimension_numbers<[1], [0], [0], [1], [0, 0, 1, 1], [], []>} : vector<84x288xf32>, vector<288x32xf32>, vector<84x32xf32> -> vector<84x32xf32>
    %c0_24 = arith.constant 0 : index
    %c0_25 = arith.constant 0 : index
    %74 = vector.load %arg9[%c0_24, %c0_25] : memref<1x32xf32, #tpu.memory_space<vmem>>, vector<1x32xf32>
    %75 = vector.broadcast %74 : vector<1x32xf32> to vector<84x32xf32>
    %76 = arith.addf %73, %75 : vector<84x32xf32>
    %cst_26 = arith.constant 0.000000e+00 : f32
    %77 = vector.broadcast %cst_26 : f32 to vector<84x32xf32>
    %78 = arith.maximumf %76, %77 : vector<84x32xf32>
    %c0_27 = arith.constant 0 : index
    %c0_28 = arith.constant 0 : index
    %79 = vector.load %arg10[%c0_27, %c0_28] : memref<32x1024xf32, #tpu.memory_space<vmem>>, vector<32x1024xf32>
    %cst_29 = arith.constant dense<0.000000e+00> : vector<84x1024xf32>
    %80 = tpu.matmul %78, %79, %cst_29 {dimension_numbers = #tpu.dot_dimension_numbers<[1], [0], [0], [1], [0, 0, 1, 1], [], []>} : vector<84x32xf32>, vector<32x1024xf32>, vector<84x1024xf32> -> vector<84x1024xf32>
    %c0_30 = arith.constant 0 : index
    %c0_31 = arith.constant 0 : index
    %81 = vector.load %arg11[%c0_30, %c0_31] : memref<1x1024xf32, #tpu.memory_space<vmem>>, vector<1x1024xf32>
    %82 = vector.broadcast %81 : vector<1x1024xf32> to vector<84x1024xf32>
    %83 = arith.addf %80, %82 : vector<84x1024xf32>
    %cst_32 = arith.constant 0.000000e+00 : f32
    %84 = vector.broadcast %cst_32 : f32 to vector<84x1024xf32>
    %85 = arith.maximumf %83, %84 : vector<84x1024xf32>
    %c0_33 = arith.constant 0 : index
    %c0_34 = arith.constant 0 : index
    %86 = vector.load %arg16[%c0_33, %c0_34] : memref<14x84xf32, #tpu.memory_space<vmem>>, vector<14x84xf32>
    %cst_35 = arith.constant dense<0.000000e+00> : vector<14x1024xf32>
    %87 = tpu.matmul %86, %85, %cst_35 {dimension_numbers = #tpu.dot_dimension_numbers<[1], [0], [0], [1], [0, 0, 1, 1], [], []>} : vector<14x84xf32>, vector<84x1024xf32>, vector<14x1024xf32> -> vector<14x1024xf32>
    %c0_36 = arith.constant 0 : index
    %c0_37 = arith.constant 0 : index
    %88 = vector.load %arg12[%c0_36, %c0_37] : memref<1024x512xf32, #tpu.memory_space<vmem>>, vector<1024x512xf32>
    %cst_38 = arith.constant dense<0.000000e+00> : vector<14x512xf32>
    %89 = tpu.matmul %87, %88, %cst_38 {dimension_numbers = #tpu.dot_dimension_numbers<[1], [0], [0], [1], [0, 0, 1, 1], [], []>} : vector<14x1024xf32>, vector<1024x512xf32>, vector<14x512xf32> -> vector<14x512xf32>
    %c0_39 = arith.constant 0 : index
    %c0_40 = arith.constant 0 : index
    %90 = vector.load %arg13[%c0_39, %c0_40] : memref<1x512xf32, #tpu.memory_space<vmem>>, vector<1x512xf32>
    %91 = vector.broadcast %90 : vector<1x512xf32> to vector<14x512xf32>
    %92 = arith.addf %89, %91 : vector<14x512xf32>
    %cst_41 = arith.constant 0.000000e+00 : f32
    %93 = vector.broadcast %cst_41 : f32 to vector<14x512xf32>
    %94 = arith.maximumf %92, %93 : vector<14x512xf32>
    %c0_42 = arith.constant 0 : index
    %c0_43 = arith.constant 0 : index
    %95 = vector.load %arg14[%c0_42, %c0_43] : memref<512x2xf32, #tpu.memory_space<vmem>>, vector<512x2xf32>
    %cst_44 = arith.constant dense<0.000000e+00> : vector<14x2xf32>
    %96 = tpu.matmul %94, %95, %cst_44 {dimension_numbers = #tpu.dot_dimension_numbers<[1], [0], [0], [1], [0, 0, 1, 1], [], []>} : vector<14x512xf32>, vector<512x2xf32>, vector<14x2xf32> -> vector<14x2xf32>
    %c0_45 = arith.constant 0 : index
    %c0_46 = arith.constant 0 : index
    %97 = vector.load %arg15[%c0_45, %c0_46] : memref<1x2xf32, #tpu.memory_space<vmem>>, vector<1x2xf32>
    %98 = vector.broadcast %97 : vector<1x2xf32> to vector<14x2xf32>
    %99 = arith.addf %96, %98 : vector<14x2xf32>
    %c0_47 = arith.constant 0 : index
    %c0_48 = arith.constant 0 : index
    %100 = vector.load %arg17[%c0_47, %c0_48] : memref<2x14xf32, #tpu.memory_space<vmem>>, vector<2x14xf32>
    %101 = vector.extract_strided_slice %99 {offsets = [0, 0], sizes = [14, 1], strides = [1, 1]} : vector<14x2xf32> to vector<14x1xf32>
    %c0_49 = arith.constant 0 : index
    %c0_50 = arith.constant 0 : index
    %102 = vector.load %arg18[%c0_49, %c0_50] : memref<14x7xf32, #tpu.memory_space<vmem>>, vector<14x7xf32>
    %103 = vector.broadcast %101 : vector<14x1xf32> to vector<14x7xf32>
    %104 = arith.mulf %103, %102 : vector<14x7xf32>
    %cst_51 = arith.constant dense<0.000000e+00> : vector<2x7xf32>
    %105 = tpu.matmul %100, %104, %cst_51 {dimension_numbers = #tpu.dot_dimension_numbers<[1], [0], [0], [1], [0, 0, 1, 1], [], []>} : vector<2x14xf32>, vector<14x7xf32>, vector<2x7xf32> -> vector<2x7xf32>
    %106 = vector.extract_strided_slice %99 {offsets = [0, 1], sizes = [14, 1], strides = [1, 1]} : vector<14x2xf32> to vector<14x1xf32>
    %cst_52 = arith.constant dense<0.000000e+00> : vector<2x1xf32>
    %107 = tpu.matmul %100, %106, %cst_52 {dimension_numbers = #tpu.dot_dimension_numbers<[1], [0], [0], [1], [0, 0, 1, 1], [], []>} : vector<2x14xf32>, vector<14x1xf32>, vector<2x1xf32> -> vector<2x1xf32>
    %cst_53 = arith.constant 0.142857149 : f32
    %108 = vector.broadcast %cst_53 : f32 to vector<2x1xf32>
    %109 = arith.mulf %107, %108 : vector<2x1xf32>
    %cst_54 = arith.constant dense<0xFF800000> : vector<2xf32>
    %110 = vector.multi_reduction <maximumf>, %105, %cst_54 [1] : vector<2x7xf32> to vector<2xf32>
    %111 = vector.shape_cast %110 : vector<2xf32> to vector<2x1xf32>
    %112 = vector.broadcast %111 : vector<2x1xf32> to vector<2x7xf32>
    %113 = arith.subf %105, %112 : vector<2x7xf32>
    %114 = math.exp %113 : vector<2x7xf32>
    %cst_55 = arith.constant dense<0.000000e+00> : vector<2xf32>
    %115 = vector.multi_reduction <add>, %114, %cst_55 [1] : vector<2x7xf32> to vector<2xf32>
    %116 = vector.shape_cast %115 : vector<2xf32> to vector<2x1xf32>
    %117 = math.log %116 : vector<2x1xf32>
    %118 = vector.broadcast %117 : vector<2x1xf32> to vector<2x7xf32>
    %119 = arith.subf %113, %118 : vector<2x7xf32>
    %c0_56 = arith.constant 0 : index
    %c0_57 = arith.constant 0 : index
    %120 = vector.load %arg19[%c0_56, %c0_57] : memref<2x7xf32, #tpu.memory_space<vmem>>, vector<2x7xf32>
    tpu.vector_store %arg19[%c0_56, %c0_57], %119 {strides = array<i32>} : memref<2x7xf32, #tpu.memory_space<vmem>>, vector<2x7xf32>,
    %121 = math.tanh %109 : vector<2x1xf32>
    %c0_58 = arith.constant 0 : index
    %c0_59 = arith.constant 0 : index
    %122 = vector.load %arg20[%c0_58, %c0_59] : memref<2x1xf32, #tpu.memory_space<vmem>>, vector<2x1xf32>
    tpu.vector_store %arg20[%c0_58, %c0_59], %121 {strides = array<i32>} : memref<2x1xf32, #tpu.memory_space<vmem>>, vector<2x1xf32>,
    return
  }
}

</mosaic_0001>

<llo_original>
// kernel: forward.1
$region0: #{forward.1}
  #allocation0 [shape = 'u32[]', space=smem, size = 0x4, offset = 0x4, fixed_abs, tag = 'smem constant byte address 0x4 - core index']
  #allocation1 [shape = 'u32[72,128]{1,0:T(1,128)}', space=vmem, size = 0x9000, scoped, tag = 'internal scratch']
  %s0 = inlined_call_operand.vmem [shape: f32[84,32], index: 0, kind: input, shape index: {}]
  %s1 = inlined_call_operand.vmem [shape: f32[84,288], index: 1, kind: input, shape index: {}]
  %s2 = inlined_call_operand.vmem [shape: f32[288,32], index: 2, kind: input, shape index: {}]
  %s3 = inlined_call_operand.vmem [shape: f32[1,32], index: 3, kind: input, shape index: {}]
  %s4 = inlined_call_operand.vmem [shape: f32[288,32], index: 4, kind: input, shape index: {}]
  %s5 = inlined_call_operand.vmem [shape: f32[1,32], index: 5, kind: input, shape index: {}]
  %s6 = inlined_call_operand.vmem [shape: f32[288,32], index: 6, kind: input, shape index: {}]
  %s7 = inlined_call_operand.vmem [shape: f32[1,32], index: 7, kind: input, shape index: {}]
  %s8 = inlined_call_operand.vmem [shape: f32[288,32], index: 8, kind: input, shape index: {}]
  %s9 = inlined_call_operand.vmem [shape: f32[1,32], index: 9, kind: input, shape index: {}]
  %s10 = inlined_call_operand.vmem [shape: f32[32,1024], index: 10, kind: input, shape index: {}]
  %s11 = inlined_call_operand.vmem [shape: f32[1,1024], index: 11, kind: input, shape index: {}]
  %s12 = inlined_call_operand.vmem [shape: f32[1024,512], index: 12, kind: input, shape index: {}]
  %s13 = inlined_call_operand.vmem [shape: f32[1,512], index: 13, kind: input, shape index: {}]
  %s14 = inlined_call_operand.vmem [shape: f32[512,2], index: 14, kind: input, shape index: {}]
  %s15 = inlined_call_operand.vmem [shape: f32[1,2], index: 15, kind: input, shape index: {}]
  %s16 = inlined_call_operand.vmem [shape: f32[14,84], index: 16, kind: input, shape index: {}]
  %s17 = inlined_call_operand.vmem [shape: f32[2,14], index: 17, kind: input, shape index: {}]
  %s18 = inlined_call_operand.vmem [shape: f32[14,7], index: 18, kind: input, shape index: {}]
  %s19 = inlined_call_operand.hbm [shape: f32[2,7], index: 19, kind: output, shape index: {0}]
  %s20 = inlined_call_operand.vmem [shape: f32[2,1], index: 20, kind: output, shape index: {1}]
  %21 = xla_tuple %s19, %s20
  %s22 = sld [smem:[#allocation0]]
  $region94: #{forward.1} parent=0
    _
  %s24 = ssub.s32 1, %s22
  %s25 = scalar_select 0, %s24, %s22
  $region1: #{forward.1} parent=0
    #allocation2 [shape = 'u8[1024]{0}', space=vmem, size = 0x400, scoped, tag = 'output window, operand 0, single buffered']
    #allocation3 [shape = 's32[1]{0}', space=sflag, size = 0x4, scoped, tag = 'scoped memory for forward.1']
    %26 = vsyncpa [#allocation3], 0
    // Predicated region
    $region2: #{forward.1} parent=1 // pred_check
      _
    $region3: #{forward.1} parent=1 // pred_check_branch
      %28 = sbr.rel (0) target = $region5
    $region4: #{forward.1} parent=1 // pred_region
      _
    $region5: #{forward.1} parent=1 // pred_fallthru
      _
    // Predicated region
    $region6: #{forward.1} parent=1 // pred_check
      _
    $region7: #{forward.1} parent=1 // pred_check_branch
      %30 = sbr.rel (0) target = $region9
    $region8: #{forward.1} parent=1 // pred_region
      _
    $region9: #{forward.1} parent=1 // pred_fallthru
      _
    // Predicated region
    $region10: #{forward.1} parent=1 // pred_check
      _
    $region11: #{forward.1} parent=1 // pred_check_branch
      %32 = sbr.rel (0) target = $region13
    $region12: #{forward.1} parent=1 // pred_region
      _
    $region13: #{forward.1} parent=1 // pred_fallthru
      _
    // Predicated region
    $region14: #{forward.1} parent=1 // pred_check
      _
    $region15: #{forward.1} parent=1 // pred_check_branch
      %34 = sbr.rel (0) target = $region17
    $region16: #{forward.1} parent=1 // pred_region
      _
    $region17: #{forward.1} parent=1 // pred_fallthru
      _
    // Predicated region
    $region18: #{forward.1} parent=1 // pred_check
      _
    $region19: #{forward.1} parent=1 // pred_check_branch
      %36 = sbr.rel (0) target = $region21
    $region20: #{forward.1} parent=1 // pred_region
      _
    $region21: #{forward.1} parent=1 // pred_fallthru
      _
    // Predicated region
    $region22: #{forward.1} parent=1 // pred_check
      _
    $region23: #{forward.1} parent=1 // pred_check_branch
      %38 = sbr.rel (0) target = $region25
    $region24: #{forward.1} parent=1 // pred_region
      _
    $region25: #{forward.1} parent=1 // pred_fallthru
      _
    // Predicated region
    $region26: #{forward.1} parent=1 // pred_check
      _
    $region27: #{forward.1} parent=1 // pred_check_branch
      %40 = sbr.rel (0) target = $region29
    $region28: #{forward.1} parent=1 // pred_region
      _
    $region29: #{forward.1} parent=1 // pred_fallthru
      _
    // Predicated region
    $region30: #{forward.1} parent=1 // pred_check
      _
    $region31: #{forward.1} parent=1 // pred_check_branch
      %42 = sbr.rel (0) target = $region33
    $region32: #{forward.1} parent=1 // pred_region
      _
    $region33: #{forward.1} parent=1 // pred_fallthru
      _
    // Predicated region
    $region34: #{forward.1} parent=1 // pred_check
      _
    $region35: #{forward.1} parent=1 // pred_check_branch
      %44 = sbr.rel (0) target = $region37
    $region36: #{forward.1} parent=1 // pred_region
      _
    $region37: #{forward.1} parent=1 // pred_fallthru
      _
    // Predicated region
    $region38: #{forward.1} parent=1 // pred_check
      _
    $region39: #{forward.1} parent=1 // pred_check_branch
      %46 = sbr.rel (0) target = $region41
    $region40: #{forward.1} parent=1 // pred_region
      _
    $region41: #{forward.1} parent=1 // pred_fallthru
      _
    // Predicated region
    $region42: #{forward.1} parent=1 // pred_check
      _
    $region43: #{forward.1} parent=1 // pred_check_branch
      %48 = sbr.rel (0) target = $region45
    $region44: #{forward.1} parent=1 // pred_region
      _
    $region45: #{forward.1} parent=1 // pred_fallthru
      _
    // Predicated region
    $region46: #{forward.1} parent=1 // pred_check
      _
    $region47: #{forward.1} parent=1 // pred_check_branch
      %50 = sbr.rel (0) target = $region49
    $region48: #{forward.1} parent=1 // pred_region
      _
    $region49: #{forward.1} parent=1 // pred_fallthru
      _
    // Predicated region
    $region50: #{forward.1} parent=1 // pred_check
      _
    $region51: #{forward.1} parent=1 // pred_check_branch
      %52 = sbr.rel (0) target = $region53
    $region52: #{forward.1} parent=1 // pred_region
      _
    $region53: #{forward.1} parent=1 // pred_fallthru
      _
    // Predicated region
    $region54: #{forward.1} parent=1 // pred_check
      _
    $region55: #{forward.1} parent=1 // pred_check_branch
      %54 = sbr.rel (0) target = $region57
    $region56: #{forward.1} parent=1 // pred_region
      _
    $region57: #{forward.1} parent=1 // pred_fallthru
      _
    // Predicated region
    $region58: #{forward.1} parent=1 // pred_check
      _
    $region59: #{forward.1} parent=1 // pred_check_branch
      %56 = sbr.rel (0) target = $region61
    $region60: #{forward.1} parent=1 // pred_region
      _
    $region61: #{forward.1} parent=1 // pred_fallthru
      _
    // Predicated region
    $region62: #{forward.1} parent=1 // pred_check
      _
    $region63: #{forward.1} parent=1 // pred_check_branch
      %58 = sbr.rel (0) target = $region65
    $region64: #{forward.1} parent=1 // pred_region
      _
    $region65: #{forward.1} parent=1 // pred_fallthru
      _
    // Predicated region
    $region66: #{forward.1} parent=1 // pred_check
      _
    $region67: #{forward.1} parent=1 // pred_check_branch
      %60 = sbr.rel (0) target = $region69
    $region68: #{forward.1} parent=1 // pred_region
      _
    $region69: #{forward.1} parent=1 // pred_fallthru
      _
    // Predicated region
    $region70: #{forward.1} parent=1 // pred_check
      _
    $region71: #{forward.1} parent=1 // pred_check_branch
      %62 = sbr.rel (0) target = $region73
    $region72: #{forward.1} parent=1 // pred_region
      _
    $region73: #{forward.1} parent=1 // pred_fallthru
      _
    // Predicated region
    $region74: #{forward.1} parent=1 // pred_check
      _
    $region75: #{forward.1} parent=1 // pred_check_branch
      %64 = sbr.rel (0) target = $region77
    $region76: #{forward.1} parent=1 // pred_region
      _
    $region77: #{forward.1} parent=1 // pred_fallthru
      _
    %v65 = vld [vmem:[%s0] sm:$0xff]
    %v66 = vld [vmem:[%s0 + $0x8] sm:$0xff]
    %v67 = vld [vmem:[%s0 + $0x10] sm:$0xff]
    %v68 = vld [vmem:[%s0 + $0x18] sm:$0xff]
    %v69 = vld [vmem:[%s0 + $0x20] sm:$0xff]
    %v70 = vld [vmem:[%s0 + $0x28] sm:$0xff]
    %v71 = vld [vmem:[%s0 + $0x30] sm:$0xff]
    %v72 = vld [vmem:[%s0 + $0x38] sm:$0xff]
    %v73 = vld [vmem:[%s0 + $0x40] sm:$0xff]
    %v74 = vld [vmem:[%s0 + $0x48] sm:$0xff]
    %v75 = vld [vmem:[%s0 + $0x50] sm:$0xf]
    %v76 = vld [vmem:[%s1] sm:$0xff]
    %v77 = vld [vmem:[%s1 + $0x8] sm:$0xff]
    %v78 = vld [vmem:[%s1 + $0x10] sm:$0xff]
    %v79 = vld [vmem:[%s1 + $0x18] sm:$0xff]
    %v80 = vld [vmem:[%s1 + $0x20] sm:$0xff]
    %v81 = vld [vmem:[%s1 + $0x28] sm:$0xff]
    %v82 = vld [vmem:[%s1 + $0x30] sm:$0xff]
    %v83 = vld [vmem:[%s1 + $0x38] sm:$0xff]
    %v84 = vld [vmem:[%s1 + $0x40] sm:$0xff]
    %v85 = vld [vmem:[%s1 + $0x48] sm:$0xff]
    %v86 = vld [vmem:[%s1 + $0x50] sm:$0xff]
    %v87 = vld [vmem:[%s1 + $0x58] sm:$0xff]
    %v88 = vld [vmem:[%s1 + $0x60] sm:$0xff]
    %v89 = vld [vmem:[%s1 + $0x68] sm:$0xff]
    %v90 = vld [vmem:[%s1 + $0x70] sm:$0xff]
    %v91 = vld [vmem:[%s1 + $0x78] sm:$0xff]
    %v92 = vld [vmem:[%s1 + $0x80] sm:$0xff]
    %v93 = vld [vmem:[%s1 + $0x88] sm:$0xff]
    %v94 = vld [vmem:[%s1 + $0x90] sm:$0xff]
    %v95 = vld [vmem:[%s1 + $0x98] sm:$0xff]
    %v96 = vld [vmem:[%s1 + $0xa0] sm:$0xff]
    %v97 = vld [vmem:[%s1 + $0xa8] sm:$0xff]
    %v98 = vld [vmem:[%s1 + $0xb0] sm:$0xff]
    %v99 = vld [vmem:[%s1 + $0xb8] sm:$0xff]
    %v100 = vld [vmem:[%s1 + $0xc0] sm:$0xff]
    %v101 = vld [vmem:[%s1 + $0xc8] sm:$0xff]
    %v102 = vld [vmem:[%s1 + $0xd0] sm:$0xff]
    %v103 = vld [vmem:[%s1 + $0xd8] sm:$0xff]
    %v104 = vld [vmem:[%s1 + $0xe0] sm:$0xff]
    %v105 = vld [vmem:[%s1 + $0xe8] sm:$0xff]
    %v106 = vld [vmem:[%s1 + $0xf0] sm:$0xf]
    %v107 = vld [vmem:[%s1 + $0xf8] sm:$0xf]
    %v108 = vld [vmem:[%s1 + $0x100] sm:$0xf]
    %vm109 = vcmask 1043456
    %v110 = vsel %vm109, %v75, 0.0
    %vm122 = vcmask 1046528
    %v123 = vrot.slane 0.0, 1
    %v124 = vrot.slane %v65, 1
    %v125 = vsel %vm122, %v123, %v124
    %v126 = vrot.slane %v66, 1
    %v127 = vsel %vm122, %v124, %v126
    %v128 = vrot.slane %v67, 1
    %v129 = vsel %vm122, %v126, %v128
    %v130 = vrot.slane %v68, 1
    %v131 = vsel %vm122, %v128, %v130
    %v132 = vrot.slane %v69, 1
    %v133 = vsel %vm122, %v130, %v132
    %v134 = vrot.slane %v70, 1
    %v135 = vsel %vm122, %v132, %v134
    %v136 = vrot.slane %v71, 1
    %v137 = vsel %vm122, %v134, %v136
    %v138 = vrot.slane %v72, 1
    %v139 = vsel %vm122, %v136, %v138
    %v140 = vrot.slane %v73, 1
    %v141 = vsel %vm122, %v138, %v140
    %v142 = vrot.slane %v74, 1
    %v143 = vsel %vm122, %v140, %v142
    %144 = vrot.lane.b32.xlu0 %v125, 32
    %v145 = vpop.permute.xlu0 %144
    %146 = vrot.lane.b32.xlu0 %v127, 32
    %v147 = vpop.permute.xlu0 %146
    %148 = vrot.lane.b32.xlu0 %v129, 32
    %v149 = vpop.permute.xlu0 %148
    %150 = vrot.lane.b32.xlu0 %v131, 32
    %v151 = vpop.permute.xlu0 %150
    %152 = vrot.lane.b32.xlu0 %v133, 32
    %v153 = vpop.permute.xlu0 %152
    %154 = vrot.lane.b32.xlu0 %v135, 32
    %v155 = vpop.permute.xlu0 %154
    %156 = vrot.lane.b32.xlu0 %v137, 32
    %v157 = vpop.permute.xlu0 %156
    %158 = vrot.lane.b32.xlu0 %v139, 32
    %v159 = vpop.permute.xlu0 %158
    %160 = vrot.lane.b32.xlu0 %v141, 32
    %v161 = vpop.permute.xlu0 %160
    %162 = vrot.lane.b32.xlu0 %v143, 32
    %v163 = vpop.permute.xlu0 %162
    %164 = vrot.lane.b32.xlu0 %v142, 32
    %v165 = vpop.permute.xlu0 %164
    %vm177 = vcmask 1045504
    %v178 = vrot.slane 0.0, 2
    %v179 = vrot.slane %v65, 2
    %v180 = vsel %vm177, %v178, %v179
    %v181 = vrot.slane %v66, 2
    %v182 = vsel %vm177, %v179, %v181
    %v183 = vrot.slane %v67, 2
    %v184 = vsel %vm177, %v181, %v183
    %v185 = vrot.slane %v68, 2
    %v186 = vsel %vm177, %v183, %v185
    %v187 = vrot.slane %v69, 2
    %v188 = vsel %vm177, %v185, %v187
    %v189 = vrot.slane %v70, 2
    %v190 = vsel %vm177, %v187, %v189
    %v191 = vrot.slane %v71, 2
    %v192 = vsel %vm177, %v189, %v191
    %v193 = vrot.slane %v72, 2
    %v194 = vsel %vm177, %v191, %v193
    %v195 = vrot.slane %v73, 2
    %v196 = vsel %vm177, %v193, %v195
    %v197 = vrot.slane %v74, 2
    %v198 = vsel %vm177, %v195, %v197
    %199 = vrot.lane.b32.xlu0 %v180, 64
    %v200 = vpop.permute.xlu0 %199
    %201 = vrot.lane.b32.xlu0 %v182, 64
    %v202 = vpop.permute.xlu0 %201
    %203 = vrot.lane.b32.xlu0 %v184, 64
    %v204 = vpop.permute.xlu0 %203
    %205 = vrot.lane.b32.xlu0 %v186, 64
    %v206 = vpop.permute.xlu0 %205
    %207 = vrot.lane.b32.xlu0 %v188, 64
    %v208 = vpop.permute.xlu0 %207
    %209 = vrot.lane.b32.xlu0 %v190, 64
    %v210 = vpop.permute.xlu0 %209
    %211 = vrot.lane.b32.xlu0 %v192, 64
    %v212 = vpop.permute.xlu0 %211
    %213 = vrot.lane.b32.xlu0 %v194, 64
    %v214 = vpop.permute.xlu0 %213
    %215 = vrot.lane.b32.xlu0 %v196, 64
    %v216 = vpop.permute.xlu0 %215
    %217 = vrot.lane.b32.xlu0 %v198, 64
    %v218 = vpop.permute.xlu0 %217
    %219 = vrot.lane.b32.xlu0 %v197, 64
    %v220 = vpop.permute.xlu0 %219
    %vm233 = vcmask 1040384
    %v234 = vrot.slane 0.0, 7
    %v235 = vrot.slane %v65, 7
    %v236 = vsel %vm233, %v234, %v235
    %v237 = vrot.slane %v66, 7
    %v238 = vsel %vm233, %v235, %v237
    %v239 = vrot.slane %v67, 7
    %v240 = vsel %vm233, %v237, %v239
    %v241 = vrot.slane %v68, 7
    %v242 = vsel %vm233, %v239, %v241
    %v243 = vrot.slane %v69, 7
    %v244 = vsel %vm233, %v241, %v243
    %v245 = vrot.slane %v70, 7
    %v246 = vsel %vm233, %v243, %v245
    %v247 = vrot.slane %v71, 7
    %v248 = vsel %vm233, %v245, %v247
    %v249 = vrot.slane %v72, 7
    %v250 = vsel %vm233, %v247, %v249
    %v251 = vrot.slane %v73, 7
    %v252 = vsel %vm233, %v249, %v251
    %v253 = vrot.slane %v74, 7
    %v254 = vsel %vm233, %v251, %v253
    %v255 = vrot.slane %v110, 7
    %v256 = vsel %vm233, %v253, %v255
    %257 = vrot.lane.b32.xlu0 %v236, 96
    %v258 = vpop.permute.xlu0 %257
    %259 = vrot.lane.b32.xlu0 %v238, 96
    %v260 = vpop.permute.xlu0 %259
    %261 = vrot.lane.b32.xlu0 %v240, 96
    %v262 = vpop.permute.xlu0 %261
    %263 = vrot.lane.b32.xlu0 %v242, 96
    %v264 = vpop.permute.xlu0 %263
    %265 = vrot.lane.b32.xlu0 %v244, 96
    %v266 = vpop.permute.xlu0 %265
    %267 = vrot.lane.b32.xlu0 %v246, 96
    %v268 = vpop.permute.xlu0 %267
    %269 = vrot.lane.b32.xlu0 %v248, 96
    %v270 = vpop.permute.xlu0 %269
    %271 = vrot.lane.b32.xlu0 %v250, 96
    %v272 = vpop.permute.xlu0 %271
    %273 = vrot.lane.b32.xlu0 %v252, 96
    %v274 = vpop.permute.xlu0 %273
    %275 = vrot.lane.b32.xlu0 %v254, 96
    %v276 = vpop.permute.xlu0 %275
    %277 = vrot.lane.b32.xlu0 %v256, 96
    %v278 = vpop.permute.xlu0 %277
    %v290 = vrot.slane %v110, 1
    %v291 = vsel %vm122, %v142, %v290
    %292 = vrot.lane.b32.xlu0 %v291, 32
    %v293 = vpop.permute.xlu0 %292
    %294 = vrot.lane.b32.xlu0 %v290, 32
    %v295 = vpop.permute.xlu0 %294
    %vm298 = vcmask 1041408
    %v299 = vrot.slane %v65, 6
    %v300 = vrot.slane %v66, 6
    %v301 = vsel %vm298, %v299, %v300
    %v302 = vrot.slane %v67, 6
    %v303 = vsel %vm298, %v300, %v302
    %v304 = vrot.slane %v68, 6
    %v305 = vsel %vm298, %v302, %v304
    %v306 = vrot.slane %v69, 6
    %v307 = vsel %vm298, %v304, %v306
    %v308 = vrot.slane %v70, 6
    %v309 = vsel %vm298, %v306, %v308
    %v310 = vrot.slane %v71, 6
    %v311 = vsel %vm298, %v308, %v310
    %v312 = vrot.slane %v72, 6
    %v313 = vsel %vm298, %v310, %v312
    %v314 = vrot.slane %v73, 6
    %v315 = vsel %vm298, %v312, %v314
    %v316 = vrot.slane %v74, 6
    %v317 = vsel %vm298, %v314, %v316
    %v318 = vrot.slane %v110, 6
    %v319 = vsel %vm298, %v316, %v318
    %v320 = vrot.slane 0.0, 6
    %v321 = vsel %vm298, %v318, %v320
    %322 = vrot.lane.b32.xlu0 %v301, 64
    %v323 = vpop.permute.xlu0 %322
    %324 = vrot.lane.b32.xlu0 %v303, 64
    %v325 = vpop.permute.xlu0 %324
    %326 = vrot.lane.b32.xlu0 %v305, 64
    %v327 = vpop.permute.xlu0 %326
    %328 = vrot.lane.b32.xlu0 %v307, 64
    %v329 = vpop.permute.xlu0 %328
    %330 = vrot.lane.b32.xlu0 %v309, 64
    %v331 = vpop.permute.xlu0 %330
    %332 = vrot.lane.b32.xlu0 %v311, 64
    %v333 = vpop.permute.xlu0 %332
    %334 = vrot.lane.b32.xlu0 %v313, 64
    %v335 = vpop.permute.xlu0 %334
    %336 = vrot.lane.b32.xlu0 %v315, 64
    %v337 = vpop.permute.xlu0 %336
    %338 = vrot.lane.b32.xlu0 %v317, 64
    %v339 = vpop.permute.xlu0 %338
    %340 = vrot.lane.b32.xlu0 %v319, 64
    %v341 = vpop.permute.xlu0 %340
    %342 = vrot.lane.b32.xlu0 %v321, 64
    %v343 = vpop.permute.xlu0 %342
    %v355 = vsel %vm233, %v255, %v234
    %356 = vrot.lane.b32.xlu0 %v355, 96
    %v357 = vpop.permute.xlu0 %356
    %vm359 = vcmask 261120
    %v360 = vsel %vm359, 0.0, %v145
    %v361 = vsel %vm359, %v65, %v147
    %v362 = vsel %vm359, %v66, %v149
    %v363 = vsel %vm359, %v67, %v151
    %v364 = vsel %vm359, %v68, %v153
    %v365 = vsel %vm359, %v69, %v155
    %v366 = vsel %vm359, %v70, %v157
    %v367 = vsel %vm359, %v71, %v159
    %v368 = vsel %vm359, %v72, %v161
    %v369 = vsel %vm359, %v73, %v163
    %v370 = vsel %vm359, %v74, %v165
    %vm371 = vcmask 523264
    %v372 = vsel %vm371, %v360, %v200
    %v373 = vsel %vm371, %v361, %v202
    %v374 = vsel %vm371, %v362, %v204
    %v375 = vsel %vm371, %v363, %v206
    %v376 = vsel %vm371, %v364, %v208
    %v377 = vsel %vm371, %v365, %v210
    %v378 = vsel %vm371, %v366, %v212
    %v379 = vsel %vm371, %v367, %v214
    %v380 = vsel %vm371, %v368, %v216
    %v381 = vsel %vm371, %v369, %v218
    %v382 = vsel %vm371, %v370, %v220
    %vm383 = vcmask 785408
    %v384 = vsel %vm383, %v372, %v258
    %v385 = vsel %vm383, %v373, %v260
    %v386 = vsel %vm383, %v374, %v262
    %v387 = vsel %vm383, %v375, %v264
    %v388 = vsel %vm383, %v376, %v266
    %v389 = vsel %vm383, %v377, %v268
    %v390 = vsel %vm383, %v378, %v270
    %v391 = vsel %vm383, %v379, %v272
    %v392 = vsel %vm383, %v380, %v274
    %v393 = vsel %vm383, %v381, %v276
    %v394 = vsel %vm383, %v382, %v278
    %v395 = vsel %vm359, %v74, %v293
    %v396 = vsel %vm359, %v110, %v295
    %v397 = vsel %vm371, %v361, %v323
    %v398 = vsel %vm371, %v362, %v325
    %v399 = vsel %vm371, %v363, %v327
    %v400 = vsel %vm371, %v364, %v329
    %v401 = vsel %vm371, %v365, %v331
    %v402 = vsel %vm371, %v366, %v333
    %v403 = vsel %vm371, %v367, %v335
    %v404 = vsel %vm371, %v368, %v337
    %v405 = vsel %vm371, %v369, %v339
    %v406 = vsel %vm371, %v395, %v341
    %v407 = vsel %vm371, %v396, %v343
    %v408 = vsel %vm383, %v397, %v260
    %v409 = vsel %vm383, %v398, %v262
    %v410 = vsel %vm383, %v399, %v264
    %v411 = vsel %vm383, %v400, %v266
    %v412 = vsel %vm383, %v401, %v268
    %v413 = vsel %vm383, %v402, %v270
    %v414 = vsel %vm383, %v403, %v272
    %v415 = vsel %vm383, %v404, %v274
    %v416 = vsel %vm383, %v405, %v276
    %v417 = vsel %vm383, %v406, %v278
    %v418 = vsel %vm383, %v407, %v357
    %v419 = vmul.f32 %v384, %v76
    %v420 = vmul.f32 %v408, %v77
    %v421 = vmul.f32 %v66, %v78
    %v422 = vmul.f32 %v385, %v79
    %v423 = vmul.f32 %v409, %v80
    %v424 = vmul.f32 %v67, %v81
    %v425 = vmul.f32 %v386, %v82
    %v426 = vmul.f32 %v410, %v83
    %v427 = vmul.f32 %v68, %v84
    %v428 = vmul.f32 %v387, %v85
    %v429 = vmul.f32 %v411, %v86
    %v430 = vmul.f32 %v69, %v87
    %v431 = vmul.f32 %v388, %v88
    %v432 = vmul.f32 %v412, %v89
    %v433 = vmul.f32 %v70, %v90
    %v434 = vmul.f32 %v389, %v91
    %v435 = vmul.f32 %v413, %v92
    %v436 = vmul.f32 %v71, %v93
    %v437 = vmul.f32 %v390, %v94
    %v438 = vmul.f32 %v414, %v95
    %v439 = vmul.f32 %v72, %v96
    %v440 = vmul.f32 %v391, %v97
    %v441 = vmul.f32 %v415, %v98
    %v442 = vmul.f32 %v73, %v99
    %v443 = vmul.f32 %v392, %v100
    %v444 = vmul.f32 %v416, %v101
    %v445 = vmul.f32 %v74, %v102
    %v446 = vmul.f32 %v393, %v103
    %v447 = vmul.f32 %v417, %v104
    %v448 = vmul.f32 %v110, %v105
    %v449 = vmul.f32 %v394, %v106
    %v450 = vmul.f32 %v418, %v107
    %v451 = vmul.f32 %v108, 0.0
    %v452 = vld [vmem:[%s2] sm:$0xff]
    %v453 = vld [vmem:[%s2 + $0x8] sm:$0xff]
    %v454 = vld [vmem:[%s2 + $0x10] sm:$0xff]
    %v455 = vld [vmem:[%s2 + $0x18] sm:$0xff]
    %v456 = vld [vmem:[%s2 + $0x20] sm:$0xff]
    %v457 = vld [vmem:[%s2 + $0x28] sm:$0xff]
    %v458 = vld [vmem:[%s2 + $0x30] sm:$0xff]
    %v459 = vld [vmem:[%s2 + $0x38] sm:$0xff]
    %v460 = vld [vmem:[%s2 + $0x40] sm:$0xff]
    %v461 = vld [vmem:[%s2 + $0x48] sm:$0xff]
    %v462 = vld [vmem:[%s2 + $0x50] sm:$0xff]
    %v463 = vld [vmem:[%s2 + $0x58] sm:$0xff]
    %v464 = vld [vmem:[%s2 + $0x60] sm:$0xff]
    %v465 = vld [vmem:[%s2 + $0x68] sm:$0xff]
    %v466 = vld [vmem:[%s2 + $0x70] sm:$0xff]
    %v467 = vld [vmem:[%s2 + $0x78] sm:$0xff]
    %v468 = vld [vmem:[%s2 + $0x80] sm:$0xff]
    %v469 = vld [vmem:[%s2 + $0x88] sm:$0xff]
    %v470 = vld [vmem:[%s2 + $0x90] sm:$0xff]
    %v471 = vld [vmem:[%s2 + $0x98] sm:$0xff]
    %v472 = vld [vmem:[%s2 + $0xa0] sm:$0xff]
    %v473 = vld [vmem:[%s2 + $0xa8] sm:$0xff]
    %v474 = vld [vmem:[%s2 + $0xb0] sm:$0xff]
    %v475 = vld [vmem:[%s2 + $0xb8] sm:$0xff]
    %v476 = vld [vmem:[%s2 + $0xc0] sm:$0xff]
    %v477 = vld [vmem:[%s2 + $0xc8] sm:$0xff]
    %v478 = vld [vmem:[%s2 + $0xd0] sm:$0xff]
    %v479 = vld [vmem:[%s2 + $0xd8] sm:$0xff]
    %v480 = vld [vmem:[%s2 + $0xe0] sm:$0xff]
    %v481 = vld [vmem:[%s2 + $0xe8] sm:$0xff]
    %v482 = vld [vmem:[%s2 + $0xf0] sm:$0xff]
    %v483 = vld [vmem:[%s2 + $0xf8] sm:$0xff]
    %v484 = vld [vmem:[%s2 + $0x100] sm:$0xff]
    %v485 = vld [vmem:[%s2 + $0x108] sm:$0xff]
    %v486 = vld [vmem:[%s2 + $0x110] sm:$0xff]
    %v487 = vld [vmem:[%s2 + $0x118] sm:$0xff]
    %v488 = vld [vmem:[%s3] sm:$0x1]
    %v490 = vperm.slane %v488, 0
    %v493 = vsel %vm359, %v421, 0
    %v496 = vsel %vm359, %v424, 0
    %v499 = vsel %vm359, %v427, 0
    %v502 = vsel %vm359, %v430, 0
    %v505 = vsel %vm359, %v433, 0
    %v508 = vsel %vm359, %v436, 0
    %v511 = vsel %vm359, %v439, 0
    %v514 = vsel %vm359, %v442, 0
    %v517 = vsel %vm359, %v445, 0
    %v520 = vsel %vm359, %v448, 0
    %v523 = vsel %vm359, %v451, 0
    %525 = vmatpush.msra.mxu0 %v467
    %526 = vmatpush.msra.mxu0 %v466
    %527 = vmatpush.msra.mxu0 %v465
    %528 = vmatpush.msra.mxu0 %v464
    %529 = vmatpush.msra.mxu0 %v463
    %530 = vmatpush.msra.mxu0 %v462
    %531 = vmatpush.msra.mxu0 %v461
    %532 = vmatpush.msra.mxu0 %v460
    %533 = vmatpush.msra.mxu0 %v459
    %534 = vmatpush.msra.mxu0 %v458
    %535 = vmatpush.msra.mxu0 %v457
    %536 = vmatpush.msra.mxu0 %v456
    %537 = vmatpush.msra.mxu0 %v455
    %538 = vmatpush.msra.mxu0 %v454
    %539 = vmatpush.msra.mxu0 %v453
    %540 = vmatpush.msra.mxu0 %v452
    %541 = vmatmul.f32.gmra.mxu0 %v419
    %v542 = vpop.f32.mrf.mxu0
    %v543 = vadd.f32 %v490, %v542
    %544 = vmatmul.f32.gmra.mxu0 %v422
    %v545 = vpop.f32.mrf.mxu0
    %v546 = vadd.f32 %v490, %v545
    %547 = vmatmul.f32.gmra.mxu0 %v425
    %v548 = vpop.f32.mrf.mxu0
    %v549 = vadd.f32 %v490, %v548
    %550 = vmatmul.f32.gmra.mxu0 %v428
    %v551 = vpop.f32.mrf.mxu0
    %v552 = vadd.f32 %v490, %v551
    %553 = vmatmul.f32.gmra.mxu0 %v431
    %v554 = vpop.f32.mrf.mxu0
    %v555 = vadd.f32 %v490, %v554
    %556 = vmatmul.f32.gmra.mxu0 %v434
    %v557 = vpop.f32.mrf.mxu0
    %v558 = vadd.f32 %v490, %v557
    %559 = vmatmul.f32.gmra.mxu0 %v437
    %v560 = vpop.f32.mrf.mxu0
    %v561 = vadd.f32 %v490, %v560
    %562 = vmatmul.f32.gmra.mxu0 %v440
    %v563 = vpop.f32.mrf.mxu0
    %v564 = vadd.f32 %v490, %v563
    %565 = vmatmul.f32.gmra.mxu0 %v443
    %v566 = vpop.f32.mrf.mxu0
    %v567 = vadd.f32 %v490, %v566
    %568 = vmatmul.f32.gmra.mxu0 %v446
    %v569 = vpop.f32.mrf.mxu0
    %v570 = vadd.f32 %v490, %v569
    %571 = vmatmul.f32.gmra.mxu0 %v449
    %v572 = vpop.f32.mrf.mxu0
    %v573 = vadd.f32 %v490, %v572
    %574 = vdwg.mxu0
    %575 = vmatpush.msra.mxu0 %v483
    %576 = vmatpush.msra.mxu0 %v482
    %577 = vmatpush.msra.mxu0 %v481
    %578 = vmatpush.msra.mxu0 %v480
    %579 = vmatpush.msra.mxu0 %v479
    %580 = vmatpush.msra.mxu0 %v478
    %581 = vmatpush.msra.mxu0 %v477
    %582 = vmatpush.msra.mxu0 %v476
    %583 = vmatpush.msra.mxu0 %v475
    %584 = vmatpush.msra.mxu0 %v474
    %585 = vmatpush.msra.mxu0 %v473
    %586 = vmatpush.msra.mxu0 %v472
    %587 = vmatpush.msra.mxu0 %v471
    %588 = vmatpush.msra.mxu0 %v470
    %589 = vmatpush.msra.mxu0 %v469
    %590 = vmatpush.msra.mxu0 %v468
    %591 = vmatmul.f32.gmra.mxu0 %v420
    %v592 = vpop.f32.mrf.mxu0
    %v593 = vadd.f32 %v543, %v592
    %594 = vmatmul.f32.gmra.mxu0 %v423
    %v595 = vpop.f32.mrf.mxu0
    %v596 = vadd.f32 %v546, %v595
    %597 = vmatmul.f32.gmra.mxu0 %v426
    %v598 = vpop.f32.mrf.mxu0
    %v599 = vadd.f32 %v549, %v598
    %600 = vmatmul.f32.gmra.mxu0 %v429
    %v601 = vpop.f32.mrf.mxu0
    %v602 = vadd.f32 %v552, %v601
    %603 = vmatmul.f32.gmra.mxu0 %v432
    %v604 = vpop.f32.mrf.mxu0
    %v605 = vadd.f32 %v555, %v604
    %606 = vmatmul.f32.gmra.mxu0 %v435
    %v607 = vpop.f32.mrf.mxu0
    %v608 = vadd.f32 %v558, %v607
    %609 = vmatmul.f32.gmra.mxu0 %v438
    %v610 = vpop.f32.mrf.mxu0
    %v611 = vadd.f32 %v561, %v610
    %612 = vmatmul.f32.gmra.mxu0 %v441
    %v613 = vpop.f32.mrf.mxu0
    %v614 = vadd.f32 %v564, %v613
    %615 = vmatmul.f32.gmra.mxu0 %v444
    %v616 = vpop.f32.mrf.mxu0
    %v617 = vadd.f32 %v567, %v616
    %618 = vmatmul.f32.gmra.mxu0 %v447
    %v619 = vpop.f32.mrf.mxu0
    %v620 = vadd.f32 %v570, %v619
    %621 = vmatmul.f32.gmra.mxu0 %v450
    %v622 = vpop.f32.mrf.mxu0
    %v623 = vadd.f32 %v573, %v622
    %624 = vdwg.mxu0
    %625 = vmatpush.msra.mxu0 0.0
    %626 = vmatpush.msra.mxu0 0.0
    %627 = vmatpush.msra.mxu0 0.0
    %628 = vmatpush.msra.mxu0 0.0
    %629 = vmatpush.msra.mxu0 0.0
    %630 = vmatpush.msra.mxu0 0.0
    %631 = vmatpush.msra.mxu0 0.0
    %632 = vmatpush.msra.mxu0 0.0
    %633 = vmatpush.msra.mxu0 0.0
    %634 = vmatpush.msra.mxu0 0.0
    %635 = vmatpush.msra.mxu0 0.0
    %636 = vmatpush.msra.mxu0 0.0
    %637 = vmatpush.msra.mxu0 %v487
    %638 = vmatpush.msra.mxu0 %v486
    %639 = vmatpush.msra.mxu0 %v485
    %640 = vmatpush.msra.mxu0 %v484
    %641 = vmatmul.f32.gmra.mxu0 %v493
    %v642 = vpop.f32.mrf.mxu0
    %v643 = vadd.f32 %v593, %v642
    %644 = vmatmul.f32.gmra.mxu0 %v496
    %v645 = vpop.f32.mrf.mxu0
    %v646 = vadd.f32 %v596, %v645
    %647 = vmatmul.f32.gmra.mxu0 %v499
    %v648 = vpop.f32.mrf.mxu0
    %v649 = vadd.f32 %v599, %v648
    %650 = vmatmul.f32.gmra.mxu0 %v502
    %v651 = vpop.f32.mrf.mxu0
    %v652 = vadd.f32 %v602, %v651
    %653 = vmatmul.f32.gmra.mxu0 %v505
    %v654 = vpop.f32.mrf.mxu0
    %v655 = vadd.f32 %v605, %v654
    %656 = vmatmul.f32.gmra.mxu0 %v508
    %v657 = vpop.f32.mrf.mxu0
    %v658 = vadd.f32 %v608, %v657
    %659 = vmatmul.f32.gmra.mxu0 %v511
    %v660 = vpop.f32.mrf.mxu0
    %v661 = vadd.f32 %v611, %v660
    %662 = vmatmul.f32.gmra.mxu0 %v514
    %v663 = vpop.f32.mrf.mxu0
    %v664 = vadd.f32 %v614, %v663
    %665 = vmatmul.f32.gmra.mxu0 %v517
    %v666 = vpop.f32.mrf.mxu0
    %v667 = vadd.f32 %v617, %v666
    %668 = vmatmul.f32.gmra.mxu0 %v520
    %v669 = vpop.f32.mrf.mxu0
    %v670 = vadd.f32 %v620, %v669
    %671 = vmatmul.f32.gmra.mxu0 %v523
    %v672 = vpop.f32.mrf.mxu0
    %v673 = vadd.f32 %v623, %v672
    %674 = vdwg.mxu0
    %v675 = vmax.f32 %v643, 0.0
    %v676 = vmax.f32 %v646, 0.0
    %v677 = vmax.f32 %v649, 0.0
    %v678 = vmax.f32 %v652, 0.0
    %v679 = vmax.f32 %v655, 0.0
    %v680 = vmax.f32 %v658, 0.0
    %v681 = vmax.f32 %v661, 0.0
    %v682 = vmax.f32 %v664, 0.0
    %v683 = vmax.f32 %v667, 0.0
    %v684 = vmax.f32 %v670, 0.0
    %v685 = vmax.f32 %v673, 0.0
    %v686 = vsel %vm109, %v685, 0.0
    %v697 = vrot.slane %v675, 1
    %v698 = vsel %vm122, %v123, %v697
    %v699 = vrot.slane %v676, 1
    %v700 = vsel %vm122, %v697, %v699
    %v701 = vrot.slane %v677, 1
    %v702 = vsel %vm122, %v699, %v701
    %v703 = vrot.slane %v678, 1
    %v704 = vsel %vm122, %v701, %v703
    %v705 = vrot.slane %v679, 1
    %v706 = vsel %vm122, %v703, %v705
    %v707 = vrot.slane %v680, 1
    %v708 = vsel %vm122, %v705, %v707
    %v709 = vrot.slane %v681, 1
    %v710 = vsel %vm122, %v707, %v709
    %v711 = vrot.slane %v682, 1
    %v712 = vsel %vm122, %v709, %v711
    %v713 = vrot.slane %v683, 1
    %v714 = vsel %vm122, %v711, %v713
    %v715 = vrot.slane %v684, 1
    %v716 = vsel %vm122, %v713, %v715
    %717 = vrot.lane.b32.xlu0 %v698, 32
    %v718 = vpop.permute.xlu0 %717
    %719 = vrot.lane.b32.xlu0 %v700, 32
    %v720 = vpop.permute.xlu0 %719
    %721 = vrot.lane.b32.xlu0 %v702, 32
    %v722 = vpop.permute.xlu0 %721
    %723 = vrot.lane.b32.xlu0 %v704, 32
    %v724 = vpop.permute.xlu0 %723
    %725 = vrot.lane.b32.xlu0 %v706, 32
    %v726 = vpop.permute.xlu0 %725
    %727 = vrot.lane.b32.xlu0 %v708, 32
    %v728 = vpop.permute.xlu0 %727
    %729 = vrot.lane.b32.xlu0 %v710, 32
    %v730 = vpop.permute.xlu0 %729
    %731 = vrot.lane.b32.xlu0 %v712, 32
    %v732 = vpop.permute.xlu0 %731
    %733 = vrot.lane.b32.xlu0 %v714, 32
    %v734 = vpop.permute.xlu0 %733
    %735 = vrot.lane.b32.xlu0 %v716, 32
    %v736 = vpop.permute.xlu0 %735
    %737 = vrot.lane.b32.xlu0 %v715, 32
    %v738 = vpop.permute.xlu0 %737
    %v750 = vrot.slane %v675, 2
    %v751 = vsel %vm177, %v178, %v750
    %v752 = vrot.slane %v676, 2
    %v753 = vsel %vm177, %v750, %v752
    %v754 = vrot.slane %v677, 2
    %v755 = vsel %vm177, %v752, %v754
    %v756 = vrot.slane %v678, 2
    %v757 = vsel %vm177, %v754, %v756
    %v758 = vrot.slane %v679, 2
    %v759 = vsel %vm177, %v756, %v758
    %v760 = vrot.slane %v680, 2
    %v761 = vsel %vm177, %v758, %v760
    %v762 = vrot.slane %v681, 2
    %v763 = vsel %vm177, %v760, %v762
    %v764 = vrot.slane %v682, 2
    %v765 = vsel %vm177, %v762, %v764
    %v766 = vrot.slane %v683, 2
    %v767 = vsel %vm177, %v764, %v766
    %v768 = vrot.slane %v684, 2
    %v769 = vsel %vm177, %v766, %v768
    %770 = vrot.lane.b32.xlu0 %v751, 64
    %v771 = vpop.permute.xlu0 %770
    %772 = vrot.lane.b32.xlu0 %v753, 64
    %v773 = vpop.permute.xlu0 %772
    %774 = vrot.lane.b32.xlu0 %v755, 64
    %v775 = vpop.permute.xlu0 %774
    %776 = vrot.lane.b32.xlu0 %v757, 64
    %v777 = vpop.permute.xlu0 %776
    %778 = vrot.lane.b32.xlu0 %v759, 64
    %v779 = vpop.permute.xlu0 %778
    %780 = vrot.lane.b32.xlu0 %v761, 64
    %v781 = vpop.permute.xlu0 %780
    %782 = vrot.lane.b32.xlu0 %v763, 64
    %v783 = vpop.permute.xlu0 %782
    %784 = vrot.lane.b32.xlu0 %v765, 64
    %v785 = vpop.permute.xlu0 %784
    %786 = vrot.lane.b32.xlu0 %v767, 64
    %v787 = vpop.permute.xlu0 %786
    %788 = vrot.lane.b32.xlu0 %v769, 64
    %v789 = vpop.permute.xlu0 %788
    %790 = vrot.lane.b32.xlu0 %v768, 64
    %v791 = vpop.permute.xlu0 %790
    %v804 = vrot.slane %v675, 7
    %v805 = vsel %vm233, %v234, %v804
    %v806 = vrot.slane %v676, 7
    %v807 = vsel %vm233, %v804, %v806
    %v808 = vrot.slane %v677, 7
    %v809 = vsel %vm233, %v806, %v808
    %v810 = vrot.slane %v678, 7
    %v811 = vsel %vm233, %v808, %v810
    %v812 = vrot.slane %v679, 7
    %v813 = vsel %vm233, %v810, %v812
    %v814 = vrot.slane %v680, 7
    %v815 = vsel %vm233, %v812, %v814
    %v816 = vrot.slane %v681, 7
    %v817 = vsel %vm233, %v814, %v816
    %v818 = vrot.slane %v682, 7
    %v819 = vsel %vm233, %v816, %v818
    %v820 = vrot.slane %v683, 7
    %v821 = vsel %vm233, %v818, %v820
    %v822 = vrot.slane %v684, 7
    %v823 = vsel %vm233, %v820, %v822
    %v824 = vrot.slane %v686, 7
    %v825 = vsel %vm233, %v822, %v824
    %826 = vrot.lane.b32.xlu0 %v805, 96
    %v827 = vpop.permute.xlu0 %826
    %828 = vrot.lane.b32.xlu0 %v807, 96
    %v829 = vpop.permute.xlu0 %828
    %830 = vrot.lane.b32.xlu0 %v809, 96
    %v831 = vpop.permute.xlu0 %830
    %832 = vrot.lane.b32.xlu0 %v811, 96
    %v833 = vpop.permute.xlu0 %832
    %834 = vrot.lane.b32.xlu0 %v813, 96
    %v835 = vpop.permute.xlu0 %834
    %836 = vrot.lane.b32.xlu0 %v815, 96
    %v837 = vpop.permute.xlu0 %836
    %838 = vrot.lane.b32.xlu0 %v817, 96
    %v839 = vpop.permute.xlu0 %838
    %840 = vrot.lane.b32.xlu0 %v819, 96
    %v841 = vpop.permute.xlu0 %840
    %842 = vrot.lane.b32.xlu0 %v821, 96
    %v843 = vpop.permute.xlu0 %842
    %844 = vrot.lane.b32.xlu0 %v823, 96
    %v845 = vpop.permute.xlu0 %844
    %846 = vrot.lane.b32.xlu0 %v825, 96
    %v847 = vpop.permute.xlu0 %846
    %v859 = vrot.slane %v686, 1
    %v860 = vsel %vm122, %v715, %v859
    %861 = vrot.lane.b32.xlu0 %v860, 32
    %v862 = vpop.permute.xlu0 %861
    %863 = vrot.lane.b32.xlu0 %v859, 32
    %v864 = vpop.permute.xlu0 %863
    %v867 = vrot.slane %v675, 6
    %v868 = vrot.slane %v676, 6
    %v869 = vsel %vm298, %v867, %v868
    %v870 = vrot.slane %v677, 6
    %v871 = vsel %vm298, %v868, %v870
    %v872 = vrot.slane %v678, 6
    %v873 = vsel %vm298, %v870, %v872
    %v874 = vrot.slane %v679, 6
    %v875 = vsel %vm298, %v872, %v874
    %v876 = vrot.slane %v680, 6
    %v877 = vsel %vm298, %v874, %v876
    %v878 = vrot.slane %v681, 6
    %v879 = vsel %vm298, %v876, %v878
    %v880 = vrot.slane %v682, 6
    %v881 = vsel %vm298, %v878, %v880
    %v882 = vrot.slane %v683, 6
    %v883 = vsel %vm298, %v880, %v882
    %v884 = vrot.slane %v684, 6
    %v885 = vsel %vm298, %v882, %v884
    %v886 = vrot.slane %v686, 6
    %v887 = vsel %vm298, %v884, %v886
    %v888 = vsel %vm298, %v886, %v320
    %889 = vrot.lane.b32.xlu0 %v869, 64
    %v890 = vpop.permute.xlu0 %889
    %891 = vrot.lane.b32.xlu0 %v871, 64
    %v892 = vpop.permute.xlu0 %891
    %893 = vrot.lane.b32.xlu0 %v873, 64
    %v894 = vpop.permute.xlu0 %893
    %895 = vrot.lane.b32.xlu0 %v875, 64
    %v896 = vpop.permute.xlu0 %895
    %897 = vrot.lane.b32.xlu0 %v877, 64
    %v898 = vpop.permute.xlu0 %897
    %899 = vrot.lane.b32.xlu0 %v879, 64
    %v900 = vpop.permute.xlu0 %899
    %901 = vrot.lane.b32.xlu0 %v881, 64
    %v902 = vpop.permute.xlu0 %901
    %903 = vrot.lane.b32.xlu0 %v883, 64
    %v904 = vpop.permute.xlu0 %903
    %905 = vrot.lane.b32.xlu0 %v885, 64
    %v906 = vpop.permute.xlu0 %905
    %907 = vrot.lane.b32.xlu0 %v887, 64
    %v908 = vpop.permute.xlu0 %907
    %909 = vrot.lane.b32.xlu0 %v888, 64
    %v910 = vpop.permute.xlu0 %909
    %v922 = vsel %vm233, %v824, %v234
    %923 = vrot.lane.b32.xlu0 %v922, 96
    %v924 = vpop.permute.xlu0 %923
    %v926 = vsel %vm359, 0.0, %v718
    %v927 = vsel %vm359, %v675, %v720
    %v928 = vsel %vm359, %v676, %v722
    %v929 = vsel %vm359, %v677, %v724
    %v930 = vsel %vm359, %v678, %v726
    %v931 = vsel %vm359, %v679, %v728
    %v932 = vsel %vm359, %v680, %v730
    %v933 = vsel %vm359, %v681, %v732
    %v934 = vsel %vm359, %v682, %v734
    %v935 = vsel %vm359, %v683, %v736
    %v936 = vsel %vm359, %v684, %v738
    %v937 = vsel %vm371, %v926, %v771
    %v938 = vsel %vm371, %v927, %v773
    %v939 = vsel %vm371, %v928, %v775
    %v940 = vsel %vm371, %v929, %v777
    %v941 = vsel %vm371, %v930, %v779
    %v942 = vsel %vm371, %v931, %v781
    %v943 = vsel %vm371, %v932, %v783
    %v944 = vsel %vm371, %v933, %v785
    %v945 = vsel %vm371, %v934, %v787
    %v946 = vsel %vm371, %v935, %v789
    %v947 = vsel %vm371, %v936, %v791
    %v948 = vsel %vm383, %v937, %v827
    %v949 = vsel %vm383, %v938, %v829
    %v950 = vsel %vm383, %v939, %v831
    %v951 = vsel %vm383, %v940, %v833
    %v952 = vsel %vm383, %v941, %v835
    %v953 = vsel %vm383, %v942, %v837
    %v954 = vsel %vm383, %v943, %v839
    %v955 = vsel %vm383, %v944, %v841
    %v956 = vsel %vm383, %v945, %v843
    %v957 = vsel %vm383, %v946, %v845
    %v958 = vsel %vm383, %v947, %v847
    %v959 = vsel %vm359, %v684, %v862
    %v960 = vsel %vm359, %v686, %v864
    %v961 = vsel %vm371, %v927, %v890
    %v962 = vsel %vm371, %v928, %v892
    %v963 = vsel %vm371, %v929, %v894
    %v964 = vsel %vm371, %v930, %v896
    %v965 = vsel %vm371, %v931, %v898
    %v966 = vsel %vm371, %v932, %v900
    %v967 = vsel %vm371, %v933, %v902
    %v968 = vsel %vm371, %v934, %v904
    %v969 = vsel %vm371, %v935, %v906
    %v970 = vsel %vm371, %v959, %v908
    %v971 = vsel %vm371, %v960, %v910
    %v972 = vsel %vm383, %v961, %v829
    %v973 = vsel %vm383, %v962, %v831
    %v974 = vsel %vm383, %v963, %v833
    %v975 = vsel %vm383, %v964, %v835
    %v976 = vsel %vm383, %v965, %v837
    %v977 = vsel %vm383, %v966, %v839
    %v978 = vsel %vm383, %v967, %v841
    %v979 = vsel %vm383, %v968, %v843
    %v980 = vsel %vm383, %v969, %v845
    %v981 = vsel %vm383, %v970, %v847
    %v982 = vsel %vm383, %v971, %v924
    %v983 = vmul.f32 %v948, %v76
    %v984 = vmul.f32 %v972, %v77
    %v985 = vmul.f32 %v676, %v78
    %v986 = vmul.f32 %v949, %v79
    %v987 = vmul.f32 %v973, %v80
    %v988 = vmul.f32 %v677, %v81
    %v989 = vmul.f32 %v950, %v82
    %v990 = vmul.f32 %v974, %v83
    %v991 = vmul.f32 %v678, %v84
    %v992 = vmul.f32 %v951, %v85
    %v993 = vmul.f32 %v975, %v86
    %v994 = vmul.f32 %v679, %v87
    %v995 = vmul.f32 %v952, %v88
    %v996 = vmul.f32 %v976, %v89
    %v997 = vmul.f32 %v680, %v90
    %v998 = vmul.f32 %v953, %v91
    %v999 = vmul.f32 %v977, %v92
    %v1000 = vmul.f32 %v681, %v93
    %v1001 = vmul.f32 %v954, %v94
    %v1002 = vmul.f32 %v978, %v95
    %v1003 = vmul.f32 %v682, %v96
    %v1004 = vmul.f32 %v955, %v97
    %v1005 = vmul.f32 %v979, %v98
    %v1006 = vmul.f32 %v683, %v99
    %v1007 = vmul.f32 %v956, %v100
    %v1008 = vmul.f32 %v980, %v101
    %v1009 = vmul.f32 %v684, %v102
    %v1010 = vmul.f32 %v957, %v103
    %v1011 = vmul.f32 %v981, %v104
    %v1012 = vmul.f32 %v686, %v105
    %v1013 = vmul.f32 %v958, %v106
    %v1014 = vmul.f32 %v982, %v107
    %v1015 = vld [vmem:[%s4] sm:$0xff]
    %v1016 = vld [vmem:[%s4 + $0x8] sm:$0xff]
    %v1017 = vld [vmem:[%s4 + $0x10] sm:$0xff]
    %v1018 = vld [vmem:[%s4 + $0x18] sm:$0xff]
    %v1019 = vld [vmem:[%s4 + $0x20] sm:$0xff]
    %v1020 = vld [vmem:[%s4 + $0x28] sm:$0xff]
    %v1021 = vld [vmem:[%s4 + $0x30] sm:$0xff]
    %v1022 = vld [vmem:[%s4 + $0x38] sm:$0xff]
    %v1023 = vld [vmem:[%s4 + $0x40] sm:$0xff]
    %v1024 = vld [vmem:[%s4 + $0x48] sm:$0xff]
    %v1025 = vld [vmem:[%s4 + $0x50] sm:$0xff]
    %v1026 = vld [vmem:[%s4 + $0x58] sm:$0xff]
    %v1027 = vld [vmem:[%s4 + $0x60] sm:$0xff]
    %v1028 = vld [vmem:[%s4 + $0x68] sm:$0xff]
    %v1029 = vld [vmem:[%s4 + $0x70] sm:$0xff]
    %v1030 = vld [vmem:[%s4 + $0x78] sm:$0xff]
    %v1031 = vld [vmem:[%s4 + $0x80] sm:$0xff]
    %v1032 = vld [vmem:[%s4 + $0x88] sm:$0xff]
    %v1033 = vld [vmem:[%s4 + $0x90] sm:$0xff]
    %v1034 = vld [vmem:[%s4 + $0x98] sm:$0xff]
    %v1035 = vld [vmem:[%s4 + $0xa0] sm:$0xff]
    %v1036 = vld [vmem:[%s4 + $0xa8] sm:$0xff]
    %v1037 = vld [vmem:[%s4 + $0xb0] sm:$0xff]
    %v1038 = vld [vmem:[%s4 + $0xb8] sm:$0xff]
    %v1039 = vld [vmem:[%s4 + $0xc0] sm:$0xff]
    %v1040 = vld [vmem:[%s4 + $0xc8] sm:$0xff]
    %v1041 = vld [vmem:[%s4 + $0xd0] sm:$0xff]
    %v1042 = vld [vmem:[%s4 + $0xd8] sm:$0xff]
    %v1043 = vld [vmem:[%s4 + $0xe0] sm:$0xff]
    %v1044 = vld [vmem:[%s4 + $0xe8] sm:$0xff]
    %v1045 = vld [vmem:[%s4 + $0xf0] sm:$0xff]
    %v1046 = vld [vmem:[%s4 + $0xf8] sm:$0xff]
    %v1047 = vld [vmem:[%s4 + $0x100] sm:$0xff]
    %v1048 = vld [vmem:[%s4 + $0x108] sm:$0xff]
    %v1049 = vld [vmem:[%s4 + $0x110] sm:$0xff]
    %v1050 = vld [vmem:[%s4 + $0x118] sm:$0xff]
    %v1051 = vld [vmem:[%s5] sm:$0x1]
    %v1053 = vperm.slane %v1051, 0
    %v1056 = vsel %vm359, %v985, 0
    %v1059 = vsel %vm359, %v988, 0
    %v1062 = vsel %vm359, %v991, 0
    %v1065 = vsel %vm359, %v994, 0
    %v1068 = vsel %vm359, %v997, 0
    %v1071 = vsel %vm359, %v1000, 0
    %v1074 = vsel %vm359, %v1003, 0
    %v1077 = vsel %vm359, %v1006, 0
    %v1080 = vsel %vm359, %v1009, 0
    %v1083 = vsel %vm359, %v1012, 0
    %1085 = vmatpush.msra.mxu0 %v1030
    %1086 = vmatpush.msra.mxu0 %v1029
    %1087 = vmatpush.msra.mxu0 %v1028
    %1088 = vmatpush.msra.mxu0 %v1027
    %1089 = vmatpush.msra.mxu0 %v1026
    %1090 = vmatpush.msra.mxu0 %v1025
    %1091 = vmatpush.msra.mxu0 %v1024
    %1092 = vmatpush.msra.mxu0 %v1023
    %1093 = vmatpush.msra.mxu0 %v1022
    %1094 = vmatpush.msra.mxu0 %v1021
    %1095 = vmatpush.msra.mxu0 %v1020
    %1096 = vmatpush.msra.mxu0 %v1019
    %1097 = vmatpush.msra.mxu0 %v1018
    %1098 = vmatpush.msra.mxu0 %v1017
    %1099 = vmatpush.msra.mxu0 %v1016
    %1100 = vmatpush.msra.mxu0 %v1015
    %1101 = vmatmul.f32.gmra.mxu0 %v983
    %v1102 = vpop.f32.mrf.mxu0
    %v1103 = vadd.f32 %v1053, %v1102
    %1104 = vmatmul.f32.gmra.mxu0 %v986
    %v1105 = vpop.f32.mrf.mxu0
    %v1106 = vadd.f32 %v1053, %v1105
    %1107 = vmatmul.f32.gmra.mxu0 %v989
    %v1108 = vpop.f32.mrf.mxu0
    %v1109 = vadd.f32 %v1053, %v1108
    %1110 = vmatmul.f32.gmra.mxu0 %v992
    %v1111 = vpop.f32.mrf.mxu0
    %v1112 = vadd.f32 %v1053, %v1111
    %1113 = vmatmul.f32.gmra.mxu0 %v995
    %v1114 = vpop.f32.mrf.mxu0
    %v1115 = vadd.f32 %v1053, %v1114
    %1116 = vmatmul.f32.gmra.mxu0 %v998
    %v1117 = vpop.f32.mrf.mxu0
    %v1118 = vadd.f32 %v1053, %v1117
    %1119 = vmatmul.f32.gmra.mxu0 %v1001
    %v1120 = vpop.f32.mrf.mxu0
    %v1121 = vadd.f32 %v1053, %v1120
    %1122 = vmatmul.f32.gmra.mxu0 %v1004
    %v1123 = vpop.f32.mrf.mxu0
    %v1124 = vadd.f32 %v1053, %v1123
    %1125 = vmatmul.f32.gmra.mxu0 %v1007
    %v1126 = vpop.f32.mrf.mxu0
    %v1127 = vadd.f32 %v1053, %v1126
    %1128 = vmatmul.f32.gmra.mxu0 %v1010
    %v1129 = vpop.f32.mrf.mxu0
    %v1130 = vadd.f32 %v1053, %v1129
    %1131 = vmatmul.f32.gmra.mxu0 %v1013
    %v1132 = vpop.f32.mrf.mxu0
    %v1133 = vadd.f32 %v1053, %v1132
    %1134 = vdwg.mxu0
    %1135 = vmatpush.msra.mxu0 %v1046
    %1136 = vmatpush.msra.mxu0 %v1045
    %1137 = vmatpush.msra.mxu0 %v1044
    %1138 = vmatpush.msra.mxu0 %v1043
    %1139 = vmatpush.msra.mxu0 %v1042
    %1140 = vmatpush.msra.mxu0 %v1041
    %1141 = vmatpush.msra.mxu0 %v1040
    %1142 = vmatpush.msra.mxu0 %v1039
    %1143 = vmatpush.msra.mxu0 %v1038
    %1144 = vmatpush.msra.mxu0 %v1037
    %1145 = vmatpush.msra.mxu0 %v1036
    %1146 = vmatpush.msra.mxu0 %v1035
    %1147 = vmatpush.msra.mxu0 %v1034
    %1148 = vmatpush.msra.mxu0 %v1033
    %1149 = vmatpush.msra.mxu0 %v1032
    %1150 = vmatpush.msra.mxu0 %v1031
    %1151 = vmatmul.f32.gmra.mxu0 %v984
    %v1152 = vpop.f32.mrf.mxu0
    %v1153 = vadd.f32 %v1103, %v1152
    %1154 = vmatmul.f32.gmra.mxu0 %v987
    %v1155 = vpop.f32.mrf.mxu0
    %v1156 = vadd.f32 %v1106, %v1155
    %1157 = vmatmul.f32.gmra.mxu0 %v990
    %v1158 = vpop.f32.mrf.mxu0
    %v1159 = vadd.f32 %v1109, %v1158
    %1160 = vmatmul.f32.gmra.mxu0 %v993
    %v1161 = vpop.f32.mrf.mxu0
    %v1162 = vadd.f32 %v1112, %v1161
    %1163 = vmatmul.f32.gmra.mxu0 %v996
    %v1164 = vpop.f32.mrf.mxu0
    %v1165 = vadd.f32 %v1115, %v1164
    %1166 = vmatmul.f32.gmra.mxu0 %v999
    %v1167 = vpop.f32.mrf.mxu0
    %v1168 = vadd.f32 %v1118, %v1167
    %1169 = vmatmul.f32.gmra.mxu0 %v1002
    %v1170 = vpop.f32.mrf.mxu0
    %v1171 = vadd.f32 %v1121, %v1170
    %1172 = vmatmul.f32.gmra.mxu0 %v1005
    %v1173 = vpop.f32.mrf.mxu0
    %v1174 = vadd.f32 %v1124, %v1173
    %1175 = vmatmul.f32.gmra.mxu0 %v1008
    %v1176 = vpop.f32.mrf.mxu0
    %v1177 = vadd.f32 %v1127, %v1176
    %1178 = vmatmul.f32.gmra.mxu0 %v1011
    %v1179 = vpop.f32.mrf.mxu0
    %v1180 = vadd.f32 %v1130, %v1179
    %1181 = vmatmul.f32.gmra.mxu0 %v1014
    %v1182 = vpop.f32.mrf.mxu0
    %v1183 = vadd.f32 %v1133, %v1182
    %1184 = vdwg.mxu0
    %1185 = vmatpush.msra.mxu0 0.0
    %1186 = vmatpush.msra.mxu0 0.0
    %1187 = vmatpush.msra.mxu0 0.0
    %1188 = vmatpush.msra.mxu0 0.0
    %1189 = vmatpush.msra.mxu0 0.0
    %1190 = vmatpush.msra.mxu0 0.0
    %1191 = vmatpush.msra.mxu0 0.0
    %1192 = vmatpush.msra.mxu0 0.0
    %1193 = vmatpush.msra.mxu0 0.0
    %1194 = vmatpush.msra.mxu0 0.0
    %1195 = vmatpush.msra.mxu0 0.0
    %1196 = vmatpush.msra.mxu0 0.0
    %1197 = vmatpush.msra.mxu0 %v1050
    %1198 = vmatpush.msra.mxu0 %v1049
    %1199 = vmatpush.msra.mxu0 %v1048
    %1200 = vmatpush.msra.mxu0 %v1047
    %1201 = vmatmul.f32.gmra.mxu0 %v1056
    %v1202 = vpop.f32.mrf.mxu0
    %v1203 = vadd.f32 %v1153, %v1202
    %1204 = vmatmul.f32.gmra.mxu0 %v1059
    %v1205 = vpop.f32.mrf.mxu0
    %v1206 = vadd.f32 %v1156, %v1205
    %1207 = vmatmul.f32.gmra.mxu0 %v1062
    %v1208 = vpop.f32.mrf.mxu0
    %v1209 = vadd.f32 %v1159, %v1208
    %1210 = vmatmul.f32.gmra.mxu0 %v1065
    %v1211 = vpop.f32.mrf.mxu0
    %v1212 = vadd.f32 %v1162, %v1211
    %1213 = vmatmul.f32.gmra.mxu0 %v1068
    %v1214 = vpop.f32.mrf.mxu0
    %v1215 = vadd.f32 %v1165, %v1214
    %1216 = vmatmul.f32.gmra.mxu0 %v1071
    %v1217 = vpop.f32.mrf.mxu0
    %v1218 = vadd.f32 %v1168, %v1217
    %1219 = vmatmul.f32.gmra.mxu0 %v1074
    %v1220 = vpop.f32.mrf.mxu0
    %v1221 = vadd.f32 %v1171, %v1220
    %1222 = vmatmul.f32.gmra.mxu0 %v1077
    %v1223 = vpop.f32.mrf.mxu0
    %v1224 = vadd.f32 %v1174, %v1223
    %1225 = vmatmul.f32.gmra.mxu0 %v1080
    %v1226 = vpop.f32.mrf.mxu0
    %v1227 = vadd.f32 %v1177, %v1226
    %1228 = vmatmul.f32.gmra.mxu0 %v1083
    %v1229 = vpop.f32.mrf.mxu0
    %v1230 = vadd.f32 %v1180, %v1229
    %1231 = vmatmul.f32.gmra.mxu0 %v523
    %v1232 = vpop.f32.mrf.mxu0
    %v1233 = vadd.f32 %v1183, %v1232
    %1234 = vdwg.mxu0
    %v1235 = vmax.f32 %v1203, 0.0
    %v1236 = vmax.f32 %v1206, 0.0
    %v1237 = vmax.f32 %v1209, 0.0
    %v1238 = vmax.f32 %v1212, 0.0
    %v1239 = vmax.f32 %v1215, 0.0
    %v1240 = vmax.f32 %v1218, 0.0
    %v1241 = vmax.f32 %v1221, 0.0
    %v1242 = vmax.f32 %v1224, 0.0
    %v1243 = vmax.f32 %v1227, 0.0
    %v1244 = vmax.f32 %v1230, 0.0
    %v1245 = vmax.f32 %v1233, 0.0
    %v1246 = vsel %vm109, %v1245, 0.0
    %v1257 = vrot.slane %v1235, 1
    %v1258 = vsel %vm122, %v123, %v1257
    %v1259 = vrot.slane %v1236, 1
    %v1260 = vsel %vm122, %v1257, %v1259
    %v1261 = vrot.slane %v1237, 1
    %v1262 = vsel %vm122, %v1259, %v1261
    %v1263 = vrot.slane %v1238, 1
    %v1264 = vsel %vm122, %v1261, %v1263
    %v1265 = vrot.slane %v1239, 1
    %v1266 = vsel %vm122, %v1263, %v1265
    %v1267 = vrot.slane %v1240, 1
    %v1268 = vsel %vm122, %v1265, %v1267
    %v1269 = vrot.slane %v1241, 1
    %v1270 = vsel %vm122, %v1267, %v1269
    %v1271 = vrot.slane %v1242, 1
    %v1272 = vsel %vm122, %v1269, %v1271
    %v1273 = vrot.slane %v1243, 1
    %v1274 = vsel %vm122, %v1271, %v1273
    %v1275 = vrot.slane %v1244, 1
    %v1276 = vsel %vm122, %v1273, %v1275
    %1277 = vrot.lane.b32.xlu0 %v1258, 32
    %v1278 = vpop.permute.xlu0 %1277
    %1279 = vrot.lane.b32.xlu0 %v1260, 32
    %v1280 = vpop.permute.xlu0 %1279
    %1281 = vrot.lane.b32.xlu0 %v1262, 32
    %v1282 = vpop.permute.xlu0 %1281
    %1283 = vrot.lane.b32.xlu0 %v1264, 32
    %v1284 = vpop.permute.xlu0 %1283
    %1285 = vrot.lane.b32.xlu0 %v1266, 32
    %v1286 = vpop.permute.xlu0 %1285
    %1287 = vrot.lane.b32.xlu0 %v1268, 32
    %v1288 = vpop.permute.xlu0 %1287
    %1289 = vrot.lane.b32.xlu0 %v1270, 32
    %v1290 = vpop.permute.xlu0 %1289
    %1291 = vrot.lane.b32.xlu0 %v1272, 32
    %v1292 = vpop.permute.xlu0 %1291
    %1293 = vrot.lane.b32.xlu0 %v1274, 32
    %v1294 = vpop.permute.xlu0 %1293
    %1295 = vrot.lane.b32.xlu0 %v1276, 32
    %v1296 = vpop.permute.xlu0 %1295
    %1297 = vrot.lane.b32.xlu0 %v1275, 32
    %v1298 = vpop.permute.xlu0 %1297
    %v1310 = vrot.slane %v1235, 2
    %v1311 = vsel %vm177, %v178, %v1310
    %v1312 = vrot.slane %v1236, 2
    %v1313 = vsel %vm177, %v1310, %v1312
    %v1314 = vrot.slane %v1237, 2
    %v1315 = vsel %vm177, %v1312, %v1314
    %v1316 = vrot.slane %v1238, 2
    %v1317 = vsel %vm177, %v1314, %v1316
    %v1318 = vrot.slane %v1239, 2
    %v1319 = vsel %vm177, %v1316, %v1318
    %v1320 = vrot.slane %v1240, 2
    %v1321 = vsel %vm177, %v1318, %v1320
    %v1322 = vrot.slane %v1241, 2
    %v1323 = vsel %vm177, %v1320, %v1322
    %v1324 = vrot.slane %v1242, 2
    %v1325 = vsel %vm177, %v1322, %v1324
    %v1326 = vrot.slane %v1243, 2
    %v1327 = vsel %vm177, %v1324, %v1326
    %v1328 = vrot.slane %v1244, 2
    %v1329 = vsel %vm177, %v1326, %v1328
    %1330 = vrot.lane.b32.xlu0 %v1311, 64
    %v1331 = vpop.permute.xlu0 %1330
    %1332 = vrot.lane.b32.xlu0 %v1313, 64
    %v1333 = vpop.permute.xlu0 %1332
    %1334 = vrot.lane.b32.xlu0 %v1315, 64
    %v1335 = vpop.permute.xlu0 %1334
    %1336 = vrot.lane.b32.xlu0 %v1317, 64
    %v1337 = vpop.permute.xlu0 %1336
    %1338 = vrot.lane.b32.xlu0 %v1319, 64
    %v1339 = vpop.permute.xlu0 %1338
    %1340 = vrot.lane.b32.xlu0 %v1321, 64
    %v1341 = vpop.permute.xlu0 %1340
    %1342 = vrot.lane.b32.xlu0 %v1323, 64
    %v1343 = vpop.permute.xlu0 %1342
    %1344 = vrot.lane.b32.xlu0 %v1325, 64
    %v1345 = vpop.permute.xlu0 %1344
    %1346 = vrot.lane.b32.xlu0 %v1327, 64
    %v1347 = vpop.permute.xlu0 %1346
    %1348 = vrot.lane.b32.xlu0 %v1329, 64
    %v1349 = vpop.permute.xlu0 %1348
    %1350 = vrot.lane.b32.xlu0 %v1328, 64
    %v1351 = vpop.permute.xlu0 %1350
    %v1364 = vrot.slane %v1235, 7
    %v1365 = vsel %vm233, %v234, %v1364
    %v1366 = vrot.slane %v1236, 7
    %v1367 = vsel %vm233, %v1364, %v1366
    %v1368 = vrot.slane %v1237, 7
    %v1369 = vsel %vm233, %v1366, %v1368
    %v1370 = vrot.slane %v1238, 7
    %v1371 = vsel %vm233, %v1368, %v1370
    %v1372 = vrot.slane %v1239, 7
    %v1373 = vsel %vm233, %v1370, %v1372
    %v1374 = vrot.slane %v1240, 7
    %v1375 = vsel %vm233, %v1372, %v1374
    %v1376 = vrot.slane %v1241, 7
    %v1377 = vsel %vm233, %v1374, %v1376
    %v1378 = vrot.slane %v1242, 7
    %v1379 = vsel %vm233, %v1376, %v1378
    %v1380 = vrot.slane %v1243, 7
    %v1381 = vsel %vm233, %v1378, %v1380
    %v1382 = vrot.slane %v1244, 7
    %v1383 = vsel %vm233, %v1380, %v1382
    %v1384 = vrot.slane %v1246, 7
    %v1385 = vsel %vm233, %v1382, %v1384
    %1386 = vrot.lane.b32.xlu0 %v1365, 96
    %v1387 = vpop.permute.xlu0 %1386
    %1388 = vrot.lane.b32.xlu0 %v1367, 96
    %v1389 = vpop.permute.xlu0 %1388
    %1390 = vrot.lane.b32.xlu0 %v1369, 96
    %v1391 = vpop.permute.xlu0 %1390
    %1392 = vrot.lane.b32.xlu0 %v1371, 96
    %v1393 = vpop.permute.xlu0 %1392
    %1394 = vrot.lane.b32.xlu0 %v1373, 96
    %v1395 = vpop.permute.xlu0 %1394
    %1396 = vrot.lane.b32.xlu0 %v1375, 96
    %v1397 = vpop.permute.xlu0 %1396
    %1398 = vrot.lane.b32.xlu0 %v1377, 96
    %v1399 = vpop.permute.xlu0 %1398
    %1400 = vrot.lane.b32.xlu0 %v1379, 96
    %v1401 = vpop.permute.xlu0 %1400
    %1402 = vrot.lane.b32.xlu0 %v1381, 96
    %v1403 = vpop.permute.xlu0 %1402
    %1404 = vrot.lane.b32.xlu0 %v1383, 96
    %v1405 = vpop.permute.xlu0 %1404
    %1406 = vrot.lane.b32.xlu0 %v1385, 96
    %v1407 = vpop.permute.xlu0 %1406
    %v1419 = vrot.slane %v1246, 1
    %v1420 = vsel %vm122, %v1275, %v1419
    %1421 = vrot.lane.b32.xlu0 %v1420, 32
    %v1422 = vpop.permute.xlu0 %1421
    %1423 = vrot.lane.b32.xlu0 %v1419, 32
    %v1424 = vpop.permute.xlu0 %1423
    %v1427 = vrot.slane %v1235, 6
    %v1428 = vrot.slane %v1236, 6
    %v1429 = vsel %vm298, %v1427, %v1428
    %v1430 = vrot.slane %v1237, 6
    %v1431 = vsel %vm298, %v1428, %v1430
    %v1432 = vrot.slane %v1238, 6
    %v1433 = vsel %vm298, %v1430, %v1432
    %v1434 = vrot.slane %v1239, 6
    %v1435 = vsel %vm298, %v1432, %v1434
    %v1436 = vrot.slane %v1240, 6
    %v1437 = vsel %vm298, %v1434, %v1436
    %v1438 = vrot.slane %v1241, 6
    %v1439 = vsel %vm298, %v1436, %v1438
    %v1440 = vrot.slane %v1242, 6
    %v1441 = vsel %vm298, %v1438, %v1440
    %v1442 = vrot.slane %v1243, 6
    %v1443 = vsel %vm298, %v1440, %v1442
    %v1444 = vrot.slane %v1244, 6
    %v1445 = vsel %vm298, %v1442, %v1444
    %v1446 = vrot.slane %v1246, 6
    %v1447 = vsel %vm298, %v1444, %v1446
    %v1448 = vsel %vm298, %v1446, %v320
    %1449 = vrot.lane.b32.xlu0 %v1429, 64
    %v1450 = vpop.permute.xlu0 %1449
    %1451 = vrot.lane.b32.xlu0 %v1431, 64
    %v1452 = vpop.permute.xlu0 %1451
    %1453 = vrot.lane.b32.xlu0 %v1433, 64
    %v1454 = vpop.permute.xlu0 %1453
    %1455 = vrot.lane.b32.xlu0 %v1435, 64
    %v1456 = vpop.permute.xlu0 %1455
    %1457 = vrot.lane.b32.xlu0 %v1437, 64
    %v1458 = vpop.permute.xlu0 %1457
    %1459 = vrot.lane.b32.xlu0 %v1439, 64
    %v1460 = vpop.permute.xlu0 %1459
    %1461 = vrot.lane.b32.xlu0 %v1441, 64
    %v1462 = vpop.permute.xlu0 %1461
    %1463 = vrot.lane.b32.xlu0 %v1443, 64
    %v1464 = vpop.permute.xlu0 %1463
    %1465 = vrot.lane.b32.xlu0 %v1445, 64
    %v1466 = vpop.permute.xlu0 %1465
    %1467 = vrot.lane.b32.xlu0 %v1447, 64
    %v1468 = vpop.permute.xlu0 %1467
    %1469 = vrot.lane.b32.xlu0 %v1448, 64
    %v1470 = vpop.permute.xlu0 %1469
    %v1482 = vsel %vm233, %v1384, %v234
    %1483 = vrot.lane.b32.xlu0 %v1482, 96
    %v1484 = vpop.permute.xlu0 %1483
    %v1486 = vsel %vm359, 0.0, %v1278
    %v1487 = vsel %vm359, %v1235, %v1280
    %v1488 = vsel %vm359, %v1236, %v1282
    %v1489 = vsel %vm359, %v1237, %v1284
    %v1490 = vsel %vm359, %v1238, %v1286
    %v1491 = vsel %vm359, %v1239, %v1288
    %v1492 = vsel %vm359, %v1240, %v1290
    %v1493 = vsel %vm359, %v1241, %v1292
    %v1494 = vsel %vm359, %v1242, %v1294
    %v1495 = vsel %vm359, %v1243, %v1296
    %v1496 = vsel %vm359, %v1244, %v1298
    %v1497 = vsel %vm371, %v1486, %v1331
    %v1498 = vsel %vm371, %v1487, %v1333
    %v1499 = vsel %vm371, %v1488, %v1335
    %v1500 = vsel %vm371, %v1489, %v1337
    %v1501 = vsel %vm371, %v1490, %v1339
    %v1502 = vsel %vm371, %v1491, %v1341
    %v1503 = vsel %vm371, %v1492, %v1343
    %v1504 = vsel %vm371, %v1493, %v1345
    %v1505 = vsel %vm371, %v1494, %v1347
    %v1506 = vsel %vm371, %v1495, %v1349
    %v1507 = vsel %vm371, %v1496, %v1351
    %v1508 = vsel %vm383, %v1497, %v1387
    %v1509 = vsel %vm383, %v1498, %v1389
    %v1510 = vsel %vm383, %v1499, %v1391
    %v1511 = vsel %vm383, %v1500, %v1393
    %v1512 = vsel %vm383, %v1501, %v1395
    %v1513 = vsel %vm383, %v1502, %v1397
    %v1514 = vsel %vm383, %v1503, %v1399
    %v1515 = vsel %vm383, %v1504, %v1401
    %v1516 = vsel %vm383, %v1505, %v1403
    %v1517 = vsel %vm383, %v1506, %v1405
    %v1518 = vsel %vm383, %v1507, %v1407
    %v1519 = vsel %vm359, %v1244, %v1422
    %v1520 = vsel %vm359, %v1246, %v1424
    %v1521 = vsel %vm371, %v1487, %v1450
    %v1522 = vsel %vm371, %v1488, %v1452
    %v1523 = vsel %vm371, %v1489, %v1454
    %v1524 = vsel %vm371, %v1490, %v1456
    %v1525 = vsel %vm371, %v1491, %v1458
    %v1526 = vsel %vm371, %v1492, %v1460
    %v1527 = vsel %vm371, %v1493, %v1462
    %v1528 = vsel %vm371, %v1494, %v1464
    %v1529 = vsel %vm371, %v1495, %v1466
    %v1530 = vsel %vm371, %v1519, %v1468
    %v1531 = vsel %vm371, %v1520, %v1470
    %v1532 = vsel %vm383, %v1521, %v1389
    %v1533 = vsel %vm383, %v1522, %v1391
    %v1534 = vsel %vm383, %v1523, %v1393
    %v1535 = vsel %vm383, %v1524, %v1395
    %v1536 = vsel %vm383, %v1525, %v1397
    %v1537 = vsel %vm383, %v1526, %v1399
    %v1538 = vsel %vm383, %v1527, %v1401
    %v1539 = vsel %vm383, %v1528, %v1403
    %v1540 = vsel %vm383, %v1529, %v1405
    %v1541 = vsel %vm383, %v1530, %v1407
    %v1542 = vsel %vm383, %v1531, %v1484
    %v1543 = vmul.f32 %v1508, %v76
    %v1544 = vmul.f32 %v1532, %v77
    %v1545 = vmul.f32 %v1236, %v78
    %v1546 = vmul.f32 %v1509, %v79
    %v1547 = vmul.f32 %v1533, %v80
    %v1548 = vmul.f32 %v1237, %v81
    %v1549 = vmul.f32 %v1510, %v82
    %v1550 = vmul.f32 %v1534, %v83
    %v1551 = vmul.f32 %v1238, %v84
    %v1552 = vmul.f32 %v1511, %v85
    %v1553 = vmul.f32 %v1535, %v86
    %v1554 = vmul.f32 %v1239, %v87
    %v1555 = vmul.f32 %v1512, %v88
    %v1556 = vmul.f32 %v1536, %v89
    %v1557 = vmul.f32 %v1240, %v90
    %v1558 = vmul.f32 %v1513, %v91
    %v1559 = vmul.f32 %v1537, %v92
    %v1560 = vmul.f32 %v1241, %v93
    %v1561 = vmul.f32 %v1514, %v94
    %v1562 = vmul.f32 %v1538, %v95
    %v1563 = vmul.f32 %v1242, %v96
    %v1564 = vmul.f32 %v1515, %v97
    %v1565 = vmul.f32 %v1539, %v98
    %v1566 = vmul.f32 %v1243, %v99
    %v1567 = vmul.f32 %v1516, %v100
    %v1568 = vmul.f32 %v1540, %v101
    %v1569 = vmul.f32 %v1244, %v102
    %v1570 = vmul.f32 %v1517, %v103
    %v1571 = vmul.f32 %v1541, %v104
    %v1572 = vmul.f32 %v1246, %v105
    %v1573 = vmul.f32 %v1518, %v106
    %v1574 = vmul.f32 %v1542, %v107
    %v1575 = vld [vmem:[%s6] sm:$0xff]
    %v1576 = vld [vmem:[%s6 + $0x8] sm:$0xff]
    %v1577 = vld [vmem:[%s6 + $0x10] sm:$0xff]
    %v1578 = vld [vmem:[%s6 + $0x18] sm:$0xff]
    %v1579 = vld [vmem:[%s6 + $0x20] sm:$0xff]
    %v1580 = vld [vmem:[%s6 + $0x28] sm:$0xff]
    %v1581 = vld [vmem:[%s6 + $0x30] sm:$0xff]
    %v1582 = vld [vmem:[%s6 + $0x38] sm:$0xff]
    %v1583 = vld [vmem:[%s6 + $0x40] sm:$0xff]
    %v1584 = vld [vmem:[%s6 + $0x48] sm:$0xff]
    %v1585 = vld [vmem:[%s6 + $0x50] sm:$0xff]
    %v1586 = vld [vmem:[%s6 + $0x58] sm:$0xff]
    %v1587 = vld [vmem:[%s6 + $0x60] sm:$0xff]
    %v1588 = vld [vmem:[%s6 + $0x68] sm:$0xff]
    %v1589 = vld [vmem:[%s6 + $0x70] sm:$0xff]
    %v1590 = vld [vmem:[%s6 + $0x78] sm:$0xff]
    %v1591 = vld [vmem:[%s6 + $0x80] sm:$0xff]
    %v1592 = vld [vmem:[%s6 + $0x88] sm:$0xff]
    %v1593 = vld [vmem:[%s6 + $0x90] sm:$0xff]
    %v1594 = vld [vmem:[%s6 + $0x98] sm:$0xff]
    %v1595 = vld [vmem:[%s6 + $0xa0] sm:$0xff]
    %v1596 = vld [vmem:[%s6 + $0xa8] sm:$0xff]
    %v1597 = vld [vmem:[%s6 + $0xb0] sm:$0xff]
    %v1598 = vld [vmem:[%s6 + $0xb8] sm:$0xff]
    %v1599 = vld [vmem:[%s6 + $0xc0] sm:$0xff]
    %v1600 = vld [vmem:[%s6 + $0xc8] sm:$0xff]
    %v1601 = vld [vmem:[%s6 + $0xd0] sm:$0xff]
    %v1602 = vld [vmem:[%s6 + $0xd8] sm:$0xff]
    %v1603 = vld [vmem:[%s6 + $0xe0] sm:$0xff]
    %v1604 = vld [vmem:[%s6 + $0xe8] sm:$0xff]
    %v1605 = vld [vmem:[%s6 + $0xf0] sm:$0xff]
    %v1606 = vld [vmem:[%s6 + $0xf8] sm:$0xff]
    %v1607 = vld [vmem:[%s6 + $0x100] sm:$0xff]
    %v1608 = vld [vmem:[%s6 + $0x108] sm:$0xff]
    %v1609 = vld [vmem:[%s6 + $0x110] sm:$0xff]
    %v1610 = vld [vmem:[%s6 + $0x118] sm:$0xff]
    %v1611 = vld [vmem:[%s7] sm:$0x1]
    %v1613 = vperm.slane %v1611, 0
    %v1616 = vsel %vm359, %v1545, 0
    %v1619 = vsel %vm359, %v1548, 0
    %v1622 = vsel %vm359, %v1551, 0
    %v1625 = vsel %vm359, %v1554, 0
    %v1628 = vsel %vm359, %v1557, 0
    %v1631 = vsel %vm359, %v1560, 0
    %v1634 = vsel %vm359, %v1563, 0
    %v1637 = vsel %vm359, %v1566, 0
    %v1640 = vsel %vm359, %v1569, 0
    %v1643 = vsel %vm359, %v1572, 0
    %1645 = vmatpush.msra.mxu0 %v1590
    %1646 = vmatpush.msra.mxu0 %v1589
    %1647 = vmatpush.msra.mxu0 %v1588
    %1648 = vmatpush.msra.mxu0 %v1587
    %1649 = vmatpush.msra.mxu0 %v1586
    %1650 = vmatpush.msra.mxu0 %v1585
    %1651 = vmatpush.msra.mxu0 %v1584
    %1652 = vmatpush.msra.mxu0 %v1583
    %1653 = vmatpush.msra.mxu0 %v1582
    %1654 = vmatpush.msra.mxu0 %v1581
    %1655 = vmatpush.msra.mxu0 %v1580
    %1656 = vmatpush.msra.mxu0 %v1579
    %1657 = vmatpush.msra.mxu0 %v1578
    %1658 = vmatpush.msra.mxu0 %v1577
    %1659 = vmatpush.msra.mxu0 %v1576
    %1660 = vmatpush.msra.mxu0 %v1575
    %1661 = vmatmul.f32.gmra.mxu0 %v1543
    %v1662 = vpop.f32.mrf.mxu0
    %v1663 = vadd.f32 %v1613, %v1662
    %1664 = vmatmul.f32.gmra.mxu0 %v1546
    %v1665 = vpop.f32.mrf.mxu0
    %v1666 = vadd.f32 %v1613, %v1665
    %1667 = vmatmul.f32.gmra.mxu0 %v1549
    %v1668 = vpop.f32.mrf.mxu0
    %v1669 = vadd.f32 %v1613, %v1668
    %1670 = vmatmul.f32.gmra.mxu0 %v1552
    %v1671 = vpop.f32.mrf.mxu0
    %v1672 = vadd.f32 %v1613, %v1671
    %1673 = vmatmul.f32.gmra.mxu0 %v1555
    %v1674 = vpop.f32.mrf.mxu0
    %v1675 = vadd.f32 %v1613, %v1674
    %1676 = vmatmul.f32.gmra.mxu0 %v1558
    %v1677 = vpop.f32.mrf.mxu0
    %v1678 = vadd.f32 %v1613, %v1677
    %1679 = vmatmul.f32.gmra.mxu0 %v1561
    %v1680 = vpop.f32.mrf.mxu0
    %v1681 = vadd.f32 %v1613, %v1680
    %1682 = vmatmul.f32.gmra.mxu0 %v1564
    %v1683 = vpop.f32.mrf.mxu0
    %v1684 = vadd.f32 %v1613, %v1683
    %1685 = vmatmul.f32.gmra.mxu0 %v1567
    %v1686 = vpop.f32.mrf.mxu0
    %v1687 = vadd.f32 %v1613, %v1686
    %1688 = vmatmul.f32.gmra.mxu0 %v1570
    %v1689 = vpop.f32.mrf.mxu0
    %v1690 = vadd.f32 %v1613, %v1689
    %1691 = vmatmul.f32.gmra.mxu0 %v1573
    %v1692 = vpop.f32.mrf.mxu0
    %v1693 = vadd.f32 %v1613, %v1692
    %1694 = vdwg.mxu0
    %1695 = vmatpush.msra.mxu0 %v1606
    %1696 = vmatpush.msra.mxu0 %v1605
    %1697 = vmatpush.msra.mxu0 %v1604
    %1698 = vmatpush.msra.mxu0 %v1603
    %1699 = vmatpush.msra.mxu0 %v1602
    %1700 = vmatpush.msra.mxu0 %v1601
    %1701 = vmatpush.msra.mxu0 %v1600
    %1702 = vmatpush.msra.mxu0 %v1599
    %1703 = vmatpush.msra.mxu0 %v1598
    %1704 = vmatpush.msra.mxu0 %v1597
    %1705 = vmatpush.msra.mxu0 %v1596
    %1706 = vmatpush.msra.mxu0 %v1595
    %1707 = vmatpush.msra.mxu0 %v1594
    %1708 = vmatpush.msra.mxu0 %v1593
    %1709 = vmatpush.msra.mxu0 %v1592
    %1710 = vmatpush.msra.mxu0 %v1591
    %1711 = vmatmul.f32.gmra.mxu0 %v1544
    %v1712 = vpop.f32.mrf.mxu0
    %v1713 = vadd.f32 %v1663, %v1712
    %1714 = vmatmul.f32.gmra.mxu0 %v1547
    %v1715 = vpop.f32.mrf.mxu0
    %v1716 = vadd.f32 %v1666, %v1715
    %1717 = vmatmul.f32.gmra.mxu0 %v1550
    %v1718 = vpop.f32.mrf.mxu0
    %v1719 = vadd.f32 %v1669, %v1718
    %1720 = vmatmul.f32.gmra.mxu0 %v1553
    %v1721 = vpop.f32.mrf.mxu0
    %v1722 = vadd.f32 %v1672, %v1721
    %1723 = vmatmul.f32.gmra.mxu0 %v1556
    %v1724 = vpop.f32.mrf.mxu0
    %v1725 = vadd.f32 %v1675, %v1724
    %1726 = vmatmul.f32.gmra.mxu0 %v1559
    %v1727 = vpop.f32.mrf.mxu0
    %v1728 = vadd.f32 %v1678, %v1727
    %1729 = vmatmul.f32.gmra.mxu0 %v1562
    %v1730 = vpop.f32.mrf.mxu0
    %v1731 = vadd.f32 %v1681, %v1730
    %1732 = vmatmul.f32.gmra.mxu0 %v1565
    %v1733 = vpop.f32.mrf.mxu0
    %v1734 = vadd.f32 %v1684, %v1733
    %1735 = vmatmul.f32.gmra.mxu0 %v1568
    %v1736 = vpop.f32.mrf.mxu0
    %v1737 = vadd.f32 %v1687, %v1736
    %1738 = vmatmul.f32.gmra.mxu0 %v1571
    %v1739 = vpop.f32.mrf.mxu0
    %v1740 = vadd.f32 %v1690, %v1739
    %1741 = vmatmul.f32.gmra.mxu0 %v1574
    %v1742 = vpop.f32.mrf.mxu0
    %v1743 = vadd.f32 %v1693, %v1742
    %1744 = vdwg.mxu0
    %1745 = vmatpush.msra.mxu0 0.0
    %1746 = vmatpush.msra.mxu0 0.0
    %1747 = vmatpush.msra.mxu0 0.0
    %1748 = vmatpush.msra.mxu0 0.0
    %1749 = vmatpush.msra.mxu0 0.0
    %1750 = vmatpush.msra.mxu0 0.0
    %1751 = vmatpush.msra.mxu0 0.0
    %1752 = vmatpush.msra.mxu0 0.0
    %1753 = vmatpush.msra.mxu0 0.0
    %1754 = vmatpush.msra.mxu0 0.0
    %1755 = vmatpush.msra.mxu0 0.0
    %1756 = vmatpush.msra.mxu0 0.0
    %1757 = vmatpush.msra.mxu0 %v1610
    %1758 = vmatpush.msra.mxu0 %v1609
    %1759 = vmatpush.msra.mxu0 %v1608
    %1760 = vmatpush.msra.mxu0 %v1607
    %1761 = vmatmul.f32.gmra.mxu0 %v1616
    %v1762 = vpop.f32.mrf.mxu0
    %v1763 = vadd.f32 %v1713, %v1762
    %1764 = vmatmul.f32.gmra.mxu0 %v1619
    %v1765 = vpop.f32.mrf.mxu0
    %v1766 = vadd.f32 %v1716, %v1765
    %1767 = vmatmul.f32.gmra.mxu0 %v1622
    %v1768 = vpop.f32.mrf.mxu0
    %v1769 = vadd.f32 %v1719, %v1768
    %1770 = vmatmul.f32.gmra.mxu0 %v1625
    %v1771 = vpop.f32.mrf.mxu0
    %v1772 = vadd.f32 %v1722, %v1771
    %1773 = vmatmul.f32.gmra.mxu0 %v1628
    %v1774 = vpop.f32.mrf.mxu0
    %v1775 = vadd.f32 %v1725, %v1774
    %1776 = vmatmul.f32.gmra.mxu0 %v1631
    %v1777 = vpop.f32.mrf.mxu0
    %v1778 = vadd.f32 %v1728, %v1777
    %1779 = vmatmul.f32.gmra.mxu0 %v1634
    %v1780 = vpop.f32.mrf.mxu0
    %v1781 = vadd.f32 %v1731, %v1780
    %1782 = vmatmul.f32.gmra.mxu0 %v1637
    %v1783 = vpop.f32.mrf.mxu0
    %v1784 = vadd.f32 %v1734, %v1783
    %1785 = vmatmul.f32.gmra.mxu0 %v1640
    %v1786 = vpop.f32.mrf.mxu0
    %v1787 = vadd.f32 %v1737, %v1786
    %1788 = vmatmul.f32.gmra.mxu0 %v1643
    %v1789 = vpop.f32.mrf.mxu0
    %v1790 = vadd.f32 %v1740, %v1789
    %1791 = vmatmul.f32.gmra.mxu0 %v523
    %v1792 = vpop.f32.mrf.mxu0
    %v1793 = vadd.f32 %v1743, %v1792
    %1794 = vdwg.mxu0
    %v1795 = vmax.f32 %v1763, 0.0
    %v1796 = vmax.f32 %v1766, 0.0
    %v1797 = vmax.f32 %v1769, 0.0
    %v1798 = vmax.f32 %v1772, 0.0
    %v1799 = vmax.f32 %v1775, 0.0
    %v1800 = vmax.f32 %v1778, 0.0
    %v1801 = vmax.f32 %v1781, 0.0
    %v1802 = vmax.f32 %v1784, 0.0
    %v1803 = vmax.f32 %v1787, 0.0
    %v1804 = vmax.f32 %v1790, 0.0
    %v1805 = vmax.f32 %v1793, 0.0
    %v1806 = vsel %vm109, %v1805, 0.0
    %v1817 = vrot.slane %v1795, 1
    %v1818 = vsel %vm122, %v123, %v1817
    %v1819 = vrot.slane %v1796, 1
    %v1820 = vsel %vm122, %v1817, %v1819
    %v1821 = vrot.slane %v1797, 1
    %v1822 = vsel %vm122, %v1819, %v1821
    %v1823 = vrot.slane %v1798, 1
    %v1824 = vsel %vm122, %v1821, %v1823
    %v1825 = vrot.slane %v1799, 1
    %v1826 = vsel %vm122, %v1823, %v1825
    %v1827 = vrot.slane %v1800, 1
    %v1828 = vsel %vm122, %v1825, %v1827
    %v1829 = vrot.slane %v1801, 1
    %v1830 = vsel %vm122, %v1827, %v1829
    %v1831 = vrot.slane %v1802, 1
    %v1832 = vsel %vm122, %v1829, %v1831
    %v1833 = vrot.slane %v1803, 1
    %v1834 = vsel %vm122, %v1831, %v1833
    %v1835 = vrot.slane %v1804, 1
    %v1836 = vsel %vm122, %v1833, %v1835
    %1837 = vrot.lane.b32.xlu0 %v1818, 32
    %v1838 = vpop.permute.xlu0 %1837
    %1839 = vrot.lane.b32.xlu0 %v1820, 32
    %v1840 = vpop.permute.xlu0 %1839
    %1841 = vrot.lane.b32.xlu0 %v1822, 32
    %v1842 = vpop.permute.xlu0 %1841
    %1843 = vrot.lane.b32.xlu0 %v1824, 32
    %v1844 = vpop.permute.xlu0 %1843
    %1845 = vrot.lane.b32.xlu0 %v1826, 32
    %v1846 = vpop.permute.xlu0 %1845
    %1847 = vrot.lane.b32.xlu0 %v1828, 32
    %v1848 = vpop.permute.xlu0 %1847
    %1849 = vrot.lane.b32.xlu0 %v1830, 32
    %v1850 = vpop.permute.xlu0 %1849
    %1851 = vrot.lane.b32.xlu0 %v1832, 32
    %v1852 = vpop.permute.xlu0 %1851
    %1853 = vrot.lane.b32.xlu0 %v1834, 32
    %v1854 = vpop.permute.xlu0 %1853
    %1855 = vrot.lane.b32.xlu0 %v1836, 32
    %v1856 = vpop.permute.xlu0 %1855
    %1857 = vrot.lane.b32.xlu0 %v1835, 32
    %v1858 = vpop.permute.xlu0 %1857
    %v1870 = vrot.slane %v1795, 2
    %v1871 = vsel %vm177, %v178, %v1870
    %v1872 = vrot.slane %v1796, 2
    %v1873 = vsel %vm177, %v1870, %v1872
    %v1874 = vrot.slane %v1797, 2
    %v1875 = vsel %vm177, %v1872, %v1874
    %v1876 = vrot.slane %v1798, 2
    %v1877 = vsel %vm177, %v1874, %v1876
    %v1878 = vrot.slane %v1799, 2
    %v1879 = vsel %vm177, %v1876, %v1878
    %v1880 = vrot.slane %v1800, 2
    %v1881 = vsel %vm177, %v1878, %v1880
    %v1882 = vrot.slane %v1801, 2
    %v1883 = vsel %vm177, %v1880, %v1882
    %v1884 = vrot.slane %v1802, 2
    %v1885 = vsel %vm177, %v1882, %v1884
    %v1886 = vrot.slane %v1803, 2
    %v1887 = vsel %vm177, %v1884, %v1886
    %v1888 = vrot.slane %v1804, 2
    %v1889 = vsel %vm177, %v1886, %v1888
    %1890 = vrot.lane.b32.xlu0 %v1871, 64
    %v1891 = vpop.permute.xlu0 %1890
    %1892 = vrot.lane.b32.xlu0 %v1873, 64
    %v1893 = vpop.permute.xlu0 %1892
    %1894 = vrot.lane.b32.xlu0 %v1875, 64
    %v1895 = vpop.permute.xlu0 %1894
    %1896 = vrot.lane.b32.xlu0 %v1877, 64
    %v1897 = vpop.permute.xlu0 %1896
    %1898 = vrot.lane.b32.xlu0 %v1879, 64
    %v1899 = vpop.permute.xlu0 %1898
    %1900 = vrot.lane.b32.xlu0 %v1881, 64
    %v1901 = vpop.permute.xlu0 %1900
    %1902 = vrot.lane.b32.xlu0 %v1883, 64
    %v1903 = vpop.permute.xlu0 %1902
    %1904 = vrot.lane.b32.xlu0 %v1885, 64
    %v1905 = vpop.permute.xlu0 %1904
    %1906 = vrot.lane.b32.xlu0 %v1887, 64
    %v1907 = vpop.permute.xlu0 %1906
    %1908 = vrot.lane.b32.xlu0 %v1889, 64
    %v1909 = vpop.permute.xlu0 %1908
    %1910 = vrot.lane.b32.xlu0 %v1888, 64
    %v1911 = vpop.permute.xlu0 %1910
    %v1924 = vrot.slane %v1795, 7
    %v1925 = vsel %vm233, %v234, %v1924
    %v1926 = vrot.slane %v1796, 7
    %v1927 = vsel %vm233, %v1924, %v1926
    %v1928 = vrot.slane %v1797, 7
    %v1929 = vsel %vm233, %v1926, %v1928
    %v1930 = vrot.slane %v1798, 7
    %v1931 = vsel %vm233, %v1928, %v1930
    %v1932 = vrot.slane %v1799, 7
    %v1933 = vsel %vm233, %v1930, %v1932
    %v1934 = vrot.slane %v1800, 7
    %v1935 = vsel %vm233, %v1932, %v1934
    %v1936 = vrot.slane %v1801, 7
    %v1937 = vsel %vm233, %v1934, %v1936
    %v1938 = vrot.slane %v1802, 7
    %v1939 = vsel %vm233, %v1936, %v1938
    %v1940 = vrot.slane %v1803, 7
    %v1941 = vsel %vm233, %v1938, %v1940
    %v1942 = vrot.slane %v1804, 7
    %v1943 = vsel %vm233, %v1940, %v1942
    %v1944 = vrot.slane %v1806, 7
    %v1945 = vsel %vm233, %v1942, %v1944
    %1946 = vrot.lane.b32.xlu0 %v1925, 96
    %v1947 = vpop.permute.xlu0 %1946
    %1948 = vrot.lane.b32.xlu0 %v1927, 96
    %v1949 = vpop.permute.xlu0 %1948
    %1950 = vrot.lane.b32.xlu0 %v1929, 96
    %v1951 = vpop.permute.xlu0 %1950
    %1952 = vrot.lane.b32.xlu0 %v1931, 96
    %v1953 = vpop.permute.xlu0 %1952
    %1954 = vrot.lane.b32.xlu0 %v1933, 96
    %v1955 = vpop.permute.xlu0 %1954
    %1956 = vrot.lane.b32.xlu0 %v1935, 96
    %v1957 = vpop.permute.xlu0 %1956
    %1958 = vrot.lane.b32.xlu0 %v1937, 96
    %v1959 = vpop.permute.xlu0 %1958
    %1960 = vrot.lane.b32.xlu0 %v1939, 96
    %v1961 = vpop.permute.xlu0 %1960
    %1962 = vrot.lane.b32.xlu0 %v1941, 96
    %v1963 = vpop.permute.xlu0 %1962
    %1964 = vrot.lane.b32.xlu0 %v1943, 96
    %v1965 = vpop.permute.xlu0 %1964
    %1966 = vrot.lane.b32.xlu0 %v1945, 96
    %v1967 = vpop.permute.xlu0 %1966
    %v1979 = vrot.slane %v1806, 1
    %v1980 = vsel %vm122, %v1835, %v1979
    %1981 = vrot.lane.b32.xlu0 %v1980, 32
    %v1982 = vpop.permute.xlu0 %1981
    %1983 = vrot.lane.b32.xlu0 %v1979, 32
    %v1984 = vpop.permute.xlu0 %1983
    %v1987 = vrot.slane %v1795, 6
    %v1988 = vrot.slane %v1796, 6
    %v1989 = vsel %vm298, %v1987, %v1988
    %v1990 = vrot.slane %v1797, 6
    %v1991 = vsel %vm298, %v1988, %v1990
    %v1992 = vrot.slane %v1798, 6
    %v1993 = vsel %vm298, %v1990, %v1992
    %v1994 = vrot.slane %v1799, 6
    %v1995 = vsel %vm298, %v1992, %v1994
    %v1996 = vrot.slane %v1800, 6
    %v1997 = vsel %vm298, %v1994, %v1996
    %v1998 = vrot.slane %v1801, 6
    %v1999 = vsel %vm298, %v1996, %v1998
    %v2000 = vrot.slane %v1802, 6
    %v2001 = vsel %vm298, %v1998, %v2000
    %v2002 = vrot.slane %v1803, 6
    %v2003 = vsel %vm298, %v2000, %v2002
    %v2004 = vrot.slane %v1804, 6
    %v2005 = vsel %vm298, %v2002, %v2004
    %v2006 = vrot.slane %v1806, 6
    %v2007 = vsel %vm298, %v2004, %v2006
    %v2008 = vsel %vm298, %v2006, %v320
    %2009 = vrot.lane.b32.xlu0 %v1989, 64
    %v2010 = vpop.permute.xlu0 %2009
    %2011 = vrot.lane.b32.xlu0 %v1991, 64
    %v2012 = vpop.permute.xlu0 %2011
    %2013 = vrot.lane.b32.xlu0 %v1993, 64
    %v2014 = vpop.permute.xlu0 %2013
    %2015 = vrot.lane.b32.xlu0 %v1995, 64
    %v2016 = vpop.permute.xlu0 %2015
    %2017 = vrot.lane.b32.xlu0 %v1997, 64
    %v2018 = vpop.permute.xlu0 %2017
    %2019 = vrot.lane.b32.xlu0 %v1999, 64
    %v2020 = vpop.permute.xlu0 %2019
    %2021 = vrot.lane.b32.xlu0 %v2001, 64
    %v2022 = vpop.permute.xlu0 %2021
    %2023 = vrot.lane.b32.xlu0 %v2003, 64
    %v2024 = vpop.permute.xlu0 %2023
    %2025 = vrot.lane.b32.xlu0 %v2005, 64
    %v2026 = vpop.permute.xlu0 %2025
    %2027 = vrot.lane.b32.xlu0 %v2007, 64
    %v2028 = vpop.permute.xlu0 %2027
    %2029 = vrot.lane.b32.xlu0 %v2008, 64
    %v2030 = vpop.permute.xlu0 %2029
    %v2042 = vsel %vm233, %v1944, %v234
    %2043 = vrot.lane.b32.xlu0 %v2042, 96
    %v2044 = vpop.permute.xlu0 %2043
    %v2046 = vsel %vm359, 0.0, %v1838
    %v2047 = vsel %vm359, %v1795, %v1840
    %v2048 = vsel %vm359, %v1796, %v1842
    %v2049 = vsel %vm359, %v1797, %v1844
    %v2050 = vsel %vm359, %v1798, %v1846
    %v2051 = vsel %vm359, %v1799, %v1848
    %v2052 = vsel %vm359, %v1800, %v1850
    %v2053 = vsel %vm359, %v1801, %v1852
    %v2054 = vsel %vm359, %v1802, %v1854
    %v2055 = vsel %vm359, %v1803, %v1856
    %v2056 = vsel %vm359, %v1804, %v1858
    %v2057 = vsel %vm371, %v2046, %v1891
    %v2058 = vsel %vm371, %v2047, %v1893
    %v2059 = vsel %vm371, %v2048, %v1895
    %v2060 = vsel %vm371, %v2049, %v1897
    %v2061 = vsel %vm371, %v2050, %v1899
    %v2062 = vsel %vm371, %v2051, %v1901
    %v2063 = vsel %vm371, %v2052, %v1903
    %v2064 = vsel %vm371, %v2053, %v1905
    %v2065 = vsel %vm371, %v2054, %v1907
    %v2066 = vsel %vm371, %v2055, %v1909
    %v2067 = vsel %vm371, %v2056, %v1911
    %v2068 = vsel %vm383, %v2057, %v1947
    %v2069 = vsel %vm383, %v2058, %v1949
    %v2070 = vsel %vm383, %v2059, %v1951
    %v2071 = vsel %vm383, %v2060, %v1953
    %v2072 = vsel %vm383, %v2061, %v1955
    %v2073 = vsel %vm383, %v2062, %v1957
    %v2074 = vsel %vm383, %v2063, %v1959
    %v2075 = vsel %vm383, %v2064, %v1961
    %v2076 = vsel %vm383, %v2065, %v1963
    %v2077 = vsel %vm383, %v2066, %v1965
    %v2078 = vsel %vm383, %v2067, %v1967
    %v2079 = vsel %vm359, %v1804, %v1982
    %v2080 = vsel %vm359, %v1806, %v1984
    %v2081 = vsel %vm371, %v2047, %v2010
    %v2082 = vsel %vm371, %v2048, %v2012
    %v2083 = vsel %vm371, %v2049, %v2014
    %v2084 = vsel %vm371, %v2050, %v2016
    %v2085 = vsel %vm371, %v2051, %v2018
    %v2086 = vsel %vm371, %v2052, %v2020
    %v2087 = vsel %vm371, %v2053, %v2022
    %v2088 = vsel %vm371, %v2054, %v2024
    %v2089 = vsel %vm371, %v2055, %v2026
    %v2090 = vsel %vm371, %v2079, %v2028
    %v2091 = vsel %vm371, %v2080, %v2030
    %v2092 = vsel %vm383, %v2081, %v1949
    %v2093 = vsel %vm383, %v2082, %v1951
    %v2094 = vsel %vm383, %v2083, %v1953
    %v2095 = vsel %vm383, %v2084, %v1955
    %v2096 = vsel %vm383, %v2085, %v1957
    %v2097 = vsel %vm383, %v2086, %v1959
    %v2098 = vsel %vm383, %v2087, %v1961
    %v2099 = vsel %vm383, %v2088, %v1963
    %v2100 = vsel %vm383, %v2089, %v1965
    %v2101 = vsel %vm383, %v2090, %v1967
    %v2102 = vsel %vm383, %v2091, %v2044
    %v2103 = vmul.f32 %v2068, %v76
    %v2104 = vmul.f32 %v2092, %v77
    %v2105 = vmul.f32 %v1796, %v78
    %v2106 = vmul.f32 %v2069, %v79
    %v2107 = vmul.f32 %v2093, %v80
    %v2108 = vmul.f32 %v1797, %v81
    %v2109 = vmul.f32 %v2070, %v82
    %v2110 = vmul.f32 %v2094, %v83
    %v2111 = vmul.f32 %v1798, %v84
    %v2112 = vmul.f32 %v2071, %v85
    %v2113 = vmul.f32 %v2095, %v86
    %v2114 = vmul.f32 %v1799, %v87
    %v2115 = vmul.f32 %v2072, %v88
    %v2116 = vmul.f32 %v2096, %v89
    %v2117 = vmul.f32 %v1800, %v90
    %v2118 = vmul.f32 %v2073, %v91
    %v2119 = vmul.f32 %v2097, %v92
    %v2120 = vmul.f32 %v1801, %v93
    %v2121 = vmul.f32 %v2074, %v94
    %v2122 = vmul.f32 %v2098, %v95
    %v2123 = vmul.f32 %v1802, %v96
    %v2124 = vmul.f32 %v2075, %v97
    %v2125 = vmul.f32 %v2099, %v98
    %v2126 = vmul.f32 %v1803, %v99
    %v2127 = vmul.f32 %v2076, %v100
    %v2128 = vmul.f32 %v2100, %v101
    %v2129 = vmul.f32 %v1804, %v102
    %v2130 = vmul.f32 %v2077, %v103
    %v2131 = vmul.f32 %v2101, %v104
    %v2132 = vmul.f32 %v1806, %v105
    %v2133 = vmul.f32 %v2078, %v106
    %v2134 = vmul.f32 %v2102, %v107
    %v2135 = vld [vmem:[%s8] sm:$0xff]
    %v2136 = vld [vmem:[%s8 + $0x8] sm:$0xff]
    %v2137 = vld [vmem:[%s8 + $0x10] sm:$0xff]
    %v2138 = vld [vmem:[%s8 + $0x18] sm:$0xff]
    %v2139 = vld [vmem:[%s8 + $0x20] sm:$0xff]
    %v2140 = vld [vmem:[%s8 + $0x28] sm:$0xff]
    %v2141 = vld [vmem:[%s8 + $0x30] sm:$0xff]
    %v2142 = vld [vmem:[%s8 + $0x38] sm:$0xff]
    %v2143 = vld [vmem:[%s8 + $0x40] sm:$0xff]
    %v2144 = vld [vmem:[%s8 + $0x48] sm:$0xff]
    %v2145 = vld [vmem:[%s8 + $0x50] sm:$0xff]
    %v2146 = vld [vmem:[%s8 + $0x58] sm:$0xff]
    %v2147 = vld [vmem:[%s8 + $0x60] sm:$0xff]
    %v2148 = vld [vmem:[%s8 + $0x68] sm:$0xff]
    %v2149 = vld [vmem:[%s8 + $0x70] sm:$0xff]
    %v2150 = vld [vmem:[%s8 + $0x78] sm:$0xff]
    %v2151 = vld [vmem:[%s8 + $0x80] sm:$0xff]
    %v2152 = vld [vmem:[%s8 + $0x88] sm:$0xff]
    %v2153 = vld [vmem:[%s8 + $0x90] sm:$0xff]
    %v2154 = vld [vmem:[%s8 + $0x98] sm:$0xff]
    %v2155 = vld [vmem:[%s8 + $0xa0] sm:$0xff]
    %v2156 = vld [vmem:[%s8 + $0xa8] sm:$0xff]
    %v2157 = vld [vmem:[%s8 + $0xb0] sm:$0xff]
    %v2158 = vld [vmem:[%s8 + $0xb8] sm:$0xff]
    %v2159 = vld [vmem:[%s8 + $0xc0] sm:$0xff]
    %v2160 = vld [vmem:[%s8 + $0xc8] sm:$0xff]
    %v2161 = vld [vmem:[%s8 + $0xd0] sm:$0xff]
    %v2162 = vld [vmem:[%s8 + $0xd8] sm:$0xff]
    %v2163 = vld [vmem:[%s8 + $0xe0] sm:$0xff]
    %v2164 = vld [vmem:[%s8 + $0xe8] sm:$0xff]
    %v2165 = vld [vmem:[%s8 + $0xf0] sm:$0xff]
    %v2166 = vld [vmem:[%s8 + $0xf8] sm:$0xff]
    %v2167 = vld [vmem:[%s8 + $0x100] sm:$0xff]
    %v2168 = vld [vmem:[%s8 + $0x108] sm:$0xff]
    %v2169 = vld [vmem:[%s8 + $0x110] sm:$0xff]
    %v2170 = vld [vmem:[%s8 + $0x118] sm:$0xff]
    %v2171 = vld [vmem:[%s9] sm:$0x1]
    %v2173 = vperm.slane %v2171, 0
    %v2176 = vsel %vm359, %v2105, 0
    %v2179 = vsel %vm359, %v2108, 0
    %v2182 = vsel %vm359, %v2111, 0
    %v2185 = vsel %vm359, %v2114, 0
    %v2188 = vsel %vm359, %v2117, 0
    %v2191 = vsel %vm359, %v2120, 0
    %v2194 = vsel %vm359, %v2123, 0
    %v2197 = vsel %vm359, %v2126, 0
    %v2200 = vsel %vm359, %v2129, 0
    %v2203 = vsel %vm359, %v2132, 0
    %2205 = vmatpush.msra.mxu0 %v2150
    %2206 = vmatpush.msra.mxu0 %v2149
    %2207 = vmatpush.msra.mxu0 %v2148
    %2208 = vmatpush.msra.mxu0 %v2147
    %2209 = vmatpush.msra.mxu0 %v2146
    %2210 = vmatpush.msra.mxu0 %v2145
    %2211 = vmatpush.msra.mxu0 %v2144
    %2212 = vmatpush.msra.mxu0 %v2143
    %2213 = vmatpush.msra.mxu0 %v2142
    %2214 = vmatpush.msra.mxu0 %v2141
    %2215 = vmatpush.msra.mxu0 %v2140
    %2216 = vmatpush.msra.mxu0 %v2139
    %2217 = vmatpush.msra.mxu0 %v2138
    %2218 = vmatpush.msra.mxu0 %v2137
    %2219 = vmatpush.msra.mxu0 %v2136
    %2220 = vmatpush.msra.mxu0 %v2135
    %2221 = vmatmul.f32.gmra.mxu0 %v2103
    %v2222 = vpop.f32.mrf.mxu0
    %v2223 = vadd.f32 %v2173, %v2222
    %2224 = vmatmul.f32.gmra.mxu0 %v2106
    %v2225 = vpop.f32.mrf.mxu0
    %v2226 = vadd.f32 %v2173, %v2225
    %2227 = vmatmul.f32.gmra.mxu0 %v2109
    %v2228 = vpop.f32.mrf.mxu0
    %v2229 = vadd.f32 %v2173, %v2228
    %2230 = vmatmul.f32.gmra.mxu0 %v2112
    %v2231 = vpop.f32.mrf.mxu0
    %v2232 = vadd.f32 %v2173, %v2231
    %2233 = vmatmul.f32.gmra.mxu0 %v2115
    %v2234 = vpop.f32.mrf.mxu0
    %v2235 = vadd.f32 %v2173, %v2234
    %2236 = vmatmul.f32.gmra.mxu0 %v2118
    %v2237 = vpop.f32.mrf.mxu0
    %v2238 = vadd.f32 %v2173, %v2237
    %2239 = vmatmul.f32.gmra.mxu0 %v2121
    %v2240 = vpop.f32.mrf.mxu0
    %v2241 = vadd.f32 %v2173, %v2240
    %2242 = vmatmul.f32.gmra.mxu0 %v2124
    %v2243 = vpop.f32.mrf.mxu0
    %v2244 = vadd.f32 %v2173, %v2243
    %2245 = vmatmul.f32.gmra.mxu0 %v2127
    %v2246 = vpop.f32.mrf.mxu0
    %v2247 = vadd.f32 %v2173, %v2246
    %2248 = vmatmul.f32.gmra.mxu0 %v2130
    %v2249 = vpop.f32.mrf.mxu0
    %v2250 = vadd.f32 %v2173, %v2249
    %2251 = vmatmul.f32.gmra.mxu0 %v2133
    %v2252 = vpop.f32.mrf.mxu0
    %v2253 = vadd.f32 %v2173, %v2252
    %2254 = vdwg.mxu0
    %2255 = vmatpush.msra.mxu0 %v2166
    %2256 = vmatpush.msra.mxu0 %v2165
    %2257 = vmatpush.msra.mxu0 %v2164
    %2258 = vmatpush.msra.mxu0 %v2163
    %2259 = vmatpush.msra.mxu0 %v2162
    %2260 = vmatpush.msra.mxu0 %v2161
    %2261 = vmatpush.msra.mxu0 %v2160
    %2262 = vmatpush.msra.mxu0 %v2159
    %2263 = vmatpush.msra.mxu0 %v2158
    %2264 = vmatpush.msra.mxu0 %v2157
    %2265 = vmatpush.msra.mxu0 %v2156
    %2266 = vmatpush.msra.mxu0 %v2155
    %2267 = vmatpush.msra.mxu0 %v2154
    %2268 = vmatpush.msra.mxu0 %v2153
    %2269 = vmatpush.msra.mxu0 %v2152
    %2270 = vmatpush.msra.mxu0 %v2151
    %2271 = vmatmul.f32.gmra.mxu0 %v2104
    %v2272 = vpop.f32.mrf.mxu0
    %v2273 = vadd.f32 %v2223, %v2272
    %2274 = vmatmul.f32.gmra.mxu0 %v2107
    %v2275 = vpop.f32.mrf.mxu0
    %v2276 = vadd.f32 %v2226, %v2275
    %2277 = vmatmul.f32.gmra.mxu0 %v2110
    %v2278 = vpop.f32.mrf.mxu0
    %v2279 = vadd.f32 %v2229, %v2278
    %2280 = vmatmul.f32.gmra.mxu0 %v2113
    %v2281 = vpop.f32.mrf.mxu0
    %v2282 = vadd.f32 %v2232, %v2281
    %2283 = vmatmul.f32.gmra.mxu0 %v2116
    %v2284 = vpop.f32.mrf.mxu0
    %v2285 = vadd.f32 %v2235, %v2284
    %2286 = vmatmul.f32.gmra.mxu0 %v2119
    %v2287 = vpop.f32.mrf.mxu0
    %v2288 = vadd.f32 %v2238, %v2287
    %2289 = vmatmul.f32.gmra.mxu0 %v2122
    %v2290 = vpop.f32.mrf.mxu0
    %v2291 = vadd.f32 %v2241, %v2290
    %2292 = vmatmul.f32.gmra.mxu0 %v2125
    %v2293 = vpop.f32.mrf.mxu0
    %v2294 = vadd.f32 %v2244, %v2293
    %2295 = vmatmul.f32.gmra.mxu0 %v2128
    %v2296 = vpop.f32.mrf.mxu0
    %v2297 = vadd.f32 %v2247, %v2296
    %2298 = vmatmul.f32.gmra.mxu0 %v2131
    %v2299 = vpop.f32.mrf.mxu0
    %v2300 = vadd.f32 %v2250, %v2299
    %2301 = vmatmul.f32.gmra.mxu0 %v2134
    %v2302 = vpop.f32.mrf.mxu0
    %v2303 = vadd.f32 %v2253, %v2302
    %2304 = vdwg.mxu0
    %2305 = vmatpush.msra.mxu0 0.0
    %2306 = vmatpush.msra.mxu0 0.0
    %2307 = vmatpush.msra.mxu0 0.0
    %2308 = vmatpush.msra.mxu0 0.0
    %2309 = vmatpush.msra.mxu0 0.0
    %2310 = vmatpush.msra.mxu0 0.0
    %2311 = vmatpush.msra.mxu0 0.0
    %2312 = vmatpush.msra.mxu0 0.0
    %2313 = vmatpush.msra.mxu0 0.0
    %2314 = vmatpush.msra.mxu0 0.0
    %2315 = vmatpush.msra.mxu0 0.0
    %2316 = vmatpush.msra.mxu0 0.0
    %2317 = vmatpush.msra.mxu0 %v2170
    %2318 = vmatpush.msra.mxu0 %v2169
    %2319 = vmatpush.msra.mxu0 %v2168
    %2320 = vmatpush.msra.mxu0 %v2167
    %2321 = vmatmul.f32.gmra.mxu0 %v2176
    %v2322 = vpop.f32.mrf.mxu0
    %v2323 = vadd.f32 %v2273, %v2322
    %2324 = vmatmul.f32.gmra.mxu0 %v2179
    %v2325 = vpop.f32.mrf.mxu0
    %v2326 = vadd.f32 %v2276, %v2325
    %2327 = vmatmul.f32.gmra.mxu0 %v2182
    %v2328 = vpop.f32.mrf.mxu0
    %v2329 = vadd.f32 %v2279, %v2328
    %2330 = vmatmul.f32.gmra.mxu0 %v2185
    %v2331 = vpop.f32.mrf.mxu0
    %v2332 = vadd.f32 %v2282, %v2331
    %2333 = vmatmul.f32.gmra.mxu0 %v2188
    %v2334 = vpop.f32.mrf.mxu0
    %v2335 = vadd.f32 %v2285, %v2334
    %2336 = vmatmul.f32.gmra.mxu0 %v2191
    %v2337 = vpop.f32.mrf.mxu0
    %v2338 = vadd.f32 %v2288, %v2337
    %2339 = vmatmul.f32.gmra.mxu0 %v2194
    %v2340 = vpop.f32.mrf.mxu0
    %v2341 = vadd.f32 %v2291, %v2340
    %2342 = vmatmul.f32.gmra.mxu0 %v2197
    %v2343 = vpop.f32.mrf.mxu0
    %v2344 = vadd.f32 %v2294, %v2343
    %2345 = vmatmul.f32.gmra.mxu0 %v2200
    %v2346 = vpop.f32.mrf.mxu0
    %v2347 = vadd.f32 %v2297, %v2346
    %2348 = vmatmul.f32.gmra.mxu0 %v2203
    %v2349 = vpop.f32.mrf.mxu0
    %v2350 = vadd.f32 %v2300, %v2349
    %2351 = vmatmul.f32.gmra.mxu0 %v523
    %v2352 = vpop.f32.mrf.mxu0
    %v2353 = vadd.f32 %v2303, %v2352
    %2354 = vdwg.mxu0
    %v2355 = vmax.f32 %v2323, 0.0
    %v2356 = vmax.f32 %v2326, 0.0
    %v2357 = vmax.f32 %v2329, 0.0
    %v2358 = vmax.f32 %v2332, 0.0
    %v2359 = vmax.f32 %v2335, 0.0
    %v2360 = vmax.f32 %v2338, 0.0
    %v2361 = vmax.f32 %v2341, 0.0
    %v2362 = vmax.f32 %v2344, 0.0
    %v2363 = vmax.f32 %v2347, 0.0
    %v2364 = vmax.f32 %v2350, 0.0
    %v2365 = vmax.f32 %v2353, 0.0
    %v2366 = vld [vmem:[%s10] sm:$0xff]
    %v2367 = vld [vmem:[%s10 + $0x8] sm:$0xff]
    %v2368 = vld [vmem:[%s10 + $0x10] sm:$0xff]
    %v2369 = vld [vmem:[%s10 + $0x18] sm:$0xff]
    %v2370 = vld [vmem:[%s10 + $0x20] sm:$0xff]
    %v2371 = vld [vmem:[%s10 + $0x28] sm:$0xff]
    %v2372 = vld [vmem:[%s10 + $0x30] sm:$0xff]
    %v2373 = vld [vmem:[%s10 + $0x38] sm:$0xff]
    %v2374 = vld [vmem:[%s10 + $0x40] sm:$0xff]
    %v2375 = vld [vmem:[%s10 + $0x48] sm:$0xff]
    %v2376 = vld [vmem:[%s10 + $0x50] sm:$0xff]
    %v2377 = vld [vmem:[%s10 + $0x58] sm:$0xff]
    %v2378 = vld [vmem:[%s10 + $0x60] sm:$0xff]
    %v2379 = vld [vmem:[%s10 + $0x68] sm:$0xff]
    %v2380 = vld [vmem:[%s10 + $0x70] sm:$0xff]
    %v2381 = vld [vmem:[%s10 + $0x78] sm:$0xff]
    %v2382 = vld [vmem:[%s10 + $0x80] sm:$0xff]
    %v2383 = vld [vmem:[%s10 + $0x88] sm:$0xff]
    %v2384 = vld [vmem:[%s10 + $0x90] sm:$0xff]
    %v2385 = vld [vmem:[%s10 + $0x98] sm:$0xff]
    %v2386 = vld [vmem:[%s10 + $0xa0] sm:$0xff]
    %v2387 = vld [vmem:[%s10 + $0xa8] sm:$0xff]
    %v2388 = vld [vmem:[%s10 + $0xb0] sm:$0xff]
    %v2389 = vld [vmem:[%s10 + $0xb8] sm:$0xff]
    %v2390 = vld [vmem:[%s10 + $0xc0] sm:$0xff]
    %v2391 = vld [vmem:[%s10 + $0xc8] sm:$0xff]
    %v2392 = vld [vmem:[%s10 + $0xd0] sm:$0xff]
    %v2393 = vld [vmem:[%s10 + $0xd8] sm:$0xff]
    %v2394 = vld [vmem:[%s10 + $0xe0] sm:$0xff]
    %v2395 = vld [vmem:[%s10 + $0xe8] sm:$0xff]
    %v2396 = vld [vmem:[%s10 + $0xf0] sm:$0xff]
    %v2397 = vld [vmem:[%s10 + $0xf8] sm:$0xff]
    %v2398 = vld [vmem:[%s11] sm:$0xff]
    %v2400 = vperm.slane %v2398, 0
    %v2401 = vperm.slane %v2398, 1
    %v2402 = vperm.slane %v2398, 2
    %v2403 = vperm.slane %v2398, 3
    %v2404 = vperm.slane %v2398, 4
    %v2405 = vperm.slane %v2398, 5
    %v2406 = vperm.slane %v2398, 6
    %v2407 = vperm.slane %v2398, 7
    %v2417 = vsel %vm359, %v2355, 0
    %v2420 = vsel %vm359, %v2356, 0
    %v2423 = vsel %vm359, %v2357, 0
    %v2426 = vsel %vm359, %v2358, 0
    %v2429 = vsel %vm359, %v2359, 0
    %v2432 = vsel %vm359, %v2360, 0
    %v2435 = vsel %vm359, %v2361, 0
    %v2438 = vsel %vm359, %v2362, 0
    %v2441 = vsel %vm359, %v2363, 0
    %v2444 = vsel %vm359, %v2364, 0
    %v2447 = vsel %vm359, %v2365, 0
    %2449 = vmatpush.msra.mxu0 0.0
    %2450 = vmatpush.msra.mxu0 0.0
    %2451 = vmatpush.msra.mxu0 0.0
    %2452 = vmatpush.msra.mxu0 0.0
    %2453 = vmatpush.msra.mxu0 0.0
    %2454 = vmatpush.msra.mxu0 0.0
    %2455 = vmatpush.msra.mxu0 0.0
    %2456 = vmatpush.msra.mxu0 0.0
    %2457 = vmatpush.msra.mxu0 0.0
    %2458 = vmatpush.msra.mxu0 0.0
    %2459 = vmatpush.msra.mxu0 0.0
    %2460 = vmatpush.msra.mxu0 0.0
    %2461 = vmatpush.msra.mxu0 %v2390
    %2462 = vmatpush.msra.mxu0 %v2382
    %2463 = vmatpush.msra.mxu0 %v2374
    %2464 = vmatpush.msra.mxu0 %v2366
    %2465 = vmatmul.f32.gmra.mxu0 %v2417
    %v2466 = vpop.f32.mrf.mxu0
    %v2467 = vadd.f32 %v2400, %v2466
    %2468 = vmatmul.f32.gmra.mxu0 %v2420
    %v2469 = vpop.f32.mrf.mxu0
    %v2470 = vadd.f32 %v2400, %v2469
    %2471 = vmatmul.f32.gmra.mxu0 %v2423
    %v2472 = vpop.f32.mrf.mxu0
    %v2473 = vadd.f32 %v2400, %v2472
    %2474 = vmatmul.f32.gmra.mxu0 %v2426
    %v2475 = vpop.f32.mrf.mxu0
    %v2476 = vadd.f32 %v2400, %v2475
    %2477 = vmatmul.f32.gmra.mxu0 %v2429
    %v2478 = vpop.f32.mrf.mxu0
    %v2479 = vadd.f32 %v2400, %v2478
    %2480 = vmatmul.f32.gmra.mxu0 %v2432
    %v2481 = vpop.f32.mrf.mxu0
    %v2482 = vadd.f32 %v2400, %v2481
    %2483 = vmatmul.f32.gmra.mxu0 %v2435
    %v2484 = vpop.f32.mrf.mxu0
    %v2485 = vadd.f32 %v2400, %v2484
    %2486 = vmatmul.f32.gmra.mxu0 %v2438
    %v2487 = vpop.f32.mrf.mxu0
    %v2488 = vadd.f32 %v2400, %v2487
    %2489 = vmatmul.f32.gmra.mxu0 %v2441
    %v2490 = vpop.f32.mrf.mxu0
    %v2491 = vadd.f32 %v2400, %v2490
    %2492 = vmatmul.f32.gmra.mxu0 %v2444
    %v2493 = vpop.f32.mrf.mxu0
    %v2494 = vadd.f32 %v2400, %v2493
    %2495 = vmatmul.f32.gmra.mxu0 %v2447
    %v2496 = vpop.f32.mrf.mxu0
    %v2497 = vadd.f32 %v2400, %v2496
    %2498 = vdwg.mxu0
    %2499 = vmatpush.msra.mxu0 0.0
    %2500 = vmatpush.msra.mxu0 0.0
    %2501 = vmatpush.msra.mxu0 0.0
    %2502 = vmatpush.msra.mxu0 0.0
    %2503 = vmatpush.msra.mxu0 0.0
    %2504 = vmatpush.msra.mxu0 0.0
    %2505 = vmatpush.msra.mxu0 0.0
    %2506 = vmatpush.msra.mxu0 0.0
    %2507 = vmatpush.msra.mxu0 0.0
    %2508 = vmatpush.msra.mxu0 0.0
    %2509 = vmatpush.msra.mxu0 0.0
    %2510 = vmatpush.msra.mxu0 0.0
    %2511 = vmatpush.msra.mxu0 %v2391
    %2512 = vmatpush.msra.mxu0 %v2383
    %2513 = vmatpush.msra.mxu0 %v2375
    %2514 = vmatpush.msra.mxu0 %v2367
    %2515 = vmatmul.f32.gmra.mxu0 %v2417
    %v2516 = vpop.f32.mrf.mxu0
    %v2517 = vadd.f32 %v2401, %v2516
    %2518 = vmatmul.f32.gmra.mxu0 %v2420
    %v2519 = vpop.f32.mrf.mxu0
    %v2520 = vadd.f32 %v2401, %v2519
    %2521 = vmatmul.f32.gmra.mxu0 %v2423
    %v2522 = vpop.f32.mrf.mxu0
    %v2523 = vadd.f32 %v2401, %v2522
    %2524 = vmatmul.f32.gmra.mxu0 %v2426
    %v2525 = vpop.f32.mrf.mxu0
    %v2526 = vadd.f32 %v2401, %v2525
    %2527 = vmatmul.f32.gmra.mxu0 %v2429
    %v2528 = vpop.f32.mrf.mxu0
    %v2529 = vadd.f32 %v2401, %v2528
    %2530 = vmatmul.f32.gmra.mxu0 %v2432
    %v2531 = vpop.f32.mrf.mxu0
    %v2532 = vadd.f32 %v2401, %v2531
    %2533 = vmatmul.f32.gmra.mxu0 %v2435
    %v2534 = vpop.f32.mrf.mxu0
    %v2535 = vadd.f32 %v2401, %v2534
    %2536 = vmatmul.f32.gmra.mxu0 %v2438
    %v2537 = vpop.f32.mrf.mxu0
    %v2538 = vadd.f32 %v2401, %v2537
    %2539 = vmatmul.f32.gmra.mxu0 %v2441
    %v2540 = vpop.f32.mrf.mxu0
    %v2541 = vadd.f32 %v2401, %v2540
    %2542 = vmatmul.f32.gmra.mxu0 %v2444
    %v2543 = vpop.f32.mrf.mxu0
    %v2544 = vadd.f32 %v2401, %v2543
    %2545 = vmatmul.f32.gmra.mxu0 %v2447
    %v2546 = vpop.f32.mrf.mxu0
    %v2547 = vadd.f32 %v2401, %v2546
    %2548 = vdwg.mxu0
    %2549 = vmatpush.msra.mxu0 0.0
    %2550 = vmatpush.msra.mxu0 0.0
    %2551 = vmatpush.msra.mxu0 0.0
    %2552 = vmatpush.msra.mxu0 0.0
    %2553 = vmatpush.msra.mxu0 0.0
    %2554 = vmatpush.msra.mxu0 0.0
    %2555 = vmatpush.msra.mxu0 0.0
    %2556 = vmatpush.msra.mxu0 0.0
    %2557 = vmatpush.msra.mxu0 0.0
    %2558 = vmatpush.msra.mxu0 0.0
    %2559 = vmatpush.msra.mxu0 0.0
    %2560 = vmatpush.msra.mxu0 0.0
    %2561 = vmatpush.msra.mxu0 %v2392
    %2562 = vmatpush.msra.mxu0 %v2384
    %2563 = vmatpush.msra.mxu0 %v2376
    %2564 = vmatpush.msra.mxu0 %v2368
    %2565 = vmatmul.f32.gmra.mxu0 %v2417
    %v2566 = vpop.f32.mrf.mxu0
    %v2567 = vadd.f32 %v2402, %v2566
    %2568 = vmatmul.f32.gmra.mxu0 %v2420
    %v2569 = vpop.f32.mrf.mxu0
    %v2570 = vadd.f32 %v2402, %v2569
    %2571 = vmatmul.f32.gmra.mxu0 %v2423
    %v2572 = vpop.f32.mrf.mxu0
    %v2573 = vadd.f32 %v2402, %v2572
    %2574 = vmatmul.f32.gmra.mxu0 %v2426
    %v2575 = vpop.f32.mrf.mxu0
    %v2576 = vadd.f32 %v2402, %v2575
    %2577 = vmatmul.f32.gmra.mxu0 %v2429
    %v2578 = vpop.f32.mrf.mxu0
    %v2579 = vadd.f32 %v2402, %v2578
    %2580 = vmatmul.f32.gmra.mxu0 %v2432
    %v2581 = vpop.f32.mrf.mxu0
    %v2582 = vadd.f32 %v2402, %v2581
    %2583 = vmatmul.f32.gmra.mxu0 %v2435
    %v2584 = vpop.f32.mrf.mxu0
    %v2585 = vadd.f32 %v2402, %v2584
    %2586 = vmatmul.f32.gmra.mxu0 %v2438
    %v2587 = vpop.f32.mrf.mxu0
    %v2588 = vadd.f32 %v2402, %v2587
    %2589 = vmatmul.f32.gmra.mxu0 %v2441
    %v2590 = vpop.f32.mrf.mxu0
    %v2591 = vadd.f32 %v2402, %v2590
    %2592 = vmatmul.f32.gmra.mxu0 %v2444
    %v2593 = vpop.f32.mrf.mxu0
    %v2594 = vadd.f32 %v2402, %v2593
    %2595 = vmatmul.f32.gmra.mxu0 %v2447
    %v2596 = vpop.f32.mrf.mxu0
    %v2597 = vadd.f32 %v2402, %v2596
    %2598 = vdwg.mxu0
    %2599 = vmatpush.msra.mxu0 0.0
    %2600 = vmatpush.msra.mxu0 0.0
    %2601 = vmatpush.msra.mxu0 0.0
    %2602 = vmatpush.msra.mxu0 0.0
    %2603 = vmatpush.msra.mxu0 0.0
    %2604 = vmatpush.msra.mxu0 0.0
    %2605 = vmatpush.msra.mxu0 0.0
    %2606 = vmatpush.msra.mxu0 0.0
    %2607 = vmatpush.msra.mxu0 0.0
    %2608 = vmatpush.msra.mxu0 0.0
    %2609 = vmatpush.msra.mxu0 0.0
    %2610 = vmatpush.msra.mxu0 0.0
    %2611 = vmatpush.msra.mxu0 %v2393
    %2612 = vmatpush.msra.mxu0 %v2385
    %2613 = vmatpush.msra.mxu0 %v2377
    %2614 = vmatpush.msra.mxu0 %v2369
    %2615 = vmatmul.f32.gmra.mxu0 %v2417
    %v2616 = vpop.f32.mrf.mxu0
    %v2617 = vadd.f32 %v2403, %v2616
    %2618 = vmatmul.f32.gmra.mxu0 %v2420
    %v2619 = vpop.f32.mrf.mxu0
    %v2620 = vadd.f32 %v2403, %v2619
    %2621 = vmatmul.f32.gmra.mxu0 %v2423
    %v2622 = vpop.f32.mrf.mxu0
    %v2623 = vadd.f32 %v2403, %v2622
    %2624 = vmatmul.f32.gmra.mxu0 %v2426
    %v2625 = vpop.f32.mrf.mxu0
    %v2626 = vadd.f32 %v2403, %v2625
    %2627 = vmatmul.f32.gmra.mxu0 %v2429
    %v2628 = vpop.f32.mrf.mxu0
    %v2629 = vadd.f32 %v2403, %v2628
    %2630 = vmatmul.f32.gmra.mxu0 %v2432
    %v2631 = vpop.f32.mrf.mxu0
    %v2632 = vadd.f32 %v2403, %v2631
    %2633 = vmatmul.f32.gmra.mxu0 %v2435
    %v2634 = vpop.f32.mrf.mxu0
    %v2635 = vadd.f32 %v2403, %v2634
    %2636 = vmatmul.f32.gmra.mxu0 %v2438
    %v2637 = vpop.f32.mrf.mxu0
    %v2638 = vadd.f32 %v2403, %v2637
    %2639 = vmatmul.f32.gmra.mxu0 %v2441
    %v2640 = vpop.f32.mrf.mxu0
    %v2641 = vadd.f32 %v2403, %v2640
    %2642 = vmatmul.f32.gmra.mxu0 %v2444
    %v2643 = vpop.f32.mrf.mxu0
    %v2644 = vadd.f32 %v2403, %v2643
    %2645 = vmatmul.f32.gmra.mxu0 %v2447
    %v2646 = vpop.f32.mrf.mxu0
    %v2647 = vadd.f32 %v2403, %v2646
    %2648 = vdwg.mxu0
    %2649 = vmatpush.msra.mxu0 0.0
    %2650 = vmatpush.msra.mxu0 0.0
    %2651 = vmatpush.msra.mxu0 0.0
    %2652 = vmatpush.msra.mxu0 0.0
    %2653 = vmatpush.msra.mxu0 0.0
    %2654 = vmatpush.msra.mxu0 0.0
    %2655 = vmatpush.msra.mxu0 0.0
    %2656 = vmatpush.msra.mxu0 0.0
    %2657 = vmatpush.msra.mxu0 0.0
    %2658 = vmatpush.msra.mxu0 0.0
    %2659 = vmatpush.msra.mxu0 0.0
    %2660 = vmatpush.msra.mxu0 0.0
    %2661 = vmatpush.msra.mxu0 %v2394
    %2662 = vmatpush.msra.mxu0 %v2386
    %2663 = vmatpush.msra.mxu0 %v2378
    %2664 = vmatpush.msra.mxu0 %v2370
    %2665 = vmatmul.f32.gmra.mxu0 %v2417
    %v2666 = vpop.f32.mrf.mxu0
    %v2667 = vadd.f32 %v2404, %v2666
    %2668 = vmatmul.f32.gmra.mxu0 %v2420
    %v2669 = vpop.f32.mrf.mxu0
    %v2670 = vadd.f32 %v2404, %v2669
    %2671 = vmatmul.f32.gmra.mxu0 %v2423
    %v2672 = vpop.f32.mrf.mxu0
    %v2673 = vadd.f32 %v2404, %v2672
    %2674 = vmatmul.f32.gmra.mxu0 %v2426
    %v2675 = vpop.f32.mrf.mxu0
    %v2676 = vadd.f32 %v2404, %v2675
    %2677 = vmatmul.f32.gmra.mxu0 %v2429
    %v2678 = vpop.f32.mrf.mxu0
    %v2679 = vadd.f32 %v2404, %v2678
    %2680 = vmatmul.f32.gmra.mxu0 %v2432
    %v2681 = vpop.f32.mrf.mxu0
    %v2682 = vadd.f32 %v2404, %v2681
    %2683 = vmatmul.f32.gmra.mxu0 %v2435
    %v2684 = vpop.f32.mrf.mxu0
    %v2685 = vadd.f32 %v2404, %v2684
    %2686 = vmatmul.f32.gmra.mxu0 %v2438
    %v2687 = vpop.f32.mrf.mxu0
    %v2688 = vadd.f32 %v2404, %v2687
    %2689 = vmatmul.f32.gmra.mxu0 %v2441
    %v2690 = vpop.f32.mrf.mxu0
    %v2691 = vadd.f32 %v2404, %v2690
    %2692 = vmatmul.f32.gmra.mxu0 %v2444
    %v2693 = vpop.f32.mrf.mxu0
    %v2694 = vadd.f32 %v2404, %v2693
    %2695 = vmatmul.f32.gmra.mxu0 %v2447
    %v2696 = vpop.f32.mrf.mxu0
    %v2697 = vadd.f32 %v2404, %v2696
    %2698 = vdwg.mxu0
    %2699 = vmatpush.msra.mxu0 0.0
    %2700 = vmatpush.msra.mxu0 0.0
    %2701 = vmatpush.msra.mxu0 0.0
    %2702 = vmatpush.msra.mxu0 0.0
    %2703 = vmatpush.msra.mxu0 0.0
    %2704 = vmatpush.msra.mxu0 0.0
    %2705 = vmatpush.msra.mxu0 0.0
    %2706 = vmatpush.msra.mxu0 0.0
    %2707 = vmatpush.msra.mxu0 0.0
    %2708 = vmatpush.msra.mxu0 0.0
    %2709 = vmatpush.msra.mxu0 0.0
    %2710 = vmatpush.msra.mxu0 0.0
    %2711 = vmatpush.msra.mxu0 %v2395
    %2712 = vmatpush.msra.mxu0 %v2387
    %2713 = vmatpush.msra.mxu0 %v2379
    %2714 = vmatpush.msra.mxu0 %v2371
    %2715 = vmatmul.f32.gmra.mxu0 %v2417
    %v2716 = vpop.f32.mrf.mxu0
    %v2717 = vadd.f32 %v2405, %v2716
    %2718 = vmatmul.f32.gmra.mxu0 %v2420
    %v2719 = vpop.f32.mrf.mxu0
    %v2720 = vadd.f32 %v2405, %v2719
    %2721 = vmatmul.f32.gmra.mxu0 %v2423
    %v2722 = vpop.f32.mrf.mxu0
    %v2723 = vadd.f32 %v2405, %v2722
    %2724 = vmatmul.f32.gmra.mxu0 %v2426
    %v2725 = vpop.f32.mrf.mxu0
    %v2726 = vadd.f32 %v2405, %v2725
    %2727 = vmatmul.f32.gmra.mxu0 %v2429
    %v2728 = vpop.f32.mrf.mxu0
    %v2729 = vadd.f32 %v2405, %v2728
    %2730 = vmatmul.f32.gmra.mxu0 %v2432
    %v2731 = vpop.f32.mrf.mxu0
    %v2732 = vadd.f32 %v2405, %v2731
    %2733 = vmatmul.f32.gmra.mxu0 %v2435
    %v2734 = vpop.f32.mrf.mxu0
    %v2735 = vadd.f32 %v2405, %v2734
    %2736 = vmatmul.f32.gmra.mxu0 %v2438
    %v2737 = vpop.f32.mrf.mxu0
    %v2738 = vadd.f32 %v2405, %v2737
    %2739 = vmatmul.f32.gmra.mxu0 %v2441
    %v2740 = vpop.f32.mrf.mxu0
    %v2741 = vadd.f32 %v2405, %v2740
    %2742 = vmatmul.f32.gmra.mxu0 %v2444
    %v2743 = vpop.f32.mrf.mxu0
    %v2744 = vadd.f32 %v2405, %v2743
    %2745 = vmatmul.f32.gmra.mxu0 %v2447
    %v2746 = vpop.f32.mrf.mxu0
    %v2747 = vadd.f32 %v2405, %v2746
    %2748 = vdwg.mxu0
    %2749 = vmatpush.msra.mxu0 0.0
    %2750 = vmatpush.msra.mxu0 0.0
    %2751 = vmatpush.msra.mxu0 0.0
    %2752 = vmatpush.msra.mxu0 0.0
    %2753 = vmatpush.msra.mxu0 0.0
    %2754 = vmatpush.msra.mxu0 0.0
    %2755 = vmatpush.msra.mxu0 0.0
    %2756 = vmatpush.msra.mxu0 0.0
    %2757 = vmatpush.msra.mxu0 0.0
    %2758 = vmatpush.msra.mxu0 0.0
    %2759 = vmatpush.msra.mxu0 0.0
    %2760 = vmatpush.msra.mxu0 0.0
    %2761 = vmatpush.msra.mxu0 %v2396
    %2762 = vmatpush.msra.mxu0 %v2388
    %2763 = vmatpush.msra.mxu0 %v2380
    %2764 = vmatpush.msra.mxu0 %v2372
    %2765 = vmatmul.f32.gmra.mxu0 %v2417
    %v2766 = vpop.f32.mrf.mxu0
    %v2767 = vadd.f32 %v2406, %v2766
    %2768 = vmatmul.f32.gmra.mxu0 %v2420
    %v2769 = vpop.f32.mrf.mxu0
    %v2770 = vadd.f32 %v2406, %v2769
    %2771 = vmatmul.f32.gmra.mxu0 %v2423
    %v2772 = vpop.f32.mrf.mxu0
    %v2773 = vadd.f32 %v2406, %v2772
    %2774 = vmatmul.f32.gmra.mxu0 %v2426
    %v2775 = vpop.f32.mrf.mxu0
    %v2776 = vadd.f32 %v2406, %v2775
    %2777 = vmatmul.f32.gmra.mxu0 %v2429
    %v2778 = vpop.f32.mrf.mxu0
    %v2779 = vadd.f32 %v2406, %v2778
    %2780 = vmatmul.f32.gmra.mxu0 %v2432
    %v2781 = vpop.f32.mrf.mxu0
    %v2782 = vadd.f32 %v2406, %v2781
    %2783 = vmatmul.f32.gmra.mxu0 %v2435
    %v2784 = vpop.f32.mrf.mxu0
    %v2785 = vadd.f32 %v2406, %v2784
    %2786 = vmatmul.f32.gmra.mxu0 %v2438
    %v2787 = vpop.f32.mrf.mxu0
    %v2788 = vadd.f32 %v2406, %v2787
    %2789 = vmatmul.f32.gmra.mxu0 %v2441
    %v2790 = vpop.f32.mrf.mxu0
    %v2791 = vadd.f32 %v2406, %v2790
    %2792 = vmatmul.f32.gmra.mxu0 %v2444
    %v2793 = vpop.f32.mrf.mxu0
    %v2794 = vadd.f32 %v2406, %v2793
    %2795 = vmatmul.f32.gmra.mxu0 %v2447
    %v2796 = vpop.f32.mrf.mxu0
    %v2797 = vadd.f32 %v2406, %v2796
    %2798 = vdwg.mxu0
    %2799 = vmatpush.msra.mxu0 0.0
    %2800 = vmatpush.msra.mxu0 0.0
    %2801 = vmatpush.msra.mxu0 0.0
    %2802 = vmatpush.msra.mxu0 0.0
    %2803 = vmatpush.msra.mxu0 0.0
    %2804 = vmatpush.msra.mxu0 0.0
    %2805 = vmatpush.msra.mxu0 0.0
    %2806 = vmatpush.msra.mxu0 0.0
    %2807 = vmatpush.msra.mxu0 0.0
    %2808 = vmatpush.msra.mxu0 0.0
    %2809 = vmatpush.msra.mxu0 0.0
    %2810 = vmatpush.msra.mxu0 0.0
    %2811 = vmatpush.msra.mxu0 %v2397
    %2812 = vmatpush.msra.mxu0 %v2389
    %2813 = vmatpush.msra.mxu0 %v2381
    %2814 = vmatpush.msra.mxu0 %v2373
    %2815 = vmatmul.f32.gmra.mxu0 %v2417
    %v2816 = vpop.f32.mrf.mxu0
    %v2817 = vadd.f32 %v2407, %v2816
    %2818 = vmatmul.f32.gmra.mxu0 %v2420
    %v2819 = vpop.f32.mrf.mxu0
    %v2820 = vadd.f32 %v2407, %v2819
    %2821 = vmatmul.f32.gmra.mxu0 %v2423
    %v2822 = vpop.f32.mrf.mxu0
    %v2823 = vadd.f32 %v2407, %v2822
    %2824 = vmatmul.f32.gmra.mxu0 %v2426
    %v2825 = vpop.f32.mrf.mxu0
    %v2826 = vadd.f32 %v2407, %v2825
    %2827 = vmatmul.f32.gmra.mxu0 %v2429
    %v2828 = vpop.f32.mrf.mxu0
    %v2829 = vadd.f32 %v2407, %v2828
    %2830 = vmatmul.f32.gmra.mxu0 %v2432
    %v2831 = vpop.f32.mrf.mxu0
    %v2832 = vadd.f32 %v2407, %v2831
    %2833 = vmatmul.f32.gmra.mxu0 %v2435
    %v2834 = vpop.f32.mrf.mxu0
    %v2835 = vadd.f32 %v2407, %v2834
    %2836 = vmatmul.f32.gmra.mxu0 %v2438
    %v2837 = vpop.f32.mrf.mxu0
    %v2838 = vadd.f32 %v2407, %v2837
    %2839 = vmatmul.f32.gmra.mxu0 %v2441
    %v2840 = vpop.f32.mrf.mxu0
    %v2841 = vadd.f32 %v2407, %v2840
    %2842 = vmatmul.f32.gmra.mxu0 %v2444
    %v2843 = vpop.f32.mrf.mxu0
    %v2844 = vadd.f32 %v2407, %v2843
    %2845 = vmatmul.f32.gmra.mxu0 %v2447
    %v2846 = vpop.f32.mrf.mxu0
    %v2847 = vadd.f32 %v2407, %v2846
    %2848 = vdwg.mxu0
    %v2849 = vmax.f32 %v2467, 0.0
    %v2850 = vmax.f32 %v2517, 0.0
    %v2851 = vmax.f32 %v2567, 0.0
    %v2852 = vmax.f32 %v2617, 0.0
    %v2853 = vmax.f32 %v2667, 0.0
    %v2854 = vmax.f32 %v2717, 0.0
    %v2855 = vmax.f32 %v2767, 0.0
    %v2856 = vmax.f32 %v2817, 0.0
    %v2857 = vmax.f32 %v2470, 0.0
    %v2858 = vmax.f32 %v2520, 0.0
    %v2859 = vmax.f32 %v2570, 0.0
    %v2860 = vmax.f32 %v2620, 0.0
    %v2861 = vmax.f32 %v2670, 0.0
    %v2862 = vmax.f32 %v2720, 0.0
    %v2863 = vmax.f32 %v2770, 0.0
    %v2864 = vmax.f32 %v2820, 0.0
    %v2865 = vmax.f32 %v2473, 0.0
    %v2866 = vmax.f32 %v2523, 0.0
    %v2867 = vmax.f32 %v2573, 0.0
    %v2868 = vmax.f32 %v2623, 0.0
    %v2869 = vmax.f32 %v2673, 0.0
    %v2870 = vmax.f32 %v2723, 0.0
    %v2871 = vmax.f32 %v2773, 0.0
    %v2872 = vmax.f32 %v2823, 0.0
    %v2873 = vmax.f32 %v2476, 0.0
    %v2874 = vmax.f32 %v2526, 0.0
    %v2875 = vmax.f32 %v2576, 0.0
    %v2876 = vmax.f32 %v2626, 0.0
    %v2877 = vmax.f32 %v2676, 0.0
    %v2878 = vmax.f32 %v2726, 0.0
    %v2879 = vmax.f32 %v2776, 0.0
    %v2880 = vmax.f32 %v2826, 0.0
    %v2881 = vmax.f32 %v2479, 0.0
    %v2882 = vmax.f32 %v2529, 0.0
    %v2883 = vmax.f32 %v2579, 0.0
    %v2884 = vmax.f32 %v2629, 0.0
    %v2885 = vmax.f32 %v2679, 0.0
    %v2886 = vmax.f32 %v2729, 0.0
    %v2887 = vmax.f32 %v2779, 0.0
    %v2888 = vmax.f32 %v2829, 0.0
    %v2889 = vmax.f32 %v2482, 0.0
    %v2890 = vmax.f32 %v2532, 0.0
    %v2891 = vmax.f32 %v2582, 0.0
    %v2892 = vmax.f32 %v2632, 0.0
    %v2893 = vmax.f32 %v2682, 0.0
    %v2894 = vmax.f32 %v2732, 0.0
    %v2895 = vmax.f32 %v2782, 0.0
    %v2896 = vmax.f32 %v2832, 0.0
    %v2897 = vmax.f32 %v2485, 0.0
    %v2898 = vmax.f32 %v2535, 0.0
    %v2899 = vmax.f32 %v2585, 0.0
    %v2900 = vmax.f32 %v2635, 0.0
    %v2901 = vmax.f32 %v2685, 0.0
    %v2902 = vmax.f32 %v2735, 0.0
    %v2903 = vmax.f32 %v2785, 0.0
    %v2904 = vmax.f32 %v2835, 0.0
    %v2905 = vmax.f32 %v2488, 0.0
    %v2906 = vmax.f32 %v2538, 0.0
    %v2907 = vmax.f32 %v2588, 0.0
    %v2908 = vmax.f32 %v2638, 0.0
    %v2909 = vmax.f32 %v2688, 0.0
    %v2910 = vmax.f32 %v2738, 0.0
    %v2911 = vmax.f32 %v2788, 0.0
    %v2912 = vmax.f32 %v2838, 0.0
    %v2913 = vmax.f32 %v2491, 0.0
    %v2914 = vmax.f32 %v2541, 0.0
    %v2915 = vmax.f32 %v2591, 0.0
    %v2916 = vmax.f32 %v2641, 0.0
    %v2917 = vmax.f32 %v2691, 0.0
    %v2918 = vmax.f32 %v2741, 0.0
    %v2919 = vmax.f32 %v2791, 0.0
    %v2920 = vmax.f32 %v2841, 0.0
    %v2921 = vmax.f32 %v2494, 0.0
    %v2922 = vmax.f32 %v2544, 0.0
    %v2923 = vmax.f32 %v2594, 0.0
    %v2924 = vmax.f32 %v2644, 0.0
    %v2925 = vmax.f32 %v2694, 0.0
    %v2926 = vmax.f32 %v2744, 0.0
    %v2927 = vmax.f32 %v2794, 0.0
    %v2928 = vmax.f32 %v2844, 0.0
    %v2929 = vmax.f32 %v2497, 0.0
    %v2930 = vmax.f32 %v2547, 0.0
    %v2931 = vmax.f32 %v2597, 0.0
    %v2932 = vmax.f32 %v2647, 0.0
    %v2933 = vmax.f32 %v2697, 0.0
    %v2934 = vmax.f32 %v2747, 0.0
    %v2935 = vmax.f32 %v2797, 0.0
    %v2936 = vmax.f32 %v2847, 0.0
    %v2937 = vld [vmem:[%s16] sm:$0xff]
    %v2938 = vld [vmem:[%s16 + $0x8] sm:$0x3f]
    %vm2939 = vcmask 687104
    %v2941 = vsel %vm2939, %v2937, 0
    %v2944 = vsel %vm2939, %v2938, 0
    %v2947 = vsel %vm109, %v2929, 0
    %v2950 = vsel %vm109, %v2930, 0
    %v2953 = vsel %vm109, %v2931, 0
    %v2956 = vsel %vm109, %v2932, 0
    %v2959 = vsel %vm109, %v2933, 0
    %v2962 = vsel %vm109, %v2934, 0
    %v2965 = vsel %vm109, %v2935, 0
    %v2968 = vsel %vm109, %v2936, 0
    %2970 = vmatpush.msra.mxu0 0.0
    %2971 = vmatpush.msra.mxu0 0.0
    %2972 = vmatpush.msra.mxu0 0.0
    %2973 = vmatpush.msra.mxu0 0.0
    %2974 = vmatpush.msra.mxu0 0.0
    %2975 = vmatpush.msra.mxu0 %v2947
    %2976 = vmatpush.msra.mxu0 %v2921
    %2977 = vmatpush.msra.mxu0 %v2913
    %2978 = vmatpush.msra.mxu0 %v2905
    %2979 = vmatpush.msra.mxu0 %v2897
    %2980 = vmatpush.msra.mxu0 %v2889
    %2981 = vmatpush.msra.mxu0 %v2881
    %2982 = vmatpush.msra.mxu0 %v2873
    %2983 = vmatpush.msra.mxu0 %v2865
    %2984 = vmatpush.msra.mxu0 %v2857
    %2985 = vmatpush.msra.mxu0 %v2849
    %2986 = vmatmul.f32.gmra.mxu0 %v2941
    %v2987 = vpop.f32.mrf.mxu0
    %v2988 = vadd.f32 0.0, %v2987
    %2989 = vmatmul.f32.gmra.mxu0 %v2944
    %v2990 = vpop.f32.mrf.mxu0
    %v2991 = vadd.f32 0.0, %v2990
    %2992 = vdwg.mxu0
    %2993 = vmatpush.msra.mxu0 0.0
    %2994 = vmatpush.msra.mxu0 0.0
    %2995 = vmatpush.msra.mxu0 0.0
    %2996 = vmatpush.msra.mxu0 0.0
    %2997 = vmatpush.msra.mxu0 0.0
    %2998 = vmatpush.msra.mxu0 %v2950
    %2999 = vmatpush.msra.mxu0 %v2922
    %3000 = vmatpush.msra.mxu0 %v2914
    %3001 = vmatpush.msra.mxu0 %v2906
    %3002 = vmatpush.msra.mxu0 %v2898
    %3003 = vmatpush.msra.mxu0 %v2890
    %3004 = vmatpush.msra.mxu0 %v2882
    %3005 = vmatpush.msra.mxu0 %v2874
    %3006 = vmatpush.msra.mxu0 %v2866
    %3007 = vmatpush.msra.mxu0 %v2858
    %3008 = vmatpush.msra.mxu0 %v2850
    %3009 = vmatmul.f32.gmra.mxu0 %v2941
    %v3010 = vpop.f32.mrf.mxu0
    %v3011 = vadd.f32 0.0, %v3010
    %3012 = vmatmul.f32.gmra.mxu0 %v2944
    %v3013 = vpop.f32.mrf.mxu0
    %v3014 = vadd.f32 0.0, %v3013
    %3015 = vdwg.mxu0
    %3016 = vmatpush.msra.mxu0 0.0
    %3017 = vmatpush.msra.mxu0 0.0
    %3018 = vmatpush.msra.mxu0 0.0
    %3019 = vmatpush.msra.mxu0 0.0
    %3020 = vmatpush.msra.mxu0 0.0
    %3021 = vmatpush.msra.mxu0 %v2953
    %3022 = vmatpush.msra.mxu0 %v2923
    %3023 = vmatpush.msra.mxu0 %v2915
    %3024 = vmatpush.msra.mxu0 %v2907
    %3025 = vmatpush.msra.mxu0 %v2899
    %3026 = vmatpush.msra.mxu0 %v2891
    %3027 = vmatpush.msra.mxu0 %v2883
    %3028 = vmatpush.msra.mxu0 %v2875
    %3029 = vmatpush.msra.mxu0 %v2867
    %3030 = vmatpush.msra.mxu0 %v2859
    %3031 = vmatpush.msra.mxu0 %v2851
    %3032 = vmatmul.f32.gmra.mxu0 %v2941
    %v3033 = vpop.f32.mrf.mxu0
    %v3034 = vadd.f32 0.0, %v3033
    %3035 = vmatmul.f32.gmra.mxu0 %v2944
    %v3036 = vpop.f32.mrf.mxu0
    %v3037 = vadd.f32 0.0, %v3036
    %3038 = vdwg.mxu0
    %3039 = vmatpush.msra.mxu0 0.0
    %3040 = vmatpush.msra.mxu0 0.0
    %3041 = vmatpush.msra.mxu0 0.0
    %3042 = vmatpush.msra.mxu0 0.0
    %3043 = vmatpush.msra.mxu0 0.0
    %3044 = vmatpush.msra.mxu0 %v2956
    %3045 = vmatpush.msra.mxu0 %v2924
    %3046 = vmatpush.msra.mxu0 %v2916
    %3047 = vmatpush.msra.mxu0 %v2908
    %3048 = vmatpush.msra.mxu0 %v2900
    %3049 = vmatpush.msra.mxu0 %v2892
    %3050 = vmatpush.msra.mxu0 %v2884
    %3051 = vmatpush.msra.mxu0 %v2876
    %3052 = vmatpush.msra.mxu0 %v2868
    %3053 = vmatpush.msra.mxu0 %v2860
    %3054 = vmatpush.msra.mxu0 %v2852
    %3055 = vmatmul.f32.gmra.mxu0 %v2941
    %v3056 = vpop.f32.mrf.mxu0
    %v3057 = vadd.f32 0.0, %v3056
    %3058 = vmatmul.f32.gmra.mxu0 %v2944
    %v3059 = vpop.f32.mrf.mxu0
    %v3060 = vadd.f32 0.0, %v3059
    %3061 = vdwg.mxu0
    %3062 = vmatpush.msra.mxu0 0.0
    %3063 = vmatpush.msra.mxu0 0.0
    %3064 = vmatpush.msra.mxu0 0.0
    %3065 = vmatpush.msra.mxu0 0.0
    %3066 = vmatpush.msra.mxu0 0.0
    %3067 = vmatpush.msra.mxu0 %v2959
    %3068 = vmatpush.msra.mxu0 %v2925
    %3069 = vmatpush.msra.mxu0 %v2917
    %3070 = vmatpush.msra.mxu0 %v2909
    %3071 = vmatpush.msra.mxu0 %v2901
    %3072 = vmatpush.msra.mxu0 %v2893
    %3073 = vmatpush.msra.mxu0 %v2885
    %3074 = vmatpush.msra.mxu0 %v2877
    %3075 = vmatpush.msra.mxu0 %v2869
    %3076 = vmatpush.msra.mxu0 %v2861
    %3077 = vmatpush.msra.mxu0 %v2853
    %3078 = vmatmul.f32.gmra.mxu0 %v2941
    %v3079 = vpop.f32.mrf.mxu0
    %v3080 = vadd.f32 0.0, %v3079
    %3081 = vmatmul.f32.gmra.mxu0 %v2944
    %v3082 = vpop.f32.mrf.mxu0
    %v3083 = vadd.f32 0.0, %v3082
    %3084 = vdwg.mxu0
    %3085 = vmatpush.msra.mxu0 0.0
    %3086 = vmatpush.msra.mxu0 0.0
    %3087 = vmatpush.msra.mxu0 0.0
    %3088 = vmatpush.msra.mxu0 0.0
    %3089 = vmatpush.msra.mxu0 0.0
    %3090 = vmatpush.msra.mxu0 %v2962
    %3091 = vmatpush.msra.mxu0 %v2926
    %3092 = vmatpush.msra.mxu0 %v2918
    %3093 = vmatpush.msra.mxu0 %v2910
    %3094 = vmatpush.msra.mxu0 %v2902
    %3095 = vmatpush.msra.mxu0 %v2894
    %3096 = vmatpush.msra.mxu0 %v2886
    %3097 = vmatpush.msra.mxu0 %v2878
    %3098 = vmatpush.msra.mxu0 %v2870
    %3099 = vmatpush.msra.mxu0 %v2862
    %3100 = vmatpush.msra.mxu0 %v2854
    %3101 = vmatmul.f32.gmra.mxu0 %v2941
    %v3102 = vpop.f32.mrf.mxu0
    %v3103 = vadd.f32 0.0, %v3102
    %3104 = vmatmul.f32.gmra.mxu0 %v2944
    %v3105 = vpop.f32.mrf.mxu0
    %v3106 = vadd.f32 0.0, %v3105
    %3107 = vdwg.mxu0
    %3108 = vmatpush.msra.mxu0 0.0
    %3109 = vmatpush.msra.mxu0 0.0
    %3110 = vmatpush.msra.mxu0 0.0
    %3111 = vmatpush.msra.mxu0 0.0
    %3112 = vmatpush.msra.mxu0 0.0
    %3113 = vmatpush.msra.mxu0 %v2965
    %3114 = vmatpush.msra.mxu0 %v2927
    %3115 = vmatpush.msra.mxu0 %v2919
    %3116 = vmatpush.msra.mxu0 %v2911
    %3117 = vmatpush.msra.mxu0 %v2903
    %3118 = vmatpush.msra.mxu0 %v2895
    %3119 = vmatpush.msra.mxu0 %v2887
    %3120 = vmatpush.msra.mxu0 %v2879
    %3121 = vmatpush.msra.mxu0 %v2871
    %3122 = vmatpush.msra.mxu0 %v2863
    %3123 = vmatpush.msra.mxu0 %v2855
    %3124 = vmatmul.f32.gmra.mxu0 %v2941
    %v3125 = vpop.f32.mrf.mxu0
    %v3126 = vadd.f32 0.0, %v3125
    %3127 = vmatmul.f32.gmra.mxu0 %v2944
    %v3128 = vpop.f32.mrf.mxu0
    %v3129 = vadd.f32 0.0, %v3128
    %3130 = vdwg.mxu0
    %3131 = vmatpush.msra.mxu0 0.0
    %3132 = vmatpush.msra.mxu0 0.0
    %3133 = vmatpush.msra.mxu0 0.0
    %3134 = vmatpush.msra.mxu0 0.0
    %3135 = vmatpush.msra.mxu0 0.0
    %3136 = vmatpush.msra.mxu0 %v2968
    %3137 = vmatpush.msra.mxu0 %v2928
    %3138 = vmatpush.msra.mxu0 %v2920
    %3139 = vmatpush.msra.mxu0 %v2912
    %3140 = vmatpush.msra.mxu0 %v2904
    %3141 = vmatpush.msra.mxu0 %v2896
    %3142 = vmatpush.msra.mxu0 %v2888
    %3143 = vmatpush.msra.mxu0 %v2880
    %3144 = vmatpush.msra.mxu0 %v2872
    %3145 = vmatpush.msra.mxu0 %v2864
    %3146 = vmatpush.msra.mxu0 %v2856
    %3147 = vmatmul.f32.gmra.mxu0 %v2941
    %v3148 = vpop.f32.mrf.mxu0
    %v3149 = vadd.f32 0.0, %v3148
    %3150 = vmatmul.f32.gmra.mxu0 %v2944
    %v3151 = vpop.f32.mrf.mxu0
    %v3152 = vadd.f32 0.0, %v3151
    %3153 = vdwg.mxu0
    %v3154 = vld [vmem:[%s12] sm:$0xff]
    %v3155 = vld [vmem:[%s12 + $0x8] sm:$0xff]
    %v3156 = vld [vmem:[%s12 + $0x10] sm:$0xff]
    %v3157 = vld [vmem:[%s12 + $0x18] sm:$0xff]
    %v3158 = vld [vmem:[%s12 + $0x20] sm:$0xff]
    %v3159 = vld [vmem:[%s12 + $0x28] sm:$0xff]
    %v3160 = vld [vmem:[%s12 + $0x30] sm:$0xff]
    %v3161 = vld [vmem:[%s12 + $0x38] sm:$0xff]
    %v3162 = vld [vmem:[%s12 + $0x40] sm:$0xff]
    %v3163 = vld [vmem:[%s12 + $0x48] sm:$0xff]
    %v3164 = vld [vmem:[%s12 + $0x50] sm:$0xff]
    %v3165 = vld [vmem:[%s12 + $0x58] sm:$0xff]
    %v3166 = vld [vmem:[%s12 + $0x60] sm:$0xff]
    %v3167 = vld [vmem:[%s12 + $0x68] sm:$0xff]
    %v3168 = vld [vmem:[%s12 + $0x70] sm:$0xff]
    %v3169 = vld [vmem:[%s12 + $0x78] sm:$0xff]
    %v3170 = vld [vmem:[%s12 + $0x80] sm:$0xff]
    %v3171 = vld [vmem:[%s12 + $0x88] sm:$0xff]
    %v3172 = vld [vmem:[%s12 + $0x90] sm:$0xff]
    %v3173 = vld [vmem:[%s12 + $0x98] sm:$0xff]
    %v3174 = vld [vmem:[%s12 + $0xa0] sm:$0xff]
    %v3175 = vld [vmem:[%s12 + $0xa8] sm:$0xff]
    %v3176 = vld [vmem:[%s12 + $0xb0] sm:$0xff]
    %v3177 = vld [vmem:[%s12 + $0xb8] sm:$0xff]
    %v3178 = vld [vmem:[%s12 + $0xc0] sm:$0xff]
    %v3179 = vld [vmem:[%s12 + $0xc8] sm:$0xff]
    %v3180 = vld [vmem:[%s12 + $0xd0] sm:$0xff]
    %v3181 = vld [vmem:[%s12 + $0xd8] sm:$0xff]
    %v3182 = vld [vmem:[%s12 + $0xe0] sm:$0xff]
    %v3183 = vld [vmem:[%s12 + $0xe8] sm:$0xff]
    %v3184 = vld [vmem:[%s12 + $0xf0] sm:$0xff]
    %v3185 = vld [vmem:[%s12 + $0xf8] sm:$0xff]
    %v3186 = vld [vmem:[%s12 + $0x100] sm:$0xff]
    %v3187 = vld [vmem:[%s12 + $0x108] sm:$0xff]
    %v3188 = vld [vmem:[%s12 + $0x110] sm:$0xff]
    %v3189 = vld [vmem:[%s12 + $0x118] sm:$0xff]
    %v3190 = vld [vmem:[%s12 + $0x120] sm:$0xff]
    %v3191 = vld [vmem:[%s12 + $0x128] sm:$0xff]
    %v3192 = vld [vmem:[%s12 + $0x130] sm:$0xff]
    %v3193 = vld [vmem:[%s12 + $0x138] sm:$0xff]
    %v3194 = vld [vmem:[%s12 + $0x140] sm:$0xff]
    %v3195 = vld [vmem:[%s12 + $0x148] sm:$0xff]
    %v3196 = vld [vmem:[%s12 + $0x150] sm:$0xff]
    %v3197 = vld [vmem:[%s12 + $0x158] sm:$0xff]
    %v3198 = vld [vmem:[%s12 + $0x160] sm:$0xff]
    %v3199 = vld [vmem:[%s12 + $0x168] sm:$0xff]
    %v3200 = vld [vmem:[%s12 + $0x170] sm:$0xff]
    %v3201 = vld [vmem:[%s12 + $0x178] sm:$0xff]
    %v3202 = vld [vmem:[%s12 + $0x180] sm:$0xff]
    %v3203 = vld [vmem:[%s12 + $0x188] sm:$0xff]
    %v3204 = vld [vmem:[%s12 + $0x190] sm:$0xff]
    %v3205 = vld [vmem:[%s12 + $0x198] sm:$0xff]
    %v3206 = vld [vmem:[%s12 + $0x1a0] sm:$0xff]
    %v3207 = vld [vmem:[%s12 + $0x1a8] sm:$0xff]
    %v3208 = vld [vmem:[%s12 + $0x1b0] sm:$0xff]
    %v3209 = vld [vmem:[%s12 + $0x1b8] sm:$0xff]
    %v3210 = vld [vmem:[%s12 + $0x1c0] sm:$0xff]
    %v3211 = vld [vmem:[%s12 + $0x1c8] sm:$0xff]
    %v3212 = vld [vmem:[%s12 + $0x1d0] sm:$0xff]
    %v3213 = vld [vmem:[%s12 + $0x1d8] sm:$0xff]
    %v3214 = vld [vmem:[%s12 + $0x1e0] sm:$0xff]
    %v3215 = vld [vmem:[%s12 + $0x1e8] sm:$0xff]
    %v3216 = vld [vmem:[%s12 + $0x1f0] sm:$0xff]
    %v3217 = vld [vmem:[%s12 + $0x1f8] sm:$0xff]
    %v3218 = vld [vmem:[%s12 + $0x200] sm:$0xff]
    %v3219 = vld [vmem:[%s12 + $0x208] sm:$0xff]
    %v3220 = vld [vmem:[%s12 + $0x210] sm:$0xff]
    %v3221 = vld [vmem:[%s12 + $0x218] sm:$0xff]
    %v3222 = vld [vmem:[%s12 + $0x220] sm:$0xff]
    %v3223 = vld [vmem:[%s12 + $0x228] sm:$0xff]
    %v3224 = vld [vmem:[%s12 + $0x230] sm:$0xff]
    %v3225 = vld [vmem:[%s12 + $0x238] sm:$0xff]
    %v3226 = vld [vmem:[%s12 + $0x240] sm:$0xff]
    %v3227 = vld [vmem:[%s12 + $0x248] sm:$0xff]
    %v3228 = vld [vmem:[%s12 + $0x250] sm:$0xff]
    %v3229 = vld [vmem:[%s12 + $0x258] sm:$0xff]
    %v3230 = vld [vmem:[%s12 + $0x260] sm:$0xff]
    %v3231 = vld [vmem:[%s12 + $0x268] sm:$0xff]
    %v3232 = vld [vmem:[%s12 + $0x270] sm:$0xff]
    %v3233 = vld [vmem:[%s12 + $0x278] sm:$0xff]
    %v3234 = vld [vmem:[%s12 + $0x280] sm:$0xff]
    %v3235 = vld [vmem:[%s12 + $0x288] sm:$0xff]
    %v3236 = vld [vmem:[%s12 + $0x290] sm:$0xff]
    %v3237 = vld [vmem:[%s12 + $0x298] sm:$0xff]
    %v3238 = vld [vmem:[%s12 + $0x2a0] sm:$0xff]
    %v3239 = vld [vmem:[%s12 + $0x2a8] sm:$0xff]
    %v3240 = vld [vmem:[%s12 + $0x2b0] sm:$0xff]
    %v3241 = vld [vmem:[%s12 + $0x2b8] sm:$0xff]
    %v3242 = vld [vmem:[%s12 + $0x2c0] sm:$0xff]
    %v3243 = vld [vmem:[%s12 + $0x2c8] sm:$0xff]
    %v3244 = vld [vmem:[%s12 + $0x2d0] sm:$0xff]
    %v3245 = vld [vmem:[%s12 + $0x2d8] sm:$0xff]
    %v3246 = vld [vmem:[%s12 + $0x2e0] sm:$0xff]
    %v3247 = vld [vmem:[%s12 + $0x2e8] sm:$0xff]
    %v3248 = vld [vmem:[%s12 + $0x2f0] sm:$0xff]
    %v3249 = vld [vmem:[%s12 + $0x2f8] sm:$0xff]
    %v3250 = vld [vmem:[%s12 + $0x300] sm:$0xff]
    %v3251 = vld [vmem:[%s12 + $0x308] sm:$0xff]
    %v3252 = vld [vmem:[%s12 + $0x310] sm:$0xff]
    %v3253 = vld [vmem:[%s12 + $0x318] sm:$0xff]
    %v3254 = vld [vmem:[%s12 + $0x320] sm:$0xff]
    %v3255 = vld [vmem:[%s12 + $0x328] sm:$0xff]
    %v3256 = vld [vmem:[%s12 + $0x330] sm:$0xff]
    %v3257 = vld [vmem:[%s12 + $0x338] sm:$0xff]
    %v3258 = vld [vmem:[%s12 + $0x340] sm:$0xff]
    %v3259 = vld [vmem:[%s12 + $0x348] sm:$0xff]
    %v3260 = vld [vmem:[%s12 + $0x350] sm:$0xff]
    %v3261 = vld [vmem:[%s12 + $0x358] sm:$0xff]
    %v3262 = vld [vmem:[%s12 + $0x360] sm:$0xff]
    %v3263 = vld [vmem:[%s12 + $0x368] sm:$0xff]
    %v3264 = vld [vmem:[%s12 + $0x370] sm:$0xff]
    %v3265 = vld [vmem:[%s12 + $0x378] sm:$0xff]
    %v3266 = vld [vmem:[%s12 + $0x380] sm:$0xff]
    %v3267 = vld [vmem:[%s12 + $0x388] sm:$0xff]
    %v3268 = vld [vmem:[%s12 + $0x390] sm:$0xff]
    %v3269 = vld [vmem:[%s12 + $0x398] sm:$0xff]
    %v3270 = vld [vmem:[%s12 + $0x3a0] sm:$0xff]
    %v3271 = vld [vmem:[%s12 + $0x3a8] sm:$0xff]
    %v3272 = vld [vmem:[%s12 + $0x3b0] sm:$0xff]
    %v3273 = vld [vmem:[%s12 + $0x3b8] sm:$0xff]
    %v3274 = vld [vmem:[%s12 + $0x3c0] sm:$0xff]
    %v3275 = vld [vmem:[%s12 + $0x3c8] sm:$0xff]
    %v3276 = vld [vmem:[%s12 + $0x3d0] sm:$0xff]
    %v3277 = vld [vmem:[%s12 + $0x3d8] sm:$0xff]
    %v3278 = vld [vmem:[%s12 + $0x3e0] sm:$0xff]
    %v3279 = vld [vmem:[%s12 + $0x3e8] sm:$0xff]
    %v3280 = vld [vmem:[%s12 + $0x3f0] sm:$0xff]
    %v3281 = vld [vmem:[%s12 + $0x3f8] sm:$0xff]
    %v3282 = vld [vmem:[%s12 + $0x400] sm:$0xff]
    %v3283 = vld [vmem:[%s12 + $0x408] sm:$0xff]
    %v3284 = vld [vmem:[%s12 + $0x410] sm:$0xff]
    %v3285 = vld [vmem:[%s12 + $0x418] sm:$0xff]
    %v3286 = vld [vmem:[%s12 + $0x420] sm:$0xff]
    %v3287 = vld [vmem:[%s12 + $0x428] sm:$0xff]
    %v3288 = vld [vmem:[%s12 + $0x430] sm:$0xff]
    %v3289 = vld [vmem:[%s12 + $0x438] sm:$0xff]
    %v3290 = vld [vmem:[%s12 + $0x440] sm:$0xff]
    %v3291 = vld [vmem:[%s12 + $0x448] sm:$0xff]
    %v3292 = vld [vmem:[%s12 + $0x450] sm:$0xff]
    %v3293 = vld [vmem:[%s12 + $0x458] sm:$0xff]
    %v3294 = vld [vmem:[%s12 + $0x460] sm:$0xff]
    %v3295 = vld [vmem:[%s12 + $0x468] sm:$0xff]
    %v3296 = vld [vmem:[%s12 + $0x470] sm:$0xff]
    %v3297 = vld [vmem:[%s12 + $0x478] sm:$0xff]
    %v3298 = vld [vmem:[%s12 + $0x480] sm:$0xff]
    %v3299 = vld [vmem:[%s12 + $0x488] sm:$0xff]
    %v3300 = vld [vmem:[%s12 + $0x490] sm:$0xff]
    %v3301 = vld [vmem:[%s12 + $0x498] sm:$0xff]
    %v3302 = vld [vmem:[%s12 + $0x4a0] sm:$0xff]
    %v3303 = vld [vmem:[%s12 + $0x4a8] sm:$0xff]
    %v3304 = vld [vmem:[%s12 + $0x4b0] sm:$0xff]
    %v3305 = vld [vmem:[%s12 + $0x4b8] sm:$0xff]
    %v3306 = vld [vmem:[%s12 + $0x4c0] sm:$0xff]
    %v3307 = vld [vmem:[%s12 + $0x4c8] sm:$0xff]
    %v3308 = vld [vmem:[%s12 + $0x4d0] sm:$0xff]
    %v3309 = vld [vmem:[%s12 + $0x4d8] sm:$0xff]
    %v3310 = vld [vmem:[%s12 + $0x4e0] sm:$0xff]
    %v3311 = vld [vmem:[%s12 + $0x4e8] sm:$0xff]
    %v3312 = vld [vmem:[%s12 + $0x4f0] sm:$0xff]
    %v3313 = vld [vmem:[%s12 + $0x4f8] sm:$0xff]
    %v3314 = vld [vmem:[%s12 + $0x500] sm:$0xff]
    %v3315 = vld [vmem:[%s12 + $0x508] sm:$0xff]
    %v3316 = vld [vmem:[%s12 + $0x510] sm:$0xff]
    %v3317 = vld [vmem:[%s12 + $0x518] sm:$0xff]
    %v3318 = vld [vmem:[%s12 + $0x520] sm:$0xff]
    %v3319 = vld [vmem:[%s12 + $0x528] sm:$0xff]
    %v3320 = vld [vmem:[%s12 + $0x530] sm:$0xff]
    %v3321 = vld [vmem:[%s12 + $0x538] sm:$0xff]
    %v3322 = vld [vmem:[%s12 + $0x540] sm:$0xff]
    %v3323 = vld [vmem:[%s12 + $0x548] sm:$0xff]
    %v3324 = vld [vmem:[%s12 + $0x550] sm:$0xff]
    %v3325 = vld [vmem:[%s12 + $0x558] sm:$0xff]
    %v3326 = vld [vmem:[%s12 + $0x560] sm:$0xff]
    %v3327 = vld [vmem:[%s12 + $0x568] sm:$0xff]
    %v3328 = vld [vmem:[%s12 + $0x570] sm:$0xff]
    %v3329 = vld [vmem:[%s12 + $0x578] sm:$0xff]
    %v3330 = vld [vmem:[%s12 + $0x580] sm:$0xff]
    %v3331 = vld [vmem:[%s12 + $0x588] sm:$0xff]
    %v3332 = vld [vmem:[%s12 + $0x590] sm:$0xff]
    %v3333 = vld [vmem:[%s12 + $0x598] sm:$0xff]
    %v3334 = vld [vmem:[%s12 + $0x5a0] sm:$0xff]
    %v3335 = vld [vmem:[%s12 + $0x5a8] sm:$0xff]
    %v3336 = vld [vmem:[%s12 + $0x5b0] sm:$0xff]
    %v3337 = vld [vmem:[%s12 + $0x5b8] sm:$0xff]
    %v3338 = vld [vmem:[%s12 + $0x5c0] sm:$0xff]
    %v3339 = vld [vmem:[%s12 + $0x5c8] sm:$0xff]
    %v3340 = vld [vmem:[%s12 + $0x5d0] sm:$0xff]
    %v3341 = vld [vmem:[%s12 + $0x5d8] sm:$0xff]
    %v3342 = vld [vmem:[%s12 + $0x5e0] sm:$0xff]
    %v3343 = vld [vmem:[%s12 + $0x5e8] sm:$0xff]
    %v3344 = vld [vmem:[%s12 + $0x5f0] sm:$0xff]
    %v3345 = vld [vmem:[%s12 + $0x5f8] sm:$0xff]
    %v3346 = vld [vmem:[%s12 + $0x600] sm:$0xff]
    %v3347 = vld [vmem:[%s12 + $0x608] sm:$0xff]
    %v3348 = vld [vmem:[%s12 + $0x610] sm:$0xff]
    %v3349 = vld [vmem:[%s12 + $0x618] sm:$0xff]
    %v3350 = vld [vmem:[%s12 + $0x620] sm:$0xff]
    %v3351 = vld [vmem:[%s12 + $0x628] sm:$0xff]
    %v3352 = vld [vmem:[%s12 + $0x630] sm:$0xff]
    %v3353 = vld [vmem:[%s12 + $0x638] sm:$0xff]
    %v3354 = vld [vmem:[%s12 + $0x640] sm:$0xff]
    %v3355 = vld [vmem:[%s12 + $0x648] sm:$0xff]
    %v3356 = vld [vmem:[%s12 + $0x650] sm:$0xff]
    %v3357 = vld [vmem:[%s12 + $0x658] sm:$0xff]
    %v3358 = vld [vmem:[%s12 + $0x660] sm:$0xff]
    %v3359 = vld [vmem:[%s12 + $0x668] sm:$0xff]
    %v3360 = vld [vmem:[%s12 + $0x670] sm:$0xff]
    %v3361 = vld [vmem:[%s12 + $0x678] sm:$0xff]
    %v3362 = vld [vmem:[%s12 + $0x680] sm:$0xff]
    %v3363 = vld [vmem:[%s12 + $0x688] sm:$0xff]
    %v3364 = vld [vmem:[%s12 + $0x690] sm:$0xff]
    %v3365 = vld [vmem:[%s12 + $0x698] sm:$0xff]
    %v3366 = vld [vmem:[%s12 + $0x6a0] sm:$0xff]
    %v3367 = vld [vmem:[%s12 + $0x6a8] sm:$0xff]
    %v3368 = vld [vmem:[%s12 + $0x6b0] sm:$0xff]
    %v3369 = vld [vmem:[%s12 + $0x6b8] sm:$0xff]
    %v3370 = vld [vmem:[%s12 + $0x6c0] sm:$0xff]
    %v3371 = vld [vmem:[%s12 + $0x6c8] sm:$0xff]
    %v3372 = vld [vmem:[%s12 + $0x6d0] sm:$0xff]
    %v3373 = vld [vmem:[%s12 + $0x6d8] sm:$0xff]
    %v3374 = vld [vmem:[%s12 + $0x6e0] sm:$0xff]
    %v3375 = vld [vmem:[%s12 + $0x6e8] sm:$0xff]
    %v3376 = vld [vmem:[%s12 + $0x6f0] sm:$0xff]
    %v3377 = vld [vmem:[%s12 + $0x6f8] sm:$0xff]
    %v3378 = vld [vmem:[%s12 + $0x700] sm:$0xff]
    %v3379 = vld [vmem:[%s12 + $0x708] sm:$0xff]
    %v3380 = vld [vmem:[%s12 + $0x710] sm:$0xff]
    %v3381 = vld [vmem:[%s12 + $0x718] sm:$0xff]
    %v3382 = vld [vmem:[%s12 + $0x720] sm:$0xff]
    %v3383 = vld [vmem:[%s12 + $0x728] sm:$0xff]
    %v3384 = vld [vmem:[%s12 + $0x730] sm:$0xff]
    %v3385 = vld [vmem:[%s12 + $0x738] sm:$0xff]
    %v3386 = vld [vmem:[%s12 + $0x740] sm:$0xff]
    %v3387 = vld [vmem:[%s12 + $0x748] sm:$0xff]
    %v3388 = vld [vmem:[%s12 + $0x750] sm:$0xff]
    %v3389 = vld [vmem:[%s12 + $0x758] sm:$0xff]
    %v3390 = vld [vmem:[%s12 + $0x760] sm:$0xff]
    %v3391 = vld [vmem:[%s12 + $0x768] sm:$0xff]
    %v3392 = vld [vmem:[%s12 + $0x770] sm:$0xff]
    %v3393 = vld [vmem:[%s12 + $0x778] sm:$0xff]
    %v3394 = vld [vmem:[%s12 + $0x780] sm:$0xff]
    %v3395 = vld [vmem:[%s12 + $0x788] sm:$0xff]
    %v3396 = vld [vmem:[%s12 + $0x790] sm:$0xff]
    %v3397 = vld [vmem:[%s12 + $0x798] sm:$0xff]
    %v3398 = vld [vmem:[%s12 + $0x7a0] sm:$0xff]
    %v3399 = vld [vmem:[%s12 + $0x7a8] sm:$0xff]
    %v3400 = vld [vmem:[%s12 + $0x7b0] sm:$0xff]
    %v3401 = vld [vmem:[%s12 + $0x7b8] sm:$0xff]
    %v3402 = vld [vmem:[%s12 + $0x7c0] sm:$0xff]
    %v3403 = vld [vmem:[%s12 + $0x7c8] sm:$0xff]
    %v3404 = vld [vmem:[%s12 + $0x7d0] sm:$0xff]
    %v3405 = vld [vmem:[%s12 + $0x7d8] sm:$0xff]
    %v3406 = vld [vmem:[%s12 + $0x7e0] sm:$0xff]
    %v3407 = vld [vmem:[%s12 + $0x7e8] sm:$0xff]
    %v3408 = vld [vmem:[%s12 + $0x7f0] sm:$0xff]
    %v3409 = vld [vmem:[%s12 + $0x7f8] sm:$0xff]
    %v3410 = vld [vmem:[%s12 + $0x800] sm:$0xff]
    %v3411 = vld [vmem:[%s12 + $0x808] sm:$0xff]
    %v3412 = vld [vmem:[%s12 + $0x810] sm:$0xff]
    %v3413 = vld [vmem:[%s12 + $0x818] sm:$0xff]
    %v3414 = vld [vmem:[%s12 + $0x820] sm:$0xff]
    %v3415 = vld [vmem:[%s12 + $0x828] sm:$0xff]
    %v3416 = vld [vmem:[%s12 + $0x830] sm:$0xff]
    %v3417 = vld [vmem:[%s12 + $0x838] sm:$0xff]
    %v3418 = vld [vmem:[%s12 + $0x840] sm:$0xff]
    %v3419 = vld [vmem:[%s12 + $0x848] sm:$0xff]
    %v3420 = vld [vmem:[%s12 + $0x850] sm:$0xff]
    %v3421 = vld [vmem:[%s12 + $0x858] sm:$0xff]
    %v3422 = vld [vmem:[%s12 + $0x860] sm:$0xff]
    %v3423 = vld [vmem:[%s12 + $0x868] sm:$0xff]
    %v3424 = vld [vmem:[%s12 + $0x870] sm:$0xff]
    %v3425 = vld [vmem:[%s12 + $0x878] sm:$0xff]
    %v3426 = vld [vmem:[%s12 + $0x880] sm:$0xff]
    %v3427 = vld [vmem:[%s12 + $0x888] sm:$0xff]
    %v3428 = vld [vmem:[%s12 + $0x890] sm:$0xff]
    %v3429 = vld [vmem:[%s12 + $0x898] sm:$0xff]
    %v3430 = vld [vmem:[%s12 + $0x8a0] sm:$0xff]
    %v3431 = vld [vmem:[%s12 + $0x8a8] sm:$0xff]
    %v3432 = vld [vmem:[%s12 + $0x8b0] sm:$0xff]
    %v3433 = vld [vmem:[%s12 + $0x8b8] sm:$0xff]
    %v3434 = vld [vmem:[%s12 + $0x8c0] sm:$0xff]
    %v3435 = vld [vmem:[%s12 + $0x8c8] sm:$0xff]
    %v3436 = vld [vmem:[%s12 + $0x8d0] sm:$0xff]
    %v3437 = vld [vmem:[%s12 + $0x8d8] sm:$0xff]
    %v3438 = vld [vmem:[%s12 + $0x8e0] sm:$0xff]
    %v3439 = vld [vmem:[%s12 + $0x8e8] sm:$0xff]
    %v3440 = vld [vmem:[%s12 + $0x8f0] sm:$0xff]
    %v3441 = vld [vmem:[%s12 + $0x8f8] sm:$0xff]
    %v3442 = vld [vmem:[%s12 + $0x900] sm:$0xff]
    %v3443 = vld [vmem:[%s12 + $0x908] sm:$0xff]
    %v3444 = vld [vmem:[%s12 + $0x910] sm:$0xff]
    %v3445 = vld [vmem:[%s12 + $0x918] sm:$0xff]
    %v3446 = vld [vmem:[%s12 + $0x920] sm:$0xff]
    %v3447 = vld [vmem:[%s12 + $0x928] sm:$0xff]
    %v3448 = vld [vmem:[%s12 + $0x930] sm:$0xff]
    %v3449 = vld [vmem:[%s12 + $0x938] sm:$0xff]
    %v3450 = vld [vmem:[%s12 + $0x940] sm:$0xff]
    %v3451 = vld [vmem:[%s12 + $0x948] sm:$0xff]
    %v3452 = vld [vmem:[%s12 + $0x950] sm:$0xff]
    %v3453 = vld [vmem:[%s12 + $0x958] sm:$0xff]
    %v3454 = vld [vmem:[%s12 + $0x960] sm:$0xff]
    %v3455 = vld [vmem:[%s12 + $0x968] sm:$0xff]
    %v3456 = vld [vmem:[%s12 + $0x970] sm:$0xff]
    %v3457 = vld [vmem:[%s12 + $0x978] sm:$0xff]
    %v3458 = vld [vmem:[%s12 + $0x980] sm:$0xff]
    %v3459 = vld [vmem:[%s12 + $0x988] sm:$0xff]
    %v3460 = vld [vmem:[%s12 + $0x990] sm:$0xff]
    %v3461 = vld [vmem:[%s12 + $0x998] sm:$0xff]
    %v3462 = vld [vmem:[%s12 + $0x9a0] sm:$0xff]
    %v3463 = vld [vmem:[%s12 + $0x9a8] sm:$0xff]
    %v3464 = vld [vmem:[%s12 + $0x9b0] sm:$0xff]
    %v3465 = vld [vmem:[%s12 + $0x9b8] sm:$0xff]
    %v3466 = vld [vmem:[%s12 + $0x9c0] sm:$0xff]
    %v3467 = vld [vmem:[%s12 + $0x9c8] sm:$0xff]
    %v3468 = vld [vmem:[%s12 + $0x9d0] sm:$0xff]
    %v3469 = vld [vmem:[%s12 + $0x9d8] sm:$0xff]
    %v3470 = vld [vmem:[%s12 + $0x9e0] sm:$0xff]
    %v3471 = vld [vmem:[%s12 + $0x9e8] sm:$0xff]
    %v3472 = vld [vmem:[%s12 + $0x9f0] sm:$0xff]
    %v3473 = vld [vmem:[%s12 + $0x9f8] sm:$0xff]
    %v3474 = vld [vmem:[%s12 + $0xa00] sm:$0xff]
    %v3475 = vld [vmem:[%s12 + $0xa08] sm:$0xff]
    %v3476 = vld [vmem:[%s12 + $0xa10] sm:$0xff]
    %v3477 = vld [vmem:[%s12 + $0xa18] sm:$0xff]
    %v3478 = vld [vmem:[%s12 + $0xa20] sm:$0xff]
    %v3479 = vld [vmem:[%s12 + $0xa28] sm:$0xff]
    %v3480 = vld [vmem:[%s12 + $0xa30] sm:$0xff]
    %v3481 = vld [vmem:[%s12 + $0xa38] sm:$0xff]
    %v3482 = vld [vmem:[%s12 + $0xa40] sm:$0xff]
    %v3483 = vld [vmem:[%s12 + $0xa48] sm:$0xff]
    %v3484 = vld [vmem:[%s12 + $0xa50] sm:$0xff]
    %v3485 = vld [vmem:[%s12 + $0xa58] sm:$0xff]
    %v3486 = vld [vmem:[%s12 + $0xa60] sm:$0xff]
    %v3487 = vld [vmem:[%s12 + $0xa68] sm:$0xff]
    %v3488 = vld [vmem:[%s12 + $0xa70] sm:$0xff]
    %v3489 = vld [vmem:[%s12 + $0xa78] sm:$0xff]
    %v3490 = vld [vmem:[%s12 + $0xa80] sm:$0xff]
    %v3491 = vld [vmem:[%s12 + $0xa88] sm:$0xff]
    %v3492 = vld [vmem:[%s12 + $0xa90] sm:$0xff]
    %v3493 = vld [vmem:[%s12 + $0xa98] sm:$0xff]
    %v3494 = vld [vmem:[%s12 + $0xaa0] sm:$0xff]
    %v3495 = vld [vmem:[%s12 + $0xaa8] sm:$0xff]
    %v3496 = vld [vmem:[%s12 + $0xab0] sm:$0xff]
    %v3497 = vld [vmem:[%s12 + $0xab8] sm:$0xff]
    %v3498 = vld [vmem:[%s12 + $0xac0] sm:$0xff]
    %v3499 = vld [vmem:[%s12 + $0xac8] sm:$0xff]
    %v3500 = vld [vmem:[%s12 + $0xad0] sm:$0xff]
    %v3501 = vld [vmem:[%s12 + $0xad8] sm:$0xff]
    %v3502 = vld [vmem:[%s12 + $0xae0] sm:$0xff]
    %v3503 = vld [vmem:[%s12 + $0xae8] sm:$0xff]
    %v3504 = vld [vmem:[%s12 + $0xaf0] sm:$0xff]
    %v3505 = vld [vmem:[%s12 + $0xaf8] sm:$0xff]
    %v3506 = vld [vmem:[%s12 + $0xb00] sm:$0xff]
    %v3507 = vld [vmem:[%s12 + $0xb08] sm:$0xff]
    %v3508 = vld [vmem:[%s12 + $0xb10] sm:$0xff]
    %v3509 = vld [vmem:[%s12 + $0xb18] sm:$0xff]
    %v3510 = vld [vmem:[%s12 + $0xb20] sm:$0xff]
    %v3511 = vld [vmem:[%s12 + $0xb28] sm:$0xff]
    %v3512 = vld [vmem:[%s12 + $0xb30] sm:$0xff]
    %v3513 = vld [vmem:[%s12 + $0xb38] sm:$0xff]
    %v3514 = vld [vmem:[%s12 + $0xb40] sm:$0xff]
    %v3515 = vld [vmem:[%s12 + $0xb48] sm:$0xff]
    %v3516 = vld [vmem:[%s12 + $0xb50] sm:$0xff]
    %v3517 = vld [vmem:[%s12 + $0xb58] sm:$0xff]
    %v3518 = vld [vmem:[%s12 + $0xb60] sm:$0xff]
    %v3519 = vld [vmem:[%s12 + $0xb68] sm:$0xff]
    %v3520 = vld [vmem:[%s12 + $0xb70] sm:$0xff]
    %v3521 = vld [vmem:[%s12 + $0xb78] sm:$0xff]
    %v3522 = vld [vmem:[%s12 + $0xb80] sm:$0xff]
    %v3523 = vld [vmem:[%s12 + $0xb88] sm:$0xff]
    %v3524 = vld [vmem:[%s12 + $0xb90] sm:$0xff]
    %v3525 = vld [vmem:[%s12 + $0xb98] sm:$0xff]
    %v3526 = vld [vmem:[%s12 + $0xba0] sm:$0xff]
    %v3527 = vld [vmem:[%s12 + $0xba8] sm:$0xff]
    %v3528 = vld [vmem:[%s12 + $0xbb0] sm:$0xff]
    %v3529 = vld [vmem:[%s12 + $0xbb8] sm:$0xff]
    %v3530 = vld [vmem:[%s12 + $0xbc0] sm:$0xff]
    %v3531 = vld [vmem:[%s12 + $0xbc8] sm:$0xff]
    %v3532 = vld [vmem:[%s12 + $0xbd0] sm:$0xff]
    %v3533 = vld [vmem:[%s12 + $0xbd8] sm:$0xff]
    %v3534 = vld [vmem:[%s12 + $0xbe0] sm:$0xff]
    %v3535 = vld [vmem:[%s12 + $0xbe8] sm:$0xff]
    %v3536 = vld [vmem:[%s12 + $0xbf0] sm:$0xff]
    %v3537 = vld [vmem:[%s12 + $0xbf8] sm:$0xff]
    %v3538 = vld [vmem:[%s12 + $0xc00] sm:$0xff]
    %v3539 = vld [vmem:[%s12 + $0xc08] sm:$0xff]
    %v3540 = vld [vmem:[%s12 + $0xc10] sm:$0xff]
    %v3541 = vld [vmem:[%s12 + $0xc18] sm:$0xff]
    %v3542 = vld [vmem:[%s12 + $0xc20] sm:$0xff]
    %v3543 = vld [vmem:[%s12 + $0xc28] sm:$0xff]
    %v3544 = vld [vmem:[%s12 + $0xc30] sm:$0xff]
    %v3545 = vld [vmem:[%s12 + $0xc38] sm:$0xff]
    %v3546 = vld [vmem:[%s12 + $0xc40] sm:$0xff]
    %v3547 = vld [vmem:[%s12 + $0xc48] sm:$0xff]
    %v3548 = vld [vmem:[%s12 + $0xc50] sm:$0xff]
    %v3549 = vld [vmem:[%s12 + $0xc58] sm:$0xff]
    %v3550 = vld [vmem:[%s12 + $0xc60] sm:$0xff]
    %v3551 = vld [vmem:[%s12 + $0xc68] sm:$0xff]
    %v3552 = vld [vmem:[%s12 + $0xc70] sm:$0xff]
    %v3553 = vld [vmem:[%s12 + $0xc78] sm:$0xff]
    %v3554 = vld [vmem:[%s12 + $0xc80] sm:$0xff]
    %v3555 = vld [vmem:[%s12 + $0xc88] sm:$0xff]
    %v3556 = vld [vmem:[%s12 + $0xc90] sm:$0xff]
    %v3557 = vld [vmem:[%s12 + $0xc98] sm:$0xff]
    %v3558 = vld [vmem:[%s12 + $0xca0] sm:$0xff]
    %v3559 = vld [vmem:[%s12 + $0xca8] sm:$0xff]
    %v3560 = vld [vmem:[%s12 + $0xcb0] sm:$0xff]
    %v3561 = vld [vmem:[%s12 + $0xcb8] sm:$0xff]
    %v3562 = vld [vmem:[%s12 + $0xcc0] sm:$0xff]
    %v3563 = vld [vmem:[%s12 + $0xcc8] sm:$0xff]
    %v3564 = vld [vmem:[%s12 + $0xcd0] sm:$0xff]
    %v3565 = vld [vmem:[%s12 + $0xcd8] sm:$0xff]
    %v3566 = vld [vmem:[%s12 + $0xce0] sm:$0xff]
    %v3567 = vld [vmem:[%s12 + $0xce8] sm:$0xff]
    %v3568 = vld [vmem:[%s12 + $0xcf0] sm:$0xff]
    %v3569 = vld [vmem:[%s12 + $0xcf8] sm:$0xff]
    %v3570 = vld [vmem:[%s12 + $0xd00] sm:$0xff]
    %v3571 = vld [vmem:[%s12 + $0xd08] sm:$0xff]
    %v3572 = vld [vmem:[%s12 + $0xd10] sm:$0xff]
    %v3573 = vld [vmem:[%s12 + $0xd18] sm:$0xff]
    %v3574 = vld [vmem:[%s12 + $0xd20] sm:$0xff]
    %v3575 = vld [vmem:[%s12 + $0xd28] sm:$0xff]
    %v3576 = vld [vmem:[%s12 + $0xd30] sm:$0xff]
    %v3577 = vld [vmem:[%s12 + $0xd38] sm:$0xff]
    %v3578 = vld [vmem:[%s12 + $0xd40] sm:$0xff]
    %v3579 = vld [vmem:[%s12 + $0xd48] sm:$0xff]
    %v3580 = vld [vmem:[%s12 + $0xd50] sm:$0xff]
    %v3581 = vld [vmem:[%s12 + $0xd58] sm:$0xff]
    %v3582 = vld [vmem:[%s12 + $0xd60] sm:$0xff]
    %v3583 = vld [vmem:[%s12 + $0xd68] sm:$0xff]
    %v3584 = vld [vmem:[%s12 + $0xd70] sm:$0xff]
    %v3585 = vld [vmem:[%s12 + $0xd78] sm:$0xff]
    %v3586 = vld [vmem:[%s12 + $0xd80] sm:$0xff]
    %v3587 = vld [vmem:[%s12 + $0xd88] sm:$0xff]
    %v3588 = vld [vmem:[%s12 + $0xd90] sm:$0xff]
    %v3589 = vld [vmem:[%s12 + $0xd98] sm:$0xff]
    %v3590 = vld [vmem:[%s12 + $0xda0] sm:$0xff]
    %v3591 = vld [vmem:[%s12 + $0xda8] sm:$0xff]
    %v3592 = vld [vmem:[%s12 + $0xdb0] sm:$0xff]
    %v3593 = vld [vmem:[%s12 + $0xdb8] sm:$0xff]
    %v3594 = vld [vmem:[%s12 + $0xdc0] sm:$0xff]
    %v3595 = vld [vmem:[%s12 + $0xdc8] sm:$0xff]
    %v3596 = vld [vmem:[%s12 + $0xdd0] sm:$0xff]
    %v3597 = vld [vmem:[%s12 + $0xdd8] sm:$0xff]
    %v3598 = vld [vmem:[%s12 + $0xde0] sm:$0xff]
    %v3599 = vld [vmem:[%s12 + $0xde8] sm:$0xff]
    %v3600 = vld [vmem:[%s12 + $0xdf0] sm:$0xff]
    %v3601 = vld [vmem:[%s12 + $0xdf8] sm:$0xff]
    %v3602 = vld [vmem:[%s12 + $0xe00] sm:$0xff]
    %v3603 = vld [vmem:[%s12 + $0xe08] sm:$0xff]
    %v3604 = vld [vmem:[%s12 + $0xe10] sm:$0xff]
    %v3605 = vld [vmem:[%s12 + $0xe18] sm:$0xff]
    %v3606 = vld [vmem:[%s12 + $0xe20] sm:$0xff]
    %v3607 = vld [vmem:[%s12 + $0xe28] sm:$0xff]
    %v3608 = vld [vmem:[%s12 + $0xe30] sm:$0xff]
    %v3609 = vld [vmem:[%s12 + $0xe38] sm:$0xff]
    %v3610 = vld [vmem:[%s12 + $0xe40] sm:$0xff]
    %v3611 = vld [vmem:[%s12 + $0xe48] sm:$0xff]
    %v3612 = vld [vmem:[%s12 + $0xe50] sm:$0xff]
    %v3613 = vld [vmem:[%s12 + $0xe58] sm:$0xff]
    %v3614 = vld [vmem:[%s12 + $0xe60] sm:$0xff]
    %v3615 = vld [vmem:[%s12 + $0xe68] sm:$0xff]
    %v3616 = vld [vmem:[%s12 + $0xe70] sm:$0xff]
    %v3617 = vld [vmem:[%s12 + $0xe78] sm:$0xff]
    %v3618 = vld [vmem:[%s12 + $0xe80] sm:$0xff]
    %v3619 = vld [vmem:[%s12 + $0xe88] sm:$0xff]
    %v3620 = vld [vmem:[%s12 + $0xe90] sm:$0xff]
    %v3621 = vld [vmem:[%s12 + $0xe98] sm:$0xff]
    %v3622 = vld [vmem:[%s12 + $0xea0] sm:$0xff]
    %v3623 = vld [vmem:[%s12 + $0xea8] sm:$0xff]
    %v3624 = vld [vmem:[%s12 + $0xeb0] sm:$0xff]
    %v3625 = vld [vmem:[%s12 + $0xeb8] sm:$0xff]
    %v3626 = vld [vmem:[%s12 + $0xec0] sm:$0xff]
    %v3627 = vld [vmem:[%s12 + $0xec8] sm:$0xff]
    %v3628 = vld [vmem:[%s12 + $0xed0] sm:$0xff]
    %v3629 = vld [vmem:[%s12 + $0xed8] sm:$0xff]
    %v3630 = vld [vmem:[%s12 + $0xee0] sm:$0xff]
    %v3631 = vld [vmem:[%s12 + $0xee8] sm:$0xff]
    %v3632 = vld [vmem:[%s12 + $0xef0] sm:$0xff]
    %v3633 = vld [vmem:[%s12 + $0xef8] sm:$0xff]
    %v3634 = vld [vmem:[%s12 + $0xf00] sm:$0xff]
    %v3635 = vld [vmem:[%s12 + $0xf08] sm:$0xff]
    %v3636 = vld [vmem:[%s12 + $0xf10] sm:$0xff]
    %v3637 = vld [vmem:[%s12 + $0xf18] sm:$0xff]
    %v3638 = vld [vmem:[%s12 + $0xf20] sm:$0xff]
    %v3639 = vld [vmem:[%s12 + $0xf28] sm:$0xff]
    %v3640 = vld [vmem:[%s12 + $0xf30] sm:$0xff]
    %v3641 = vld [vmem:[%s12 + $0xf38] sm:$0xff]
    %v3642 = vld [vmem:[%s12 + $0xf40] sm:$0xff]
    %v3643 = vld [vmem:[%s12 + $0xf48] sm:$0xff]
    %v3644 = vld [vmem:[%s12 + $0xf50] sm:$0xff]
    %v3645 = vld [vmem:[%s12 + $0xf58] sm:$0xff]
    %v3646 = vld [vmem:[%s12 + $0xf60] sm:$0xff]
    %v3647 = vld [vmem:[%s12 + $0xf68] sm:$0xff]
    %v3648 = vld [vmem:[%s12 + $0xf70] sm:$0xff]
    %v3649 = vld [vmem:[%s12 + $0xf78] sm:$0xff]
    %v3650 = vld [vmem:[%s12 + $0xf80] sm:$0xff]
    %v3651 = vld [vmem:[%s12 + $0xf88] sm:$0xff]
    %v3652 = vld [vmem:[%s12 + $0xf90] sm:$0xff]
    %v3653 = vld [vmem:[%s12 + $0xf98] sm:$0xff]
    %v3654 = vld [vmem:[%s12 + $0xfa0] sm:$0xff]
    %v3655 = vld [vmem:[%s12 + $0xfa8] sm:$0xff]
    %v3656 = vld [vmem:[%s12 + $0xfb0] sm:$0xff]
    %v3657 = vld [vmem:[%s12 + $0xfb8] sm:$0xff]
    %v3658 = vld [vmem:[%s12 + $0xfc0] sm:$0xff]
    %v3659 = vld [vmem:[%s12 + $0xfc8] sm:$0xff]
    %v3660 = vld [vmem:[%s12 + $0xfd0] sm:$0xff]
    %v3661 = vld [vmem:[%s12 + $0xfd8] sm:$0xff]
    %v3662 = vld [vmem:[%s12 + $0xfe0] sm:$0xff]
    %v3663 = vld [vmem:[%s12 + $0xfe8] sm:$0xff]
    %v3664 = vld [vmem:[%s12 + $0xff0] sm:$0xff]
    %v3665 = vld [vmem:[%s12 + $0xff8] sm:$0xff]
    %v3666 = vld [vmem:[%s13] sm:$0xf]
    %v3668 = vperm.slane %v3666, 0
    %v3669 = vperm.slane %v3666, 1
    %v3670 = vperm.slane %v3666, 2
    %v3671 = vperm.slane %v3666, 3
    %3676 = vmatpush.msra.mxu0 %v3214
    %3677 = vmatpush.msra.mxu0 %v3210
    %3678 = vmatpush.msra.mxu0 %v3206
    %3679 = vmatpush.msra.mxu0 %v3202
    %3680 = vmatpush.msra.mxu0 %v3198
    %3681 = vmatpush.msra.mxu0 %v3194
    %3682 = vmatpush.msra.mxu0 %v3190
    %3683 = vmatpush.msra.mxu0 %v3186
    %3684 = vmatpush.msra.mxu0 %v3182
    %3685 = vmatpush.msra.mxu0 %v3178
    %3686 = vmatpush.msra.mxu0 %v3174
    %3687 = vmatpush.msra.mxu0 %v3170
    %3688 = vmatpush.msra.mxu0 %v3166
    %3689 = vmatpush.msra.mxu0 %v3162
    %3690 = vmatpush.msra.mxu0 %v3158
    %3691 = vmatpush.msra.mxu0 %v3154
    %3692 = vmatmul.f32.gmra.mxu0 %v2988
    %v3693 = vpop.f32.mrf.mxu0
    %v3694 = vadd.f32 %v3668, %v3693
    %3695 = vmatmul.f32.gmra.mxu0 %v2991
    %v3696 = vpop.f32.mrf.mxu0
    %v3697 = vadd.f32 %v3668, %v3696
    %3698 = vdwg.mxu0
    %3699 = vmatpush.msra.mxu0 %v3278
    %3700 = vmatpush.msra.mxu0 %v3274
    %3701 = vmatpush.msra.mxu0 %v3270
    %3702 = vmatpush.msra.mxu0 %v3266
    %3703 = vmatpush.msra.mxu0 %v3262
    %3704 = vmatpush.msra.mxu0 %v3258
    %3705 = vmatpush.msra.mxu0 %v3254
    %3706 = vmatpush.msra.mxu0 %v3250
    %3707 = vmatpush.msra.mxu0 %v3246
    %3708 = vmatpush.msra.mxu0 %v3242
    %3709 = vmatpush.msra.mxu0 %v3238
    %3710 = vmatpush.msra.mxu0 %v3234
    %3711 = vmatpush.msra.mxu0 %v3230
    %3712 = vmatpush.msra.mxu0 %v3226
    %3713 = vmatpush.msra.mxu0 %v3222
    %3714 = vmatpush.msra.mxu0 %v3218
    %3715 = vmatmul.f32.gmra.mxu0 %v3011
    %v3716 = vpop.f32.mrf.mxu0
    %v3717 = vadd.f32 %v3694, %v3716
    %3718 = vmatmul.f32.gmra.mxu0 %v3014
    %v3719 = vpop.f32.mrf.mxu0
    %v3720 = vadd.f32 %v3697, %v3719
    %3721 = vdwg.mxu0
    %3722 = vmatpush.msra.mxu0 %v3342
    %3723 = vmatpush.msra.mxu0 %v3338
    %3724 = vmatpush.msra.mxu0 %v3334
    %3725 = vmatpush.msra.mxu0 %v3330
    %3726 = vmatpush.msra.mxu0 %v3326
    %3727 = vmatpush.msra.mxu0 %v3322
    %3728 = vmatpush.msra.mxu0 %v3318
    %3729 = vmatpush.msra.mxu0 %v3314
    %3730 = vmatpush.msra.mxu0 %v3310
    %3731 = vmatpush.msra.mxu0 %v3306
    %3732 = vmatpush.msra.mxu0 %v3302
    %3733 = vmatpush.msra.mxu0 %v3298
    %3734 = vmatpush.msra.mxu0 %v3294
    %3735 = vmatpush.msra.mxu0 %v3290
    %3736 = vmatpush.msra.mxu0 %v3286
    %3737 = vmatpush.msra.mxu0 %v3282
    %3738 = vmatmul.f32.gmra.mxu0 %v3034
    %v3739 = vpop.f32.mrf.mxu0
    %v3740 = vadd.f32 %v3717, %v3739
    %3741 = vmatmul.f32.gmra.mxu0 %v3037
    %v3742 = vpop.f32.mrf.mxu0
    %v3743 = vadd.f32 %v3720, %v3742
    %3744 = vdwg.mxu0
    %3745 = vmatpush.msra.mxu0 %v3406
    %3746 = vmatpush.msra.mxu0 %v3402
    %3747 = vmatpush.msra.mxu0 %v3398
    %3748 = vmatpush.msra.mxu0 %v3394
    %3749 = vmatpush.msra.mxu0 %v3390
    %3750 = vmatpush.msra.mxu0 %v3386
    %3751 = vmatpush.msra.mxu0 %v3382
    %3752 = vmatpush.msra.mxu0 %v3378
    %3753 = vmatpush.msra.mxu0 %v3374
    %3754 = vmatpush.msra.mxu0 %v3370
    %3755 = vmatpush.msra.mxu0 %v3366
    %3756 = vmatpush.msra.mxu0 %v3362
    %3757 = vmatpush.msra.mxu0 %v3358
    %3758 = vmatpush.msra.mxu0 %v3354
    %3759 = vmatpush.msra.mxu0 %v3350
    %3760 = vmatpush.msra.mxu0 %v3346
    %3761 = vmatmul.f32.gmra.mxu0 %v3057
    %v3762 = vpop.f32.mrf.mxu0
    %v3763 = vadd.f32 %v3740, %v3762
    %3764 = vmatmul.f32.gmra.mxu0 %v3060
    %v3765 = vpop.f32.mrf.mxu0
    %v3766 = vadd.f32 %v3743, %v3765
    %3767 = vdwg.mxu0
    %3768 = vmatpush.msra.mxu0 %v3470
    %3769 = vmatpush.msra.mxu0 %v3466
    %3770 = vmatpush.msra.mxu0 %v3462
    %3771 = vmatpush.msra.mxu0 %v3458
    %3772 = vmatpush.msra.mxu0 %v3454
    %3773 = vmatpush.msra.mxu0 %v3450
    %3774 = vmatpush.msra.mxu0 %v3446
    %3775 = vmatpush.msra.mxu0 %v3442
    %3776 = vmatpush.msra.mxu0 %v3438
    %3777 = vmatpush.msra.mxu0 %v3434
    %3778 = vmatpush.msra.mxu0 %v3430
    %3779 = vmatpush.msra.mxu0 %v3426
    %3780 = vmatpush.msra.mxu0 %v3422
    %3781 = vmatpush.msra.mxu0 %v3418
    %3782 = vmatpush.msra.mxu0 %v3414
    %3783 = vmatpush.msra.mxu0 %v3410
    %3784 = vmatmul.f32.gmra.mxu0 %v3080
    %v3785 = vpop.f32.mrf.mxu0
    %v3786 = vadd.f32 %v3763, %v3785
    %3787 = vmatmul.f32.gmra.mxu0 %v3083
    %v3788 = vpop.f32.mrf.mxu0
    %v3789 = vadd.f32 %v3766, %v3788
    %3790 = vdwg.mxu0
    %3791 = vmatpush.msra.mxu0 %v3534
    %3792 = vmatpush.msra.mxu0 %v3530
    %3793 = vmatpush.msra.mxu0 %v3526
    %3794 = vmatpush.msra.mxu0 %v3522
    %3795 = vmatpush.msra.mxu0 %v3518
    %3796 = vmatpush.msra.mxu0 %v3514
    %3797 = vmatpush.msra.mxu0 %v3510
    %3798 = vmatpush.msra.mxu0 %v3506
    %3799 = vmatpush.msra.mxu0 %v3502
    %3800 = vmatpush.msra.mxu0 %v3498
    %3801 = vmatpush.msra.mxu0 %v3494
    %3802 = vmatpush.msra.mxu0 %v3490
    %3803 = vmatpush.msra.mxu0 %v3486
    %3804 = vmatpush.msra.mxu0 %v3482
    %3805 = vmatpush.msra.mxu0 %v3478
    %3806 = vmatpush.msra.mxu0 %v3474
    %3807 = vmatmul.f32.gmra.mxu0 %v3103
    %v3808 = vpop.f32.mrf.mxu0
    %v3809 = vadd.f32 %v3786, %v3808
    %3810 = vmatmul.f32.gmra.mxu0 %v3106
    %v3811 = vpop.f32.mrf.mxu0
    %v3812 = vadd.f32 %v3789, %v3811
    %3813 = vdwg.mxu0
    %3814 = vmatpush.msra.mxu0 %v3598
    %3815 = vmatpush.msra.mxu0 %v3594
    %3816 = vmatpush.msra.mxu0 %v3590
    %3817 = vmatpush.msra.mxu0 %v3586
    %3818 = vmatpush.msra.mxu0 %v3582
    %3819 = vmatpush.msra.mxu0 %v3578
    %3820 = vmatpush.msra.mxu0 %v3574
    %3821 = vmatpush.msra.mxu0 %v3570
    %3822 = vmatpush.msra.mxu0 %v3566
    %3823 = vmatpush.msra.mxu0 %v3562
    %3824 = vmatpush.msra.mxu0 %v3558
    %3825 = vmatpush.msra.mxu0 %v3554
    %3826 = vmatpush.msra.mxu0 %v3550
    %3827 = vmatpush.msra.mxu0 %v3546
    %3828 = vmatpush.msra.mxu0 %v3542
    %3829 = vmatpush.msra.mxu0 %v3538
    %3830 = vmatmul.f32.gmra.mxu0 %v3126
    %v3831 = vpop.f32.mrf.mxu0
    %v3832 = vadd.f32 %v3809, %v3831
    %3833 = vmatmul.f32.gmra.mxu0 %v3129
    %v3834 = vpop.f32.mrf.mxu0
    %v3835 = vadd.f32 %v3812, %v3834
    %3836 = vdwg.mxu0
    %3837 = vmatpush.msra.mxu0 %v3662
    %3838 = vmatpush.msra.mxu0 %v3658
    %3839 = vmatpush.msra.mxu0 %v3654
    %3840 = vmatpush.msra.mxu0 %v3650
    %3841 = vmatpush.msra.mxu0 %v3646
    %3842 = vmatpush.msra.mxu0 %v3642
    %3843 = vmatpush.msra.mxu0 %v3638
    %3844 = vmatpush.msra.mxu0 %v3634
    %3845 = vmatpush.msra.mxu0 %v3630
    %3846 = vmatpush.msra.mxu0 %v3626
    %3847 = vmatpush.msra.mxu0 %v3622
    %3848 = vmatpush.msra.mxu0 %v3618
    %3849 = vmatpush.msra.mxu0 %v3614
    %3850 = vmatpush.msra.mxu0 %v3610
    %3851 = vmatpush.msra.mxu0 %v3606
    %3852 = vmatpush.msra.mxu0 %v3602
    %3853 = vmatmul.f32.gmra.mxu0 %v3149
    %v3854 = vpop.f32.mrf.mxu0
    %v3855 = vadd.f32 %v3832, %v3854
    %3856 = vmatmul.f32.gmra.mxu0 %v3152
    %v3857 = vpop.f32.mrf.mxu0
    %v3858 = vadd.f32 %v3835, %v3857
    %3859 = vdwg.mxu0
    %3860 = vmatpush.msra.mxu0 %v3215
    %3861 = vmatpush.msra.mxu0 %v3211
    %3862 = vmatpush.msra.mxu0 %v3207
    %3863 = vmatpush.msra.mxu0 %v3203
    %3864 = vmatpush.msra.mxu0 %v3199
    %3865 = vmatpush.msra.mxu0 %v3195
    %3866 = vmatpush.msra.mxu0 %v3191
    %3867 = vmatpush.msra.mxu0 %v3187
    %3868 = vmatpush.msra.mxu0 %v3183
    %3869 = vmatpush.msra.mxu0 %v3179
    %3870 = vmatpush.msra.mxu0 %v3175
    %3871 = vmatpush.msra.mxu0 %v3171
    %3872 = vmatpush.msra.mxu0 %v3167
    %3873 = vmatpush.msra.mxu0 %v3163
    %3874 = vmatpush.msra.mxu0 %v3159
    %3875 = vmatpush.msra.mxu0 %v3155
    %3876 = vmatmul.f32.gmra.mxu0 %v2988
    %v3877 = vpop.f32.mrf.mxu0
    %v3878 = vadd.f32 %v3669, %v3877
    %3879 = vmatmul.f32.gmra.mxu0 %v2991
    %v3880 = vpop.f32.mrf.mxu0
    %v3881 = vadd.f32 %v3669, %v3880
    %3882 = vdwg.mxu0
    %3883 = vmatpush.msra.mxu0 %v3279
    %3884 = vmatpush.msra.mxu0 %v3275
    %3885 = vmatpush.msra.mxu0 %v3271
    %3886 = vmatpush.msra.mxu0 %v3267
    %3887 = vmatpush.msra.mxu0 %v3263
    %3888 = vmatpush.msra.mxu0 %v3259
    %3889 = vmatpush.msra.mxu0 %v3255
    %3890 = vmatpush.msra.mxu0 %v3251
    %3891 = vmatpush.msra.mxu0 %v3247
    %3892 = vmatpush.msra.mxu0 %v3243
    %3893 = vmatpush.msra.mxu0 %v3239
    %3894 = vmatpush.msra.mxu0 %v3235
    %3895 = vmatpush.msra.mxu0 %v3231
    %3896 = vmatpush.msra.mxu0 %v3227
    %3897 = vmatpush.msra.mxu0 %v3223
    %3898 = vmatpush.msra.mxu0 %v3219
    %3899 = vmatmul.f32.gmra.mxu0 %v3011
    %v3900 = vpop.f32.mrf.mxu0
    %v3901 = vadd.f32 %v3878, %v3900
    %3902 = vmatmul.f32.gmra.mxu0 %v3014
    %v3903 = vpop.f32.mrf.mxu0
    %v3904 = vadd.f32 %v3881, %v3903
    %3905 = vdwg.mxu0
    %3906 = vmatpush.msra.mxu0 %v3343
    %3907 = vmatpush.msra.mxu0 %v3339
    %3908 = vmatpush.msra.mxu0 %v3335
    %3909 = vmatpush.msra.mxu0 %v3331
    %3910 = vmatpush.msra.mxu0 %v3327
    %3911 = vmatpush.msra.mxu0 %v3323
    %3912 = vmatpush.msra.mxu0 %v3319
    %3913 = vmatpush.msra.mxu0 %v3315
    %3914 = vmatpush.msra.mxu0 %v3311
    %3915 = vmatpush.msra.mxu0 %v3307
    %3916 = vmatpush.msra.mxu0 %v3303
    %3917 = vmatpush.msra.mxu0 %v3299
    %3918 = vmatpush.msra.mxu0 %v3295
    %3919 = vmatpush.msra.mxu0 %v3291
    %3920 = vmatpush.msra.mxu0 %v3287
    %3921 = vmatpush.msra.mxu0 %v3283
    %3922 = vmatmul.f32.gmra.mxu0 %v3034
    %v3923 = vpop.f32.mrf.mxu0
    %v3924 = vadd.f32 %v3901, %v3923
    %3925 = vmatmul.f32.gmra.mxu0 %v3037
    %v3926 = vpop.f32.mrf.mxu0
    %v3927 = vadd.f32 %v3904, %v3926
    %3928 = vdwg.mxu0
    %3929 = vmatpush.msra.mxu0 %v3407
    %3930 = vmatpush.msra.mxu0 %v3403
    %3931 = vmatpush.msra.mxu0 %v3399
    %3932 = vmatpush.msra.mxu0 %v3395
    %3933 = vmatpush.msra.mxu0 %v3391
    %3934 = vmatpush.msra.mxu0 %v3387
    %3935 = vmatpush.msra.mxu0 %v3383
    %3936 = vmatpush.msra.mxu0 %v3379
    %3937 = vmatpush.msra.mxu0 %v3375
    %3938 = vmatpush.msra.mxu0 %v3371
    %3939 = vmatpush.msra.mxu0 %v3367
    %3940 = vmatpush.msra.mxu0 %v3363
    %3941 = vmatpush.msra.mxu0 %v3359
    %3942 = vmatpush.msra.mxu0 %v3355
    %3943 = vmatpush.msra.mxu0 %v3351
    %3944 = vmatpush.msra.mxu0 %v3347
    %3945 = vmatmul.f32.gmra.mxu0 %v3057
    %v3946 = vpop.f32.mrf.mxu0
    %v3947 = vadd.f32 %v3924, %v3946
    %3948 = vmatmul.f32.gmra.mxu0 %v3060
    %v3949 = vpop.f32.mrf.mxu0
    %v3950 = vadd.f32 %v3927, %v3949
    %3951 = vdwg.mxu0
    %3952 = vmatpush.msra.mxu0 %v3471
    %3953 = vmatpush.msra.mxu0 %v3467
    %3954 = vmatpush.msra.mxu0 %v3463
    %3955 = vmatpush.msra.mxu0 %v3459
    %3956 = vmatpush.msra.mxu0 %v3455
    %3957 = vmatpush.msra.mxu0 %v3451
    %3958 = vmatpush.msra.mxu0 %v3447
    %3959 = vmatpush.msra.mxu0 %v3443
    %3960 = vmatpush.msra.mxu0 %v3439
    %3961 = vmatpush.msra.mxu0 %v3435
    %3962 = vmatpush.msra.mxu0 %v3431
    %3963 = vmatpush.msra.mxu0 %v3427
    %3964 = vmatpush.msra.mxu0 %v3423
    %3965 = vmatpush.msra.mxu0 %v3419
    %3966 = vmatpush.msra.mxu0 %v3415
    %3967 = vmatpush.msra.mxu0 %v3411
    %3968 = vmatmul.f32.gmra.mxu0 %v3080
    %v3969 = vpop.f32.mrf.mxu0
    %v3970 = vadd.f32 %v3947, %v3969
    %3971 = vmatmul.f32.gmra.mxu0 %v3083
    %v3972 = vpop.f32.mrf.mxu0
    %v3973 = vadd.f32 %v3950, %v3972
    %3974 = vdwg.mxu0
    %3975 = vmatpush.msra.mxu0 %v3535
    %3976 = vmatpush.msra.mxu0 %v3531
    %3977 = vmatpush.msra.mxu0 %v3527
    %3978 = vmatpush.msra.mxu0 %v3523
    %3979 = vmatpush.msra.mxu0 %v3519
    %3980 = vmatpush.msra.mxu0 %v3515
    %3981 = vmatpush.msra.mxu0 %v3511
    %3982 = vmatpush.msra.mxu0 %v3507
    %3983 = vmatpush.msra.mxu0 %v3503
    %3984 = vmatpush.msra.mxu0 %v3499
    %3985 = vmatpush.msra.mxu0 %v3495
    %3986 = vmatpush.msra.mxu0 %v3491
    %3987 = vmatpush.msra.mxu0 %v3487
    %3988 = vmatpush.msra.mxu0 %v3483
    %3989 = vmatpush.msra.mxu0 %v3479
    %3990 = vmatpush.msra.mxu0 %v3475
    %3991 = vmatmul.f32.gmra.mxu0 %v3103
    %v3992 = vpop.f32.mrf.mxu0
    %v3993 = vadd.f32 %v3970, %v3992
    %3994 = vmatmul.f32.gmra.mxu0 %v3106
    %v3995 = vpop.f32.mrf.mxu0
    %v3996 = vadd.f32 %v3973, %v3995
    %3997 = vdwg.mxu0
    %3998 = vmatpush.msra.mxu0 %v3599
    %3999 = vmatpush.msra.mxu0 %v3595
    %4000 = vmatpush.msra.mxu0 %v3591
    %4001 = vmatpush.msra.mxu0 %v3587
    %4002 = vmatpush.msra.mxu0 %v3583
    %4003 = vmatpush.msra.mxu0 %v3579
    %4004 = vmatpush.msra.mxu0 %v3575
    %4005 = vmatpush.msra.mxu0 %v3571
    %4006 = vmatpush.msra.mxu0 %v3567
    %4007 = vmatpush.msra.mxu0 %v3563
    %4008 = vmatpush.msra.mxu0 %v3559
    %4009 = vmatpush.msra.mxu0 %v3555
    %4010 = vmatpush.msra.mxu0 %v3551
    %4011 = vmatpush.msra.mxu0 %v3547
    %4012 = vmatpush.msra.mxu0 %v3543
    %4013 = vmatpush.msra.mxu0 %v3539
    %4014 = vmatmul.f32.gmra.mxu0 %v3126
    %v4015 = vpop.f32.mrf.mxu0
    %v4016 = vadd.f32 %v3993, %v4015
    %4017 = vmatmul.f32.gmra.mxu0 %v3129
    %v4018 = vpop.f32.mrf.mxu0
    %v4019 = vadd.f32 %v3996, %v4018
    %4020 = vdwg.mxu0
    %4021 = vmatpush.msra.mxu0 %v3663
    %4022 = vmatpush.msra.mxu0 %v3659
    %4023 = vmatpush.msra.mxu0 %v3655
    %4024 = vmatpush.msra.mxu0 %v3651
    %4025 = vmatpush.msra.mxu0 %v3647
    %4026 = vmatpush.msra.mxu0 %v3643
    %4027 = vmatpush.msra.mxu0 %v3639
    %4028 = vmatpush.msra.mxu0 %v3635
    %4029 = vmatpush.msra.mxu0 %v3631
    %4030 = vmatpush.msra.mxu0 %v3627
    %4031 = vmatpush.msra.mxu0 %v3623
    %4032 = vmatpush.msra.mxu0 %v3619
    %4033 = vmatpush.msra.mxu0 %v3615
    %4034 = vmatpush.msra.mxu0 %v3611
    %4035 = vmatpush.msra.mxu0 %v3607
    %4036 = vmatpush.msra.mxu0 %v3603
    %4037 = vmatmul.f32.gmra.mxu0 %v3149
    %v4038 = vpop.f32.mrf.mxu0
    %v4039 = vadd.f32 %v4016, %v4038
    %4040 = vmatmul.f32.gmra.mxu0 %v3152
    %v4041 = vpop.f32.mrf.mxu0
    %v4042 = vadd.f32 %v4019, %v4041
    %4043 = vdwg.mxu0
    %4044 = vmatpush.msra.mxu0 %v3216
    %4045 = vmatpush.msra.mxu0 %v3212
    %4046 = vmatpush.msra.mxu0 %v3208
    %4047 = vmatpush.msra.mxu0 %v3204
    %4048 = vmatpush.msra.mxu0 %v3200
    %4049 = vmatpush.msra.mxu0 %v3196
    %4050 = vmatpush.msra.mxu0 %v3192
    %4051 = vmatpush.msra.mxu0 %v3188
    %4052 = vmatpush.msra.mxu0 %v3184
    %4053 = vmatpush.msra.mxu0 %v3180
    %4054 = vmatpush.msra.mxu0 %v3176
    %4055 = vmatpush.msra.mxu0 %v3172
    %4056 = vmatpush.msra.mxu0 %v3168
    %4057 = vmatpush.msra.mxu0 %v3164
    %4058 = vmatpush.msra.mxu0 %v3160
    %4059 = vmatpush.msra.mxu0 %v3156
    %4060 = vmatmul.f32.gmra.mxu0 %v2988
    %v4061 = vpop.f32.mrf.mxu0
    %v4062 = vadd.f32 %v3670, %v4061
    %4063 = vmatmul.f32.gmra.mxu0 %v2991
    %v4064 = vpop.f32.mrf.mxu0
    %v4065 = vadd.f32 %v3670, %v4064
    %4066 = vdwg.mxu0
    %4067 = vmatpush.msra.mxu0 %v3280
    %4068 = vmatpush.msra.mxu0 %v3276
    %4069 = vmatpush.msra.mxu0 %v3272
    %4070 = vmatpush.msra.mxu0 %v3268
    %4071 = vmatpush.msra.mxu0 %v3264
    %4072 = vmatpush.msra.mxu0 %v3260
    %4073 = vmatpush.msra.mxu0 %v3256
    %4074 = vmatpush.msra.mxu0 %v3252
    %4075 = vmatpush.msra.mxu0 %v3248
    %4076 = vmatpush.msra.mxu0 %v3244
    %4077 = vmatpush.msra.mxu0 %v3240
    %4078 = vmatpush.msra.mxu0 %v3236
    %4079 = vmatpush.msra.mxu0 %v3232
    %4080 = vmatpush.msra.mxu0 %v3228
    %4081 = vmatpush.msra.mxu0 %v3224
    %4082 = vmatpush.msra.mxu0 %v3220
    %4083 = vmatmul.f32.gmra.mxu0 %v3011
    %v4084 = vpop.f32.mrf.mxu0
    %v4085 = vadd.f32 %v4062, %v4084
    %4086 = vmatmul.f32.gmra.mxu0 %v3014
    %v4087 = vpop.f32.mrf.mxu0
    %v4088 = vadd.f32 %v4065, %v4087
    %4089 = vdwg.mxu0
    %4090 = vmatpush.msra.mxu0 %v3344
    %4091 = vmatpush.msra.mxu0 %v3340
    %4092 = vmatpush.msra.mxu0 %v3336
    %4093 = vmatpush.msra.mxu0 %v3332
    %4094 = vmatpush.msra.mxu0 %v3328
    %4095 = vmatpush.msra.mxu0 %v3324
    %4096 = vmatpush.msra.mxu0 %v3320
    %4097 = vmatpush.msra.mxu0 %v3316
    %4098 = vmatpush.msra.mxu0 %v3312
    %4099 = vmatpush.msra.mxu0 %v3308
    %4100 = vmatpush.msra.mxu0 %v3304
    %4101 = vmatpush.msra.mxu0 %v3300
    %4102 = vmatpush.msra.mxu0 %v3296
    %4103 = vmatpush.msra.mxu0 %v3292
    %4104 = vmatpush.msra.mxu0 %v3288
    %4105 = vmatpush.msra.mxu0 %v3284
    %4106 = vmatmul.f32.gmra.mxu0 %v3034
    %v4107 = vpop.f32.mrf.mxu0
    %v4108 = vadd.f32 %v4085, %v4107
    %4109 = vmatmul.f32.gmra.mxu0 %v3037
    %v4110 = vpop.f32.mrf.mxu0
    %v4111 = vadd.f32 %v4088, %v4110
    %4112 = vdwg.mxu0
    %4113 = vmatpush.msra.mxu0 %v3408
    %4114 = vmatpush.msra.mxu0 %v3404
    %4115 = vmatpush.msra.mxu0 %v3400
    %4116 = vmatpush.msra.mxu0 %v3396
    %4117 = vmatpush.msra.mxu0 %v3392
    %4118 = vmatpush.msra.mxu0 %v3388
    %4119 = vmatpush.msra.mxu0 %v3384
    %4120 = vmatpush.msra.mxu0 %v3380
    %4121 = vmatpush.msra.mxu0 %v3376
    %4122 = vmatpush.msra.mxu0 %v3372
    %4123 = vmatpush.msra.mxu0 %v3368
    %4124 = vmatpush.msra.mxu0 %v3364
    %4125 = vmatpush.msra.mxu0 %v3360
    %4126 = vmatpush.msra.mxu0 %v3356
    %4127 = vmatpush.msra.mxu0 %v3352
    %4128 = vmatpush.msra.mxu0 %v3348
    %4129 = vmatmul.f32.gmra.mxu0 %v3057
    %v4130 = vpop.f32.mrf.mxu0
    %v4131 = vadd.f32 %v4108, %v4130
    %4132 = vmatmul.f32.gmra.mxu0 %v3060
    %v4133 = vpop.f32.mrf.mxu0
    %v4134 = vadd.f32 %v4111, %v4133
    %4135 = vdwg.mxu0
    %4136 = vmatpush.msra.mxu0 %v3472
    %4137 = vmatpush.msra.mxu0 %v3468
    %4138 = vmatpush.msra.mxu0 %v3464
    %4139 = vmatpush.msra.mxu0 %v3460
    %4140 = vmatpush.msra.mxu0 %v3456
    %4141 = vmatpush.msra.mxu0 %v3452
    %4142 = vmatpush.msra.mxu0 %v3448
    %4143 = vmatpush.msra.mxu0 %v3444
    %4144 = vmatpush.msra.mxu0 %v3440
    %4145 = vmatpush.msra.mxu0 %v3436
    %4146 = vmatpush.msra.mxu0 %v3432
    %4147 = vmatpush.msra.mxu0 %v3428
    %4148 = vmatpush.msra.mxu0 %v3424
    %4149 = vmatpush.msra.mxu0 %v3420
    %4150 = vmatpush.msra.mxu0 %v3416
    %4151 = vmatpush.msra.mxu0 %v3412
    %4152 = vmatmul.f32.gmra.mxu0 %v3080
    %v4153 = vpop.f32.mrf.mxu0
    %v4154 = vadd.f32 %v4131, %v4153
    %4155 = vmatmul.f32.gmra.mxu0 %v3083
    %v4156 = vpop.f32.mrf.mxu0
    %v4157 = vadd.f32 %v4134, %v4156
    %4158 = vdwg.mxu0
    %4159 = vmatpush.msra.mxu0 %v3536
    %4160 = vmatpush.msra.mxu0 %v3532
    %4161 = vmatpush.msra.mxu0 %v3528
    %4162 = vmatpush.msra.mxu0 %v3524
    %4163 = vmatpush.msra.mxu0 %v3520
    %4164 = vmatpush.msra.mxu0 %v3516
    %4165 = vmatpush.msra.mxu0 %v3512
    %4166 = vmatpush.msra.mxu0 %v3508
    %4167 = vmatpush.msra.mxu0 %v3504
    %4168 = vmatpush.msra.mxu0 %v3500
    %4169 = vmatpush.msra.mxu0 %v3496
    %4170 = vmatpush.msra.mxu0 %v3492
    %4171 = vmatpush.msra.mxu0 %v3488
    %4172 = vmatpush.msra.mxu0 %v3484
    %4173 = vmatpush.msra.mxu0 %v3480
    %4174 = vmatpush.msra.mxu0 %v3476
    %4175 = vmatmul.f32.gmra.mxu0 %v3103
    %v4176 = vpop.f32.mrf.mxu0
    %v4177 = vadd.f32 %v4154, %v4176
    %4178 = vmatmul.f32.gmra.mxu0 %v3106
    %v4179 = vpop.f32.mrf.mxu0
    %v4180 = vadd.f32 %v4157, %v4179
    %4181 = vdwg.mxu0
    %4182 = vmatpush.msra.mxu0 %v3600
    %4183 = vmatpush.msra.mxu0 %v3596
    %4184 = vmatpush.msra.mxu0 %v3592
    %4185 = vmatpush.msra.mxu0 %v3588
    %4186 = vmatpush.msra.mxu0 %v3584
    %4187 = vmatpush.msra.mxu0 %v3580
    %4188 = vmatpush.msra.mxu0 %v3576
    %4189 = vmatpush.msra.mxu0 %v3572
    %4190 = vmatpush.msra.mxu0 %v3568
    %4191 = vmatpush.msra.mxu0 %v3564
    %4192 = vmatpush.msra.mxu0 %v3560
    %4193 = vmatpush.msra.mxu0 %v3556
    %4194 = vmatpush.msra.mxu0 %v3552
    %4195 = vmatpush.msra.mxu0 %v3548
    %4196 = vmatpush.msra.mxu0 %v3544
    %4197 = vmatpush.msra.mxu0 %v3540
    %4198 = vmatmul.f32.gmra.mxu0 %v3126
    %v4199 = vpop.f32.mrf.mxu0
    %v4200 = vadd.f32 %v4177, %v4199
    %4201 = vmatmul.f32.gmra.mxu0 %v3129
    %v4202 = vpop.f32.mrf.mxu0
    %v4203 = vadd.f32 %v4180, %v4202
    %4204 = vdwg.mxu0
    %4205 = vmatpush.msra.mxu0 %v3664
    %4206 = vmatpush.msra.mxu0 %v3660
    %4207 = vmatpush.msra.mxu0 %v3656
    %4208 = vmatpush.msra.mxu0 %v3652
    %4209 = vmatpush.msra.mxu0 %v3648
    %4210 = vmatpush.msra.mxu0 %v3644
    %4211 = vmatpush.msra.mxu0 %v3640
    %4212 = vmatpush.msra.mxu0 %v3636
    %4213 = vmatpush.msra.mxu0 %v3632
    %4214 = vmatpush.msra.mxu0 %v3628
    %4215 = vmatpush.msra.mxu0 %v3624
    %4216 = vmatpush.msra.mxu0 %v3620
    %4217 = vmatpush.msra.mxu0 %v3616
    %4218 = vmatpush.msra.mxu0 %v3612
    %4219 = vmatpush.msra.mxu0 %v3608
    %4220 = vmatpush.msra.mxu0 %v3604
    %4221 = vmatmul.f32.gmra.mxu0 %v3149
    %v4222 = vpop.f32.mrf.mxu0
    %v4223 = vadd.f32 %v4200, %v4222
    %4224 = vmatmul.f32.gmra.mxu0 %v3152
    %v4225 = vpop.f32.mrf.mxu0
    %v4226 = vadd.f32 %v4203, %v4225
    %4227 = vdwg.mxu0
    %4228 = vmatpush.msra.mxu0 %v3217
    %4229 = vmatpush.msra.mxu0 %v3213
    %4230 = vmatpush.msra.mxu0 %v3209
    %4231 = vmatpush.msra.mxu0 %v3205
    %4232 = vmatpush.msra.mxu0 %v3201
    %4233 = vmatpush.msra.mxu0 %v3197
    %4234 = vmatpush.msra.mxu0 %v3193
    %4235 = vmatpush.msra.mxu0 %v3189
    %4236 = vmatpush.msra.mxu0 %v3185
    %4237 = vmatpush.msra.mxu0 %v3181
    %4238 = vmatpush.msra.mxu0 %v3177
    %4239 = vmatpush.msra.mxu0 %v3173
    %4240 = vmatpush.msra.mxu0 %v3169
    %4241 = vmatpush.msra.mxu0 %v3165
    %4242 = vmatpush.msra.mxu0 %v3161
    %4243 = vmatpush.msra.mxu0 %v3157
    %4244 = vmatmul.f32.gmra.mxu0 %v2988
    %v4245 = vpop.f32.mrf.mxu0
    %v4246 = vadd.f32 %v3671, %v4245
    %4247 = vmatmul.f32.gmra.mxu0 %v2991
    %v4248 = vpop.f32.mrf.mxu0
    %v4249 = vadd.f32 %v3671, %v4248
    %4250 = vdwg.mxu0
    %4251 = vmatpush.msra.mxu0 %v3281
    %4252 = vmatpush.msra.mxu0 %v3277
    %4253 = vmatpush.msra.mxu0 %v3273
    %4254 = vmatpush.msra.mxu0 %v3269
    %4255 = vmatpush.msra.mxu0 %v3265
    %4256 = vmatpush.msra.mxu0 %v3261
    %4257 = vmatpush.msra.mxu0 %v3257
    %4258 = vmatpush.msra.mxu0 %v3253
    %4259 = vmatpush.msra.mxu0 %v3249
    %4260 = vmatpush.msra.mxu0 %v3245
    %4261 = vmatpush.msra.mxu0 %v3241
    %4262 = vmatpush.msra.mxu0 %v3237
    %4263 = vmatpush.msra.mxu0 %v3233
    %4264 = vmatpush.msra.mxu0 %v3229
    %4265 = vmatpush.msra.mxu0 %v3225
    %4266 = vmatpush.msra.mxu0 %v3221
    %4267 = vmatmul.f32.gmra.mxu0 %v3011
    %v4268 = vpop.f32.mrf.mxu0
    %v4269 = vadd.f32 %v4246, %v4268
    %4270 = vmatmul.f32.gmra.mxu0 %v3014
    %v4271 = vpop.f32.mrf.mxu0
    %v4272 = vadd.f32 %v4249, %v4271
    %4273 = vdwg.mxu0
    %4274 = vmatpush.msra.mxu0 %v3345
    %4275 = vmatpush.msra.mxu0 %v3341
    %4276 = vmatpush.msra.mxu0 %v3337
    %4277 = vmatpush.msra.mxu0 %v3333
    %4278 = vmatpush.msra.mxu0 %v3329
    %4279 = vmatpush.msra.mxu0 %v3325
    %4280 = vmatpush.msra.mxu0 %v3321
    %4281 = vmatpush.msra.mxu0 %v3317
    %4282 = vmatpush.msra.mxu0 %v3313
    %4283 = vmatpush.msra.mxu0 %v3309
    %4284 = vmatpush.msra.mxu0 %v3305
    %4285 = vmatpush.msra.mxu0 %v3301
    %4286 = vmatpush.msra.mxu0 %v3297
    %4287 = vmatpush.msra.mxu0 %v3293
    %4288 = vmatpush.msra.mxu0 %v3289
    %4289 = vmatpush.msra.mxu0 %v3285
    %4290 = vmatmul.f32.gmra.mxu0 %v3034
    %v4291 = vpop.f32.mrf.mxu0
    %v4292 = vadd.f32 %v4269, %v4291
    %4293 = vmatmul.f32.gmra.mxu0 %v3037
    %v4294 = vpop.f32.mrf.mxu0
    %v4295 = vadd.f32 %v4272, %v4294
    %4296 = vdwg.mxu0
    %4297 = vmatpush.msra.mxu0 %v3409
    %4298 = vmatpush.msra.mxu0 %v3405
    %4299 = vmatpush.msra.mxu0 %v3401
    %4300 = vmatpush.msra.mxu0 %v3397
    %4301 = vmatpush.msra.mxu0 %v3393
    %4302 = vmatpush.msra.mxu0 %v3389
    %4303 = vmatpush.msra.mxu0 %v3385
    %4304 = vmatpush.msra.mxu0 %v3381
    %4305 = vmatpush.msra.mxu0 %v3377
    %4306 = vmatpush.msra.mxu0 %v3373
    %4307 = vmatpush.msra.mxu0 %v3369
    %4308 = vmatpush.msra.mxu0 %v3365
    %4309 = vmatpush.msra.mxu0 %v3361
    %4310 = vmatpush.msra.mxu0 %v3357
    %4311 = vmatpush.msra.mxu0 %v3353
    %4312 = vmatpush.msra.mxu0 %v3349
    %4313 = vmatmul.f32.gmra.mxu0 %v3057
    %v4314 = vpop.f32.mrf.mxu0
    %v4315 = vadd.f32 %v4292, %v4314
    %4316 = vmatmul.f32.gmra.mxu0 %v3060
    %v4317 = vpop.f32.mrf.mxu0
    %v4318 = vadd.f32 %v4295, %v4317
    %4319 = vdwg.mxu0
    %4320 = vmatpush.msra.mxu0 %v3473
    %4321 = vmatpush.msra.mxu0 %v3469
    %4322 = vmatpush.msra.mxu0 %v3465
    %4323 = vmatpush.msra.mxu0 %v3461
    %4324 = vmatpush.msra.mxu0 %v3457
    %4325 = vmatpush.msra.mxu0 %v3453
    %4326 = vmatpush.msra.mxu0 %v3449
    %4327 = vmatpush.msra.mxu0 %v3445
    %4328 = vmatpush.msra.mxu0 %v3441
    %4329 = vmatpush.msra.mxu0 %v3437
    %4330 = vmatpush.msra.mxu0 %v3433
    %4331 = vmatpush.msra.mxu0 %v3429
    %4332 = vmatpush.msra.mxu0 %v3425
    %4333 = vmatpush.msra.mxu0 %v3421
    %4334 = vmatpush.msra.mxu0 %v3417
    %4335 = vmatpush.msra.mxu0 %v3413
    %4336 = vmatmul.f32.gmra.mxu0 %v3080
    %v4337 = vpop.f32.mrf.mxu0
    %v4338 = vadd.f32 %v4315, %v4337
    %4339 = vmatmul.f32.gmra.mxu0 %v3083
    %v4340 = vpop.f32.mrf.mxu0
    %v4341 = vadd.f32 %v4318, %v4340
    %4342 = vdwg.mxu0
    %4343 = vmatpush.msra.mxu0 %v3537
    %4344 = vmatpush.msra.mxu0 %v3533
    %4345 = vmatpush.msra.mxu0 %v3529
    %4346 = vmatpush.msra.mxu0 %v3525
    %4347 = vmatpush.msra.mxu0 %v3521
    %4348 = vmatpush.msra.mxu0 %v3517
    %4349 = vmatpush.msra.mxu0 %v3513
    %4350 = vmatpush.msra.mxu0 %v3509
    %4351 = vmatpush.msra.mxu0 %v3505
    %4352 = vmatpush.msra.mxu0 %v3501
    %4353 = vmatpush.msra.mxu0 %v3497
    %4354 = vmatpush.msra.mxu0 %v3493
    %4355 = vmatpush.msra.mxu0 %v3489
    %4356 = vmatpush.msra.mxu0 %v3485
    %4357 = vmatpush.msra.mxu0 %v3481
    %4358 = vmatpush.msra.mxu0 %v3477
    %4359 = vmatmul.f32.gmra.mxu0 %v3103
    %v4360 = vpop.f32.mrf.mxu0
    %v4361 = vadd.f32 %v4338, %v4360
    %4362 = vmatmul.f32.gmra.mxu0 %v3106
    %v4363 = vpop.f32.mrf.mxu0
    %v4364 = vadd.f32 %v4341, %v4363
    %4365 = vdwg.mxu0
    %4366 = vmatpush.msra.mxu0 %v3601
    %4367 = vmatpush.msra.mxu0 %v3597
    %4368 = vmatpush.msra.mxu0 %v3593
    %4369 = vmatpush.msra.mxu0 %v3589
    %4370 = vmatpush.msra.mxu0 %v3585
    %4371 = vmatpush.msra.mxu0 %v3581
    %4372 = vmatpush.msra.mxu0 %v3577
    %4373 = vmatpush.msra.mxu0 %v3573
    %4374 = vmatpush.msra.mxu0 %v3569
    %4375 = vmatpush.msra.mxu0 %v3565
    %4376 = vmatpush.msra.mxu0 %v3561
    %4377 = vmatpush.msra.mxu0 %v3557
    %4378 = vmatpush.msra.mxu0 %v3553
    %4379 = vmatpush.msra.mxu0 %v3549
    %4380 = vmatpush.msra.mxu0 %v3545
    %4381 = vmatpush.msra.mxu0 %v3541
    %4382 = vmatmul.f32.gmra.mxu0 %v3126
    %v4383 = vpop.f32.mrf.mxu0
    %v4384 = vadd.f32 %v4361, %v4383
    %4385 = vmatmul.f32.gmra.mxu0 %v3129
    %v4386 = vpop.f32.mrf.mxu0
    %v4387 = vadd.f32 %v4364, %v4386
    %4388 = vdwg.mxu0
    %4389 = vmatpush.msra.mxu0 %v3665
    %4390 = vmatpush.msra.mxu0 %v3661
    %4391 = vmatpush.msra.mxu0 %v3657
    %4392 = vmatpush.msra.mxu0 %v3653
    %4393 = vmatpush.msra.mxu0 %v3649
    %4394 = vmatpush.msra.mxu0 %v3645
    %4395 = vmatpush.msra.mxu0 %v3641
    %4396 = vmatpush.msra.mxu0 %v3637
    %4397 = vmatpush.msra.mxu0 %v3633
    %4398 = vmatpush.msra.mxu0 %v3629
    %4399 = vmatpush.msra.mxu0 %v3625
    %4400 = vmatpush.msra.mxu0 %v3621
    %4401 = vmatpush.msra.mxu0 %v3617
    %4402 = vmatpush.msra.mxu0 %v3613
    %4403 = vmatpush.msra.mxu0 %v3609
    %4404 = vmatpush.msra.mxu0 %v3605
    %4405 = vmatmul.f32.gmra.mxu0 %v3149
    %v4406 = vpop.f32.mrf.mxu0
    %v4407 = vadd.f32 %v4384, %v4406
    %4408 = vmatmul.f32.gmra.mxu0 %v3152
    %v4409 = vpop.f32.mrf.mxu0
    %v4410 = vadd.f32 %v4387, %v4409
    %4411 = vdwg.mxu0
    %v4412 = vmax.f32 %v3855, 0.0
    %v4413 = vmax.f32 %v4039, 0.0
    %v4414 = vmax.f32 %v4223, 0.0
    %v4415 = vmax.f32 %v4407, 0.0
    %v4416 = vmax.f32 %v3858, 0.0
    %v4417 = vmax.f32 %v4042, 0.0
    %v4418 = vmax.f32 %v4226, 0.0
    %v4419 = vmax.f32 %v4410, 0.0
    %v4420 = vld [vmem:[%s14] sm:$0xff]
    %v4421 = vld [vmem:[%s14 + $0x8] sm:$0xff]
    %v4422 = vld [vmem:[%s14 + $0x10] sm:$0xff]
    %v4423 = vld [vmem:[%s14 + $0x18] sm:$0xff]
    %v4424 = vld [vmem:[%s14 + $0x20] sm:$0xff]
    %v4425 = vld [vmem:[%s14 + $0x28] sm:$0xff]
    %v4426 = vld [vmem:[%s14 + $0x30] sm:$0xff]
    %v4427 = vld [vmem:[%s14 + $0x38] sm:$0xff]
    %v4428 = vld [vmem:[%s14 + $0x40] sm:$0xff]
    %v4429 = vld [vmem:[%s14 + $0x48] sm:$0xff]
    %v4430 = vld [vmem:[%s14 + $0x50] sm:$0xff]
    %v4431 = vld [vmem:[%s14 + $0x58] sm:$0xff]
    %v4432 = vld [vmem:[%s14 + $0x60] sm:$0xff]
    %v4433 = vld [vmem:[%s14 + $0x68] sm:$0xff]
    %v4434 = vld [vmem:[%s14 + $0x70] sm:$0xff]
    %v4435 = vld [vmem:[%s14 + $0x78] sm:$0xff]
    %v4436 = vld [vmem:[%s14 + $0x80] sm:$0xff]
    %v4437 = vld [vmem:[%s14 + $0x88] sm:$0xff]
    %v4438 = vld [vmem:[%s14 + $0x90] sm:$0xff]
    %v4439 = vld [vmem:[%s14 + $0x98] sm:$0xff]
    %v4440 = vld [vmem:[%s14 + $0xa0] sm:$0xff]
    %v4441 = vld [vmem:[%s14 + $0xa8] sm:$0xff]
    %v4442 = vld [vmem:[%s14 + $0xb0] sm:$0xff]
    %v4443 = vld [vmem:[%s14 + $0xb8] sm:$0xff]
    %v4444 = vld [vmem:[%s14 + $0xc0] sm:$0xff]
    %v4445 = vld [vmem:[%s14 + $0xc8] sm:$0xff]
    %v4446 = vld [vmem:[%s14 + $0xd0] sm:$0xff]
    %v4447 = vld [vmem:[%s14 + $0xd8] sm:$0xff]
    %v4448 = vld [vmem:[%s14 + $0xe0] sm:$0xff]
    %v4449 = vld [vmem:[%s14 + $0xe8] sm:$0xff]
    %v4450 = vld [vmem:[%s14 + $0xf0] sm:$0xff]
    %v4451 = vld [vmem:[%s14 + $0xf8] sm:$0xff]
    %v4452 = vld [vmem:[%s14 + $0x100] sm:$0xff]
    %v4453 = vld [vmem:[%s14 + $0x108] sm:$0xff]
    %v4454 = vld [vmem:[%s14 + $0x110] sm:$0xff]
    %v4455 = vld [vmem:[%s14 + $0x118] sm:$0xff]
    %v4456 = vld [vmem:[%s14 + $0x120] sm:$0xff]
    %v4457 = vld [vmem:[%s14 + $0x128] sm:$0xff]
    %v4458 = vld [vmem:[%s14 + $0x130] sm:$0xff]
    %v4459 = vld [vmem:[%s14 + $0x138] sm:$0xff]
    %v4460 = vld [vmem:[%s14 + $0x140] sm:$0xff]
    %v4461 = vld [vmem:[%s14 + $0x148] sm:$0xff]
    %v4462 = vld [vmem:[%s14 + $0x150] sm:$0xff]
    %v4463 = vld [vmem:[%s14 + $0x158] sm:$0xff]
    %v4464 = vld [vmem:[%s14 + $0x160] sm:$0xff]
    %v4465 = vld [vmem:[%s14 + $0x168] sm:$0xff]
    %v4466 = vld [vmem:[%s14 + $0x170] sm:$0xff]
    %v4467 = vld [vmem:[%s14 + $0x178] sm:$0xff]
    %v4468 = vld [vmem:[%s14 + $0x180] sm:$0xff]
    %v4469 = vld [vmem:[%s14 + $0x188] sm:$0xff]
    %v4470 = vld [vmem:[%s14 + $0x190] sm:$0xff]
    %v4471 = vld [vmem:[%s14 + $0x198] sm:$0xff]
    %v4472 = vld [vmem:[%s14 + $0x1a0] sm:$0xff]
    %v4473 = vld [vmem:[%s14 + $0x1a8] sm:$0xff]
    %v4474 = vld [vmem:[%s14 + $0x1b0] sm:$0xff]
    %v4475 = vld [vmem:[%s14 + $0x1b8] sm:$0xff]
    %v4476 = vld [vmem:[%s14 + $0x1c0] sm:$0xff]
    %v4477 = vld [vmem:[%s14 + $0x1c8] sm:$0xff]
    %v4478 = vld [vmem:[%s14 + $0x1d0] sm:$0xff]
    %v4479 = vld [vmem:[%s14 + $0x1d8] sm:$0xff]
    %v4480 = vld [vmem:[%s14 + $0x1e0] sm:$0xff]
    %v4481 = vld [vmem:[%s14 + $0x1e8] sm:$0xff]
    %v4482 = vld [vmem:[%s14 + $0x1f0] sm:$0xff]
    %v4483 = vld [vmem:[%s14 + $0x1f8] sm:$0xff]
    %v4484 = vld [vmem:[%s15] sm:$0x1]
    %v4486 = vperm.slane %v4484, 0
    %4488 = vmatpush.msra.mxu0 %v4435
    %4489 = vmatpush.msra.mxu0 %v4434
    %4490 = vmatpush.msra.mxu0 %v4433
    %4491 = vmatpush.msra.mxu0 %v4432
    %4492 = vmatpush.msra.mxu0 %v4431
    %4493 = vmatpush.msra.mxu0 %v4430
    %4494 = vmatpush.msra.mxu0 %v4429
    %4495 = vmatpush.msra.mxu0 %v4428
    %4496 = vmatpush.msra.mxu0 %v4427
    %4497 = vmatpush.msra.mxu0 %v4426
    %4498 = vmatpush.msra.mxu0 %v4425
    %4499 = vmatpush.msra.mxu0 %v4424
    %4500 = vmatpush.msra.mxu0 %v4423
    %4501 = vmatpush.msra.mxu0 %v4422
    %4502 = vmatpush.msra.mxu0 %v4421
    %4503 = vmatpush.msra.mxu0 %v4420
    %4504 = vmatmul.f32.gmra.mxu0 %v4412
    %v4505 = vpop.f32.mrf.mxu0
    %v4506 = vadd.f32 %v4486, %v4505
    %4507 = vmatmul.f32.gmra.mxu0 %v4416
    %v4508 = vpop.f32.mrf.mxu0
    %v4509 = vadd.f32 %v4486, %v4508
    %4510 = vdwg.mxu0
    %4511 = vmatpush.msra.mxu0 %v4451
    %4512 = vmatpush.msra.mxu0 %v4450
    %4513 = vmatpush.msra.mxu0 %v4449
    %4514 = vmatpush.msra.mxu0 %v4448
    %4515 = vmatpush.msra.mxu0 %v4447
    %4516 = vmatpush.msra.mxu0 %v4446
    %4517 = vmatpush.msra.mxu0 %v4445
    %4518 = vmatpush.msra.mxu0 %v4444
    %4519 = vmatpush.msra.mxu0 %v4443
    %4520 = vmatpush.msra.mxu0 %v4442
    %4521 = vmatpush.msra.mxu0 %v4441
    %4522 = vmatpush.msra.mxu0 %v4440
    %4523 = vmatpush.msra.mxu0 %v4439
    %4524 = vmatpush.msra.mxu0 %v4438
    %4525 = vmatpush.msra.mxu0 %v4437
    %4526 = vmatpush.msra.mxu0 %v4436
    %4527 = vmatmul.f32.gmra.mxu0 %v4413
    %v4528 = vpop.f32.mrf.mxu0
    %v4529 = vadd.f32 %v4506, %v4528
    %4530 = vmatmul.f32.gmra.mxu0 %v4417
    %v4531 = vpop.f32.mrf.mxu0
    %v4532 = vadd.f32 %v4509, %v4531
    %4533 = vdwg.mxu0
    %4534 = vmatpush.msra.mxu0 %v4467
    %4535 = vmatpush.msra.mxu0 %v4466
    %4536 = vmatpush.msra.mxu0 %v4465
    %4537 = vmatpush.msra.mxu0 %v4464
    %4538 = vmatpush.msra.mxu0 %v4463
    %4539 = vmatpush.msra.mxu0 %v4462
    %4540 = vmatpush.msra.mxu0 %v4461
    %4541 = vmatpush.msra.mxu0 %v4460
    %4542 = vmatpush.msra.mxu0 %v4459
    %4543 = vmatpush.msra.mxu0 %v4458
    %4544 = vmatpush.msra.mxu0 %v4457
    %4545 = vmatpush.msra.mxu0 %v4456
    %4546 = vmatpush.msra.mxu0 %v4455
    %4547 = vmatpush.msra.mxu0 %v4454
    %4548 = vmatpush.msra.mxu0 %v4453
    %4549 = vmatpush.msra.mxu0 %v4452
    %4550 = vmatmul.f32.gmra.mxu0 %v4414
    %v4551 = vpop.f32.mrf.mxu0
    %v4552 = vadd.f32 %v4529, %v4551
    %4553 = vmatmul.f32.gmra.mxu0 %v4418
    %v4554 = vpop.f32.mrf.mxu0
    %v4555 = vadd.f32 %v4532, %v4554
    %4556 = vdwg.mxu0
    %4557 = vmatpush.msra.mxu0 %v4483
    %4558 = vmatpush.msra.mxu0 %v4482
    %4559 = vmatpush.msra.mxu0 %v4481
    %4560 = vmatpush.msra.mxu0 %v4480
    %4561 = vmatpush.msra.mxu0 %v4479
    %4562 = vmatpush.msra.mxu0 %v4478
    %4563 = vmatpush.msra.mxu0 %v4477
    %4564 = vmatpush.msra.mxu0 %v4476
    %4565 = vmatpush.msra.mxu0 %v4475
    %4566 = vmatpush.msra.mxu0 %v4474
    %4567 = vmatpush.msra.mxu0 %v4473
    %4568 = vmatpush.msra.mxu0 %v4472
    %4569 = vmatpush.msra.mxu0 %v4471
    %4570 = vmatpush.msra.mxu0 %v4470
    %4571 = vmatpush.msra.mxu0 %v4469
    %4572 = vmatpush.msra.mxu0 %v4468
    %4573 = vmatmul.f32.gmra.mxu0 %v4415
    %v4574 = vpop.f32.mrf.mxu0
    %v4575 = vadd.f32 %v4552, %v4574
    %4576 = vmatmul.f32.gmra.mxu0 %v4419
    %v4577 = vpop.f32.mrf.mxu0
    %v4578 = vadd.f32 %v4555, %v4577
    %4579 = vdwg.mxu0
    %v4580 = vld [vmem:[%s17] sm:$0x3]
    %v4581 = vld [vmem:[%s18] sm:$0xff]
    %v4582 = vld [vmem:[%s18 + $0x8] sm:$0x3f]
    %4584 = vset.pattern.permute.xlu0 0
    %4585 = vperm.xlu0 %4584, %v4575
    %v4586 = vpop.permute.xlu0 %4585
    %4589 = vset.pattern.permute.xlu0 0
    %4590 = vperm.xlu0 %4589, %v4578
    %v4591 = vpop.permute.xlu0 %4590
    %v4593 = vmul.f32 %v4586, %v4581
    %v4594 = vmul.f32 %v4591, %v4582
    %vm4595 = vcmask 113664
    %v4597 = vsel %vm4595, %v4580, 0
    %v4600 = vsel %vm177, %v4594, 0
    %4602 = vmatpush.msra.mxu0 0.0
    %4603 = vmatpush.msra.mxu0 0.0
    %4604 = vmatpush.msra.mxu0 0.0
    %4605 = vmatpush.msra.mxu0 0.0
    %4606 = vmatpush.msra.mxu0 0.0
    %4607 = vmatpush.msra.mxu0 0.0
    %4608 = vmatpush.msra.mxu0 0.0
    %4609 = vmatpush.msra.mxu0 0.0
    %4610 = vmatpush.msra.mxu0 0.0
    %4611 = vmatpush.msra.mxu0 0.0
    %4612 = vmatpush.msra.mxu0 0.0
    %4613 = vmatpush.msra.mxu0 0.0
    %4614 = vmatpush.msra.mxu0 0.0
    %4615 = vmatpush.msra.mxu0 0.0
    %4616 = vmatpush.msra.mxu0 %v4600
    %4617 = vmatpush.msra.mxu0 %v4593
    %4618 = vmatmul.f32.gmra.mxu0 %v4597
    %v4619 = vpop.f32.mrf.mxu0
    %v4620 = vadd.f32 0.0, %v4619
    %4621 = vdwg.mxu0
    %4622 = vrot.lane.b32.xlu0 %v4575, 127
    %v4623 = vpop.permute.xlu0 %4622
    %4624 = vrot.lane.b32.xlu0 %v4578, 127
    %v4625 = vpop.permute.xlu0 %4624
    %v4627 = vsel %vm177, %v4625, 0
    %4629 = vmatpush.msra.mxu0 0.0
    %4630 = vmatpush.msra.mxu0 0.0
    %4631 = vmatpush.msra.mxu0 0.0
    %4632 = vmatpush.msra.mxu0 0.0
    %4633 = vmatpush.msra.mxu0 0.0
    %4634 = vmatpush.msra.mxu0 0.0
    %4635 = vmatpush.msra.mxu0 0.0
    %4636 = vmatpush.msra.mxu0 0.0
    %4637 = vmatpush.msra.mxu0 0.0
    %4638 = vmatpush.msra.mxu0 0.0
    %4639 = vmatpush.msra.mxu0 0.0
    %4640 = vmatpush.msra.mxu0 0.0
    %4641 = vmatpush.msra.mxu0 0.0
    %4642 = vmatpush.msra.mxu0 0.0
    %4643 = vmatpush.msra.mxu0 %v4627
    %4644 = vmatpush.msra.mxu0 %v4623
    %4645 = vmatmul.f32.gmra.mxu0 %v4597
    %v4646 = vpop.f32.mrf.mxu0
    %v4647 = vadd.f32 0.0, %v4646
    %4648 = vdwg.mxu0
    %v4649 = vmul.f32 %v4647, 0.14285715
    %vm4650 = vcmask 50176
    %v4651 = vsel %vm4650, %v4620, -inf
    %4652 = vmax.xlane.f32.xlu0 %v4651
    %v4653 = vpop.xlane.xlu0 %4652
    %v4654 = vsub.f32 %v4620, %v4653
    %v4655 = vmul.f32 %v4654, 1.442695
    %v4656 = vpow.pop %v4655
    %v4657 = vsel %vm4650, %v4656, 0.0
    %4658 = vadd.xlane.f32.xlu0 %v4657
    %v4659 = vpop.xlane.xlu0 %4658
    %v4660 = vlog2.pop %v4659
    %v4661 = vmul.f32 %v4660, 0.6931472
    %v4662 = vsub.f32 %v4654, %v4661
    %4663 = vst.msk [vmem:[#allocation2] sm:$0x3] %vm4650, %v4662
    %v4664 = vtanh.pop %v4649
    %vm4665 = vcmask 1024
    %4666 = vst.msk [vmem:[%s20] sm:$0x3] %vm4665, %v4664
    // Predicated region
    $region78: #{forward.1} parent=1 // pred_check
      _
    $region79: #{forward.1} parent=1 // pred_check_branch
      %4668 = sbr.rel (0) target = $region81
    $region80: #{forward.1} parent=1 // pred_region
      %4670 = vsyncadd [#allocation3], 0
      %s4672 = sshll.u32 [#allocation2], 4
      %s4673 = int_to_ptr.vmem [resolvable:$true] %s4672
      %s4674 = sshll.u32 %s19, 4
      %s4675 = int_to_ptr.hbm [resolvable:$true] %s4674
      %4677 = dma.vmem_to_hbm [thread:$0]  %s4673, 32, %s4675, [#allocation3]
    $region81: #{forward.1} parent=1 // pred_fallthru
      _
    // Predicated region
    $region82: #{forward.1} parent=1 // pred_check
      _
    $region83: #{forward.1} parent=1 // pred_check_branch
      %4679 = sbr.rel (0) target = $region85
    $region84: #{forward.1} parent=1 // pred_region
      _
    $region85: #{forward.1} parent=1 // pred_fallthru
      _
    // Predicated region
    $region86: #{forward.1} parent=1 // pred_check
      _
    $region87: #{forward.1} parent=1 // pred_check_branch
      %4681 = sbr.rel (0) target = $region89
    $region88: #{forward.1} parent=1 // pred_region
      %4683 = dma.done [#allocation3], 32
    $region89: #{forward.1} parent=1 // pred_fallthru
      _
    // Predicated region
    $region90: #{forward.1} parent=1 // pred_check
      _
    $region91: #{forward.1} parent=1 // pred_check_branch
      %4685 = sbr.rel (0) target = $region93
    $region92: #{forward.1} parent=1 // pred_region
      _
    $region93: #{forward.1} parent=1 // pred_fallthru
      _
    %4686 = vsyncpa [#allocation3], 1

</llo_original>
